<compile_context>
chip_gen: v6e
topology: v6e:2x2x1
jax: 0.10.0
libtpu: 0.0.40
codegen_flags: <defaults>
</compile_context>

<pallas_src>
import functools
import math

import jax
import jax.numpy as jnp
from jax.experimental import pallas as pl
from jax.experimental.pallas import tpu as pltpu

# ----------------------------- model config ---------------------------------
HISTORY_LEN = 4        # args.history_length
ATOMS = 11             # args.atoms
ACTION_SPACE = 4
HIDDEN = 32            # args.hidden_size
NOISY_STD = 0.5        # args.noisy_std
PEARL_Z = 8            # args.pearl_z_size
PEARL_HIDDEN = 32      # args.pearl_hidden_size
CONV_OUT = 576         # data-efficient encoder: 84x84 -> 16x16 -> 3x3, 64*3*3

BATCH = 2              # main batch
CONTEXT_N = 4          # pearl context transitions
IMG = 84

# fused-kernel layout constants
N_IMGS = BATCH + CONTEXT_N            # 6 images go through the conv stack
ROWS = -(-N_IMGS // 8) * 8            # images padded to a sublane multiple (8)
NPOS = 9                              # 3x3 conv2 output positions
NTAP = 25                             # 5x5 conv2 taps
NPAIR = (NTAP + 1) // 2               # 13: two conv2-taps per 128-lane group
POSROWS = NPOS * ROWS                 # 72 rows per tap-pair
KP1 = 128                             # per-tap conv1 im2col K (100) padded
CH = 128                              # packed channel lanes
QPAD = 128                            # padded q lanes (44 real = actions*atoms)


# ----------------------------- fused Pallas kernel ---------------------------
def _pearl_dqn_kernel(p1, ar, eps, w1, b1, w2_hbm, b2, wh_hbm, ball, whz, wq,
                      bq, wmu, bmu, wsig, bsig, smat,
                      q_ref, kl_ref,
                      w2_vm, wh_vm, slab1, slab2, sem, *, log):
    f32, bf16 = jnp.float32, jnp.bfloat16

    # Kick off the HBM->VMEM copies of the conv2 / head weights; they overlap
    # the conv1 and conv2 matmuls instead of serialising before the body.
    cp_w2 = pltpu.make_async_copy(w2_hbm, w2_vm, sem.at[0])
    cp_wh = pltpu.make_async_copy(wh_hbm, wh_vm, sem.at[1])
    cp_w2.start()
    cp_wh.start()

    # ---- conv1 (main + pearl encoders), all 25 conv2-taps in ONE matmul -----
    # p1 rows: (tap-pair, conv2-position, image); lanes: [even-tap K | odd-tap K]
    h1 = jnp.dot(p1[...], w1[...], preferred_element_type=f32) + b1[...]
    h1 = jnp.maximum(h1, 0.0)                                    # (936,128) f32
    # K-stack the relu'd conv1 activations into the conv2 LHS slab: lane group
    # j holds tap 2j's 64 real channels (low half) and tap 2j+1's (high half).
    for j in range(NPAIR):
        slab1[:, j * 128:(j + 1) * 128] = (
            h1[j * POSROWS:(j + 1) * POSROWS, :].astype(bf16))

    # ---- conv2 (main + pearl), ONE K-stacked matmul (K = 13*128) ------------
    cp_w2.wait()
    c2 = jnp.dot(slab1[...], w2_vm[...], preferred_element_type=f32) + b2[...]
    c2 = jnp.maximum(c2, 0.0)                                    # (72,128) f32
    # Re-stack per conv2 position into the head LHS slab (rows = image index),
    # plus the pearl action/reward lanes in the last 128-lane group.
    for p in range(NPOS):
        slab2[:, p * 128:(p + 1) * 128] = (
            c2[p * ROWS:(p + 1) * ROWS, :].astype(bf16))
    slab2[:, NPOS * 128:(NPOS + 1) * 128] = ar[...]

    # ---- merged fc_h_v | fc_h_a | pearl-mlp1 hidden in ONE matmul -----------
    cp_wh.wait()
    hp = jnp.dot(slab2[...], wh_vm[...], preferred_element_type=f32) + ball[...]
    # hp lanes: 0..31 fc_h_v pre-act, 32..63 fc_h_a pre-act, 64..95 pearl mlp1
    # pre-act (bias + action/reward already folded in), 96..127 zero.

    # ---- pearl: product of Gaussians over context rows, z sample, KL --------
    pm1 = jnp.maximum(hp, 0.0)                       # pearl lanes live in 64..95
    mus = jnp.dot(pm1, wmu[...], preferred_element_type=f32) + bmu[...]   # (8,z)
    spre = jnp.dot(pm1, wsig[...], preferred_element_type=f32) + bsig[...]
    sig2 = jnp.maximum(spre, 0.0) + jnp.log(1.0 + jnp.exp(-jnp.abs(spre)))
    sig2 = jnp.maximum(sig2, 1e-7)
    row = jax.lax.broadcasted_iota(jnp.int32, mus.shape, 0)
    cmask = jnp.logical_and(row >= BATCH, row < BATCH + CONTEXT_N).astype(f32)
    inv = cmask / sig2                               # zero for non-context rows
    z_var = 1.0 / jnp.sum(inv, axis=0, keepdims=True)                    # (1,z)
    z_mean = z_var * jnp.sum(mus * inv, axis=0, keepdims=True)           # (1,z)
    z = z_mean + jnp.sqrt(z_var) * eps[...]                              # (1,z)
    kl_ref[...] = jnp.sum(0.5 * (z_var + z_mean * z_mean - 1.0)
                          - 0.5 * jnp.log(z_var), axis=1, keepdims=True)

    # ---- dueling heads (dueling combine pre-folded into wq/bq) --------------
    hva = jnp.maximum(hp + jnp.dot(z, whz[...], preferred_element_type=f32),
                      0.0)
    qf = jnp.dot(hva, wq[...], preferred_element_type=f32) + bq[...]   # (8,128)
    m = jnp.max(qf, axis=-1, keepdims=True)     # per-row constant: softmax-safe
    e = jnp.exp(qf - m)
    denom = jnp.dot(e, smat[...], preferred_element_type=f32)  # per-atom-group
    if log:
        q_ref[...] = (qf - m) - jnp.log(denom)
    else:
        r = pl.reciprocal(denom, approx=True)
        r = r * (2.0 - denom * r)               # one Newton step (EUP + VPU)
        q_ref[...] = e * r


def _fused_forward(prep, p1, ar, eps, log):
    (w1, b1, w2p, b2, whall, ball, whz, wq, bq,
     wmu, bmu, wsig, bsig, smat) = prep
    vmem = pl.BlockSpec(memory_space=pltpu.MemorySpace.VMEM)
    hbm = pl.BlockSpec(memory_space=pl.ANY)
    in_specs = [vmem, vmem, vmem,          # p1, ar, eps
                vmem, vmem,                # w1, b1
                hbm, vmem,                 # w2p (HBM, manual DMA), b2
                hbm, vmem,                 # whall (HBM, manual DMA), ball
                vmem, vmem, vmem,          # whz, wq, bq
                vmem, vmem, vmem, vmem,    # wmu, bmu, wsig, bsig
                vmem]                      # smat
    return pl.pallas_call(
        functools.partial(_pearl_dqn_kernel, log=log),
        out_shape=(jax.ShapeDtypeStruct((ROWS, QPAD), jnp.float32),   # padded q
                   jax.ShapeDtypeStruct((1, 1), jnp.float32)),        # kl loss
        in_specs=in_specs,
        out_specs=(vmem, vmem),
        scratch_shapes=[
            pltpu.VMEM((NPAIR * 128, CH), jnp.bfloat16),        # conv2 weight
            pltpu.VMEM(((NPOS + 1) * 128, CH), jnp.bfloat16),   # head weight
            pltpu.VMEM((POSROWS, NPAIR * 128), jnp.bfloat16),   # conv2 LHS slab
            pltpu.VMEM((ROWS, (NPOS + 1) * 128), jnp.bfloat16), # head LHS slab
            pltpu.SemaphoreType.DMA((2,)),
        ],
    )(p1, ar, eps, w1, b1, w2p, b2, whall, ball, whz, wq, bq,
      wmu, bmu, wsig, bsig, smat)


# ----------------------------- parameter init --------------------------------
def _scale_noise(key, n):
    g = jax.random.normal(key, (n,), dtype=jnp.float32)
    return jnp.sign(g) * jnp.sqrt(jnp.abs(g))


def init_noisy_linear(key, in_f, out_f, std_init=NOISY_STD):
    """Training-mode effective NoisyLinear weights: W = mu + sigma * eps."""
    k1, k2, k3, k4 = jax.random.split(key, 4)
    mu_range = 1.0 / math.sqrt(in_f)
    w_mu = jax.random.uniform(k1, (out_f, in_f), minval=-mu_range, maxval=mu_range)
    b_mu = jax.random.uniform(k2, (out_f,), minval=-mu_range, maxval=mu_range)
    w_sigma = jnp.full((out_f, in_f), std_init / math.sqrt(in_f), jnp.float32)
    b_sigma = jnp.full((out_f,), std_init / math.sqrt(out_f), jnp.float32)
    eps_in, eps_out = _scale_noise(k3, in_f), _scale_noise(k4, out_f)
    W = w_mu + w_sigma * jnp.outer(eps_out, eps_in)
    b = b_mu + b_sigma * eps_out
    return W.astype(jnp.float32), b.astype(jnp.float32)


def init_linear(key, in_f, out_f):
    k1, k2 = jax.random.split(key)
    bound = 1.0 / math.sqrt(in_f)
    W = jax.random.uniform(k1, (out_f, in_f), minval=-bound, maxval=bound)
    b = jax.random.uniform(k2, (out_f,), minval=-bound, maxval=bound)
    return W.astype(jnp.float32), b.astype(jnp.float32)


def init_conv(key, cin, cout, k):
    k1, k2 = jax.random.split(key)
    bound = 1.0 / math.sqrt(cin * k * k)
    W = jax.random.uniform(k1, (cout, cin, k, k), minval=-bound, maxval=bound)
    b = jax.random.uniform(k2, (cout,), minval=-bound, maxval=bound)
    return W.astype(jnp.float32), b.astype(jnp.float32)


def init_params(key):
    ks = jax.random.split(key, 10)
    return {
        "conv1": init_conv(ks[0], HISTORY_LEN, 32, 5),
        "conv2": init_conv(ks[1], 32, 64, 5),
        "fc_h_v": init_noisy_linear(ks[2], CONV_OUT + PEARL_Z, HIDDEN),
        "fc_h_a": init_noisy_linear(ks[3], CONV_OUT + PEARL_Z, HIDDEN),
        "fc_z_v": init_noisy_linear(ks[4], HIDDEN, ATOMS),
        "fc_z_a": init_noisy_linear(ks[5], HIDDEN, ACTION_SPACE * ATOMS),
        "penc1": init_conv(ks[6], HISTORY_LEN, 32, 5),
        "penc2": init_conv(ks[7], 32, 64, 5),
        "pmlp1": init_linear(ks[8], CONV_OUT + 2, PEARL_HIDDEN),
        "pmlp2": init_linear(ks[9], PEARL_HIDDEN, PEARL_Z * 2),
    }


# --------------------- one-time weight packing (not per step) ----------------
def prepare_params(p):
    """Pre-transpose / permute / pad all weights into the fused-kernel layout,
    pack two conv2-taps per 128-lane group (no structural-zero rows), fold the
    dueling combine (v + a - mean_a) into the fc_z weights and the action /
    reward columns of the pearl mlp into the merged head weight."""
    f32, bf16 = jnp.float32, jnp.bfloat16
    NA = ACTION_SPACE * ATOMS

    # conv1 + pearl conv1; the two halves of the 256-row K serve taps 2j / 2j+1
    w1m = p["conv1"][0].reshape(32, 100).T                       # (100, 32)
    w1p = p["penc1"][0].reshape(32, 100).T
    w1 = jnp.zeros((2 * KP1, CH), f32)
    w1 = w1.at[:100, 0:32].set(w1m).at[:100, 32:64].set(w1p)
    w1 = w1.at[KP1:KP1 + 100, 64:96].set(w1m).at[KP1:KP1 + 100, 96:128].set(w1p)
    b1h = jnp.concatenate([p["conv1"][1], p["penc1"][1]])        # (64,)
    b1 = jnp.tile(b1h, 2).reshape(1, CH)

    # conv2 + pearl conv2, K-stacked over the 13 tap pairs (zero rows stripped)
    w2m = jnp.transpose(p["conv2"][0], (2, 3, 1, 0)).reshape(NTAP, 32, 64)
    w2q = jnp.transpose(p["penc2"][0], (2, 3, 1, 0)).reshape(NTAP, 32, 64)
    w2 = jnp.zeros((NPAIR, 2, 64, CH), f32)
    w2 = w2.at[:, 0, 0:32, 0:64].set(w2m[0::2])
    w2 = w2.at[:, 0, 32:64, 64:128].set(w2q[0::2])
    w2 = w2.at[:NPAIR - 1, 1, 0:32, 0:64].set(w2m[1::2])
    w2 = w2.at[:NPAIR - 1, 1, 32:64, 64:128].set(w2q[1::2])
    w2 = w2.reshape(NPAIR * CH, CH)
    b2 = jnp.concatenate([p["conv2"][1], p["penc2"][1]]).reshape(1, CH)

    # merged fc_h_v | fc_h_a | pearl-mlp1 weight over (position, channel) slabs
    def feat_perm(w_feat):               # (out, 576) torch order -> (9, 64, out)
        out_dim = w_feat.shape[0]
        return jnp.transpose(w_feat.reshape(out_dim, 64, NPOS), (2, 1, 0))

    (whv, bhv), (wha, bha) = p["fc_h_v"], p["fc_h_a"]
    wp1, bp1 = p["pmlp1"]
    whall = jnp.zeros((NPOS + 1, CH, CH), f32)
    whall = whall.at[:NPOS, 0:64, 0:32].set(feat_perm(whv[:, :CONV_OUT]))
    whall = whall.at[:NPOS, 0:64, 32:64].set(feat_perm(wha[:, :CONV_OUT]))
    whall = whall.at[:NPOS, 64:128, 64:96].set(feat_perm(wp1[:, :CONV_OUT]))
    whall = whall.at[NPOS, 0, 64:96].set(wp1[:, CONV_OUT])        # action col
    whall = whall.at[NPOS, 1, 64:96].set(wp1[:, CONV_OUT + 1])    # reward col
    whall = whall.reshape((NPOS + 1) * CH, CH)
    ball = jnp.zeros((1, CH), f32)
    ball = ball.at[0, 0:32].set(bhv).at[0, 32:64].set(bha).at[0, 64:96].set(bp1)

    # z -> hidden weights, padded to the 128-lane hidden layout (no lane slices)
    whz = jnp.zeros((PEARL_Z, CH), f32)
    whz = whz.at[:, 0:HIDDEN].set(whv[:, CONV_OUT:].T)
    whz = whz.at[:, HIDDEN:2 * HIDDEN].set(wha[:, CONV_OUT:].T)

    # fold "q = v + a - mean(a)" into merged fc_z weights (lane-padded to 128)
    (wzv, bzv), (wza, bza) = p["fc_z_v"], p["fc_z_a"]
    eye = jnp.eye(ATOMS, dtype=f32)
    mean_m = jnp.tile(eye / ACTION_SPACE, (ACTION_SPACE, 1))   # (44,11)
    bcast = jnp.tile(eye, (1, ACTION_SPACE))                   # (11,44)
    wq_v = wzv.T @ bcast                                       # (32,44)
    wq_a = wza.T - (wza.T @ mean_m) @ bcast                    # (32,44)
    bq44 = bzv @ bcast + bza - (bza @ mean_m) @ bcast          # (44,)
    wq = jnp.zeros((CH, QPAD), f32)
    wq = wq.at[0:HIDDEN, :NA].set(wq_v).at[HIDDEN:2 * HIDDEN, :NA].set(wq_a)
    bq = jnp.zeros((1, QPAD), f32).at[0, :NA].set(bq44)

    # pearl mlp2, rows padded to the 128-lane hidden layout (pearl at 64..95)
    wp2, bp2 = p["pmlp2"]
    wmu = jnp.zeros((CH, PEARL_Z), f32).at[64:96, :].set(wp2[:PEARL_Z].T)
    wsig = jnp.zeros((CH, PEARL_Z), f32).at[64:96, :].set(wp2[PEARL_Z:].T)
    bmu = bp2[:PEARL_Z].reshape(1, PEARL_Z)
    bsig = bp2[PEARL_Z:].reshape(1, PEARL_Z)

    # per-atom-group sum matrix for the softmax on the padded (., 128) layout
    gid = jnp.arange(QPAD) // ATOMS
    smat = (gid[:, None] == gid[None, :]).astype(f32)

    return (w1.astype(bf16), b1, w2.astype(bf16), b2, whall.astype(bf16), ball,
            whz, wq, bq, wmu, bmu, wsig, bsig, smat)


# ----------------------------- forward pass ----------------------------------
@functools.partial(jax.jit, static_argnames=("log",))
def pearl_dqn_forward(prep, x, ctx_state, ctx_action, ctx_reward, eps, log=False):
    # Single bf16 im2col covering BOTH k=5/s=5 conv layers, with two conv2-taps
    # packed per 256-lane row so the kernel's conv1 is one big matmul and the
    # conv2 K-stack has no structural-zero channel slots.
    xall = jnp.concatenate([x, ctx_state], axis=0).astype(jnp.bfloat16)  # (6,4,84,84)
    xc = xall[:, :, :75, :75]                                   # 15x15 conv1 support
    xr = xc.reshape(N_IMGS, HISTORY_LEN, 3, 5, 5, 3, 5, 5)
    p25 = jnp.transpose(xr, (3, 6, 2, 5, 0, 1, 4, 7))           # (kh,kw,oh,ow,b,cin,kh1,kw1)
    p25 = p25.reshape(NTAP, NPOS, N_IMGS, HISTORY_LEN * 25)
    p26 = jnp.pad(p25, ((0, 1), (0, 0), (0, 0), (0, 0)))        # taps 25 -> 26
    ppair = jnp.transpose(p26.reshape(NPAIR, 2, NPOS, N_IMGS, HISTORY_LEN * 25),
                          (0, 2, 3, 1, 4))                      # (13,9,6,2,100)
    ppair = jnp.pad(ppair, ((0, 0), (0, 0), (0, ROWS - N_IMGS), (0, 0),
                            (0, KP1 - HISTORY_LEN * 25)))
    p1 = ppair.reshape(NPAIR * POSROWS, 2 * KP1)                # (936, 256) bf16

    ar = jnp.zeros((ROWS, CH), jnp.float32)                     # [action, reward]
    ar = ar.at[BATCH:BATCH + CONTEXT_N, 0].set(ctx_action)
    ar = ar.at[BATCH:BATCH + CONTEXT_N, 1].set(ctx_reward)
    ar = ar.astype(jnp.bfloat16)

    q_pad, kl = _fused_forward(prep, p1, ar, eps.astype(jnp.float32), log)
    q = q_pad[:BATCH, :ACTION_SPACE * ATOMS].reshape(BATCH, ACTION_SPACE, ATOMS)
    return q, kl[0, 0]


# ----------------------- plain-JAX reference (validation) --------------------
def reference_forward(params, x, context, eps, log=False):
    """Follows the PyTorch module structure (same bf16-operand matmul scheme)."""
    bf16 = jnp.bfloat16

    def conv5_relu(inp, w, b):
        Bn, C, H, W = inp.shape
        Cout = w.shape[0]
        Ho, Wo = (H - 5) // 5 + 1, (W - 5) // 5 + 1
        xc = inp[:, :, :Ho * 5, :Wo * 5].reshape(Bn, C, Ho, 5, Wo, 5)
        patches = jnp.transpose(xc, (0, 2, 4, 1, 3, 5)).reshape(Bn * Ho * Wo, C * 25)
        out = jnp.dot(patches.astype(bf16), w.reshape(Cout, C * 25).T.astype(bf16),
                      preferred_element_type=jnp.float32) + b
        out = jnp.maximum(out, 0.0)
        return out.reshape(Bn, Ho, Wo, Cout).transpose(0, 3, 1, 2)

    def lin(h, wb, bf=False):
        w, b = wb
        if bf:
            return jnp.dot(h.astype(bf16), w.T.astype(bf16),
                           preferred_element_type=jnp.float32) + b
        return jnp.dot(h, w.T, preferred_element_type=jnp.float32) + b

    # pearl z
    ce = conv5_relu(conv5_relu(context["state"], *params["penc1"]), *params["penc2"])
    conv_z = ce.reshape(ce.shape[0], -1)
    mlp_in = jnp.concatenate([conv_z, context["action"][:, None],
                              context["reward"][:, None]], axis=1)
    h = jnp.maximum(lin(mlp_in, params["pmlp1"], bf=True), 0.0)
    out = lin(h, params["pmlp2"])
    mus, sig2 = out[:, :PEARL_Z], jax.nn.softplus(out[:, PEARL_Z:])
    sig2 = jnp.clip(sig2, 1e-7, None)
    z_var = 1.0 / jnp.sum(1.0 / sig2, axis=0)
    z_mean = z_var * jnp.sum(mus / sig2, axis=0)
    z = z_mean + jnp.sqrt(z_var) * eps[0]
    kl = jnp.sum(0.5 * (z_var + z_mean ** 2 - 1.0) - 0.5 * jnp.log(z_var))

    # main
    he = conv5_relu(conv5_relu(x, *params["conv1"]), *params["conv2"])
    feat = he.reshape(x.shape[0], -1)
    xcat = jnp.concatenate(
        [feat, jnp.broadcast_to(z[None], (x.shape[0], PEARL_Z))], axis=1)
    hv = jnp.maximum(lin(xcat, params["fc_h_v"], bf=True), 0.0)
    ha = jnp.maximum(lin(xcat, params["fc_h_a"], bf=True), 0.0)
    v = lin(hv, params["fc_z_v"]).reshape(-1, 1, ATOMS)
    a = lin(ha, params["fc_z_a"]).reshape(-1, ACTION_SPACE, ATOMS)
    q = v + a - jnp.mean(a, axis=1, keepdims=True)
    q = jax.nn.log_softmax(q, axis=2) if log else jax.nn.softmax(q, axis=2)
    return q, kl


# --------------------------------- main ---------------------------------------
if __name__ == "__main__":
    root = jax.random.PRNGKey(0)
    k_param, k_x, k_cs, k_ca, k_cr, k_eps = jax.random.split(root, 6)

    params = init_params(k_param)
    prep = prepare_params(params)      # one-time weight packing

    x = jax.random.normal(k_x, (BATCH, HISTORY_LEN, IMG, IMG), dtype=jnp.float32)
    ctx_state = jax.random.normal(k_cs, (CONTEXT_N, HISTORY_LEN, IMG, IMG),
                                  dtype=jnp.float32)
    ctx_action = jax.random.randint(k_ca, (CONTEXT_N,), 0, ACTION_SPACE
                                    ).astype(jnp.float32)
    ctx_reward = jax.random.normal(k_cr, (CONTEXT_N,), dtype=jnp.float32)
    # TODO(synk): torch rsample uses torch's global RNG; here the reparameterisation
    # noise is an explicit jax.random input so kernel and reference share it.
    eps = jax.random.normal(k_eps, (1, PEARL_Z), dtype=jnp.float32)

    q, kl = pearl_dqn_forward(prep, x, ctx_state, ctx_action, ctx_reward, eps,
                              log=False)
    q = jax.block_until_ready(q)
    kl = jax.block_until_ready(kl)

    assert q.shape == (BATCH, ACTION_SPACE, ATOMS)
    assert bool(jnp.all(jnp.isfinite(q))) and bool(jnp.isfinite(kl))
    assert bool(jnp.allclose(jnp.sum(q, axis=-1), 1.0, atol=1e-4))

    # cross-check the fused kernel against a plain-JAX reference of the module
    context = {"state": ctx_state, "action": ctx_action, "reward": ctx_reward}
    q_ref, kl_ref = reference_forward(params, x, context, eps, log=False)
    assert bool(jnp.allclose(q, q_ref, atol=2e-3)), \
        float(jnp.max(jnp.abs(q - q_ref)))
    assert bool(jnp.allclose(kl, kl_ref, rtol=1e-2, atol=1e-2)), \
        (float(kl), float(kl_ref))

    print("KERNEL_OK")
</pallas_src>

<mosaic_0001>
module attributes {stable_mosaic.version = 11 : i64} {
  func.func @_pearl_dqn_kernel(%arg0: memref<936x256xbf16, #tpu.memory_space<vmem>>, %arg1: memref<8x128xbf16, #tpu.memory_space<vmem>>, %arg2: memref<1x8xf32, #tpu.memory_space<vmem>>, %arg3: memref<256x128xbf16, #tpu.memory_space<vmem>>, %arg4: memref<1x128xf32, #tpu.memory_space<vmem>>, %arg5: memref<1664x128xbf16, #tpu.memory_space<any>>, %arg6: memref<1x128xf32, #tpu.memory_space<vmem>>, %arg7: memref<1280x128xbf16, #tpu.memory_space<any>>, %arg8: memref<1x128xf32, #tpu.memory_space<vmem>>, %arg9: memref<8x128xf32, #tpu.memory_space<vmem>>, %arg10: memref<128x128xf32, #tpu.memory_space<vmem>>, %arg11: memref<1x128xf32, #tpu.memory_space<vmem>>, %arg12: memref<128x8xf32, #tpu.memory_space<vmem>>, %arg13: memref<1x8xf32, #tpu.memory_space<vmem>>, %arg14: memref<128x8xf32, #tpu.memory_space<vmem>>, %arg15: memref<1x8xf32, #tpu.memory_space<vmem>>, %arg16: memref<128x128xf32, #tpu.memory_space<vmem>>, %arg17: memref<8x128xf32, #tpu.memory_space<vmem>>, %arg18: memref<1x1xf32, #tpu.memory_space<vmem>>, %arg19: memref<1664x128xbf16, #tpu.memory_space<vmem>>, %arg20: memref<1280x128xbf16, #tpu.memory_space<vmem>>, %arg21: memref<72x1664xbf16, #tpu.memory_space<vmem>>, %arg22: memref<8x1280xbf16, #tpu.memory_space<vmem>>, %arg23: memref<2x!tpu.dma_semaphore, #tpu.memory_space<semaphore_mem>>) attributes {dimension_semantics = [], scalar_prefetch = 0 : i64, scratch_operands = 5 : i64, tpu.core_type = #tpu.core_type<tc>} {
    %c0_i32 = arith.constant 0 : i32
    %0 = tpu.memref_slice %arg23[%c0_i32] : memref<2x!tpu.dma_semaphore, #tpu.memory_space<semaphore_mem>> -> memref<1x!tpu.dma_semaphore, #tpu.memory_space<semaphore_mem>>
    %1 = tpu.memref_squeeze %0 : memref<1x!tpu.dma_semaphore, #tpu.memory_space<semaphore_mem>> -> memref<!tpu.dma_semaphore, #tpu.memory_space<semaphore_mem>>
    tpu.enqueue_dma source(%arg5 : memref<1664x128xbf16, #tpu.memory_space<any>>) target(%arg19 : memref<1664x128xbf16, #tpu.memory_space<vmem>>) target_semaphore(%1 : memref<!tpu.dma_semaphore, #tpu.memory_space<semaphore_mem>>)
    %c1_i32 = arith.constant 1 : i32
    %2 = tpu.memref_slice %arg23[%c1_i32] : memref<2x!tpu.dma_semaphore, #tpu.memory_space<semaphore_mem>> -> memref<1x!tpu.dma_semaphore, #tpu.memory_space<semaphore_mem>>
    %3 = tpu.memref_squeeze %2 : memref<1x!tpu.dma_semaphore, #tpu.memory_space<semaphore_mem>> -> memref<!tpu.dma_semaphore, #tpu.memory_space<semaphore_mem>>
    tpu.enqueue_dma source(%arg7 : memref<1280x128xbf16, #tpu.memory_space<any>>) target(%arg20 : memref<1280x128xbf16, #tpu.memory_space<vmem>>) target_semaphore(%3 : memref<!tpu.dma_semaphore, #tpu.memory_space<semaphore_mem>>)
    %c0 = arith.constant 0 : index
    %c0_0 = arith.constant 0 : index
    %4 = vector.load %arg0[%c0, %c0_0] : memref<936x256xbf16, #tpu.memory_space<vmem>>, vector<936x256xbf16>
    %c0_1 = arith.constant 0 : index
    %c0_2 = arith.constant 0 : index
    %5 = vector.load %arg3[%c0_1, %c0_2] : memref<256x128xbf16, #tpu.memory_space<vmem>>, vector<256x128xbf16>
    %cst = arith.constant dense<0.000000e+00> : vector<936x128xf32>
    %6 = tpu.matmul %4, %5, %cst {dimension_numbers = #tpu.dot_dimension_numbers<[1], [0], [0], [1], [0, 0, 1, 1], [], []>} : vector<936x256xbf16>, vector<256x128xbf16>, vector<936x128xf32> -> vector<936x128xf32>
    %c0_3 = arith.constant 0 : index
    %c0_4 = arith.constant 0 : index
    %7 = vector.load %arg4[%c0_3, %c0_4] : memref<1x128xf32, #tpu.memory_space<vmem>>, vector<1x128xf32>
    %8 = vector.broadcast %7 : vector<1x128xf32> to vector<936x128xf32>
    %9 = arith.addf %6, %8 : vector<936x128xf32>
    %cst_5 = arith.constant 0.000000e+00 : f32
    %10 = vector.broadcast %cst_5 : f32 to vector<936x128xf32>
    %11 = arith.maximumf %9, %10 : vector<936x128xf32>
    %12 = vector.extract_strided_slice %11 {offsets = [0, 0], sizes = [72, 128], strides = [1, 1]} : vector<936x128xf32> to vector<72x128xf32>
    %13 = arith.truncf %12 : vector<72x128xf32> to vector<72x128xbf16>
    %c0_6 = arith.constant 0 : index
    %c0_7 = arith.constant 0 : index
    %14 = vector.load %arg21[%c0_6, %c0_7] : memref<72x1664xbf16, #tpu.memory_space<vmem>>, vector<72x128xbf16>
    tpu.vector_store %arg21[%c0_6, %c0_7], %13 {strides = array<i32>} : memref<72x1664xbf16, #tpu.memory_space<vmem>>, vector<72x128xbf16>,
    %15 = vector.extract_strided_slice %11 {offsets = [72, 0], sizes = [72, 128], strides = [1, 1]} : vector<936x128xf32> to vector<72x128xf32>
    %16 = arith.truncf %15 : vector<72x128xf32> to vector<72x128xbf16>
    %c0_8 = arith.constant 0 : index
    %c128 = arith.constant 128 : index
    %17 = vector.load %arg21[%c0_8, %c128] : memref<72x1664xbf16, #tpu.memory_space<vmem>>, vector<72x128xbf16>
    tpu.vector_store %arg21[%c0_8, %c128], %16 {strides = array<i32>} : memref<72x1664xbf16, #tpu.memory_space<vmem>>, vector<72x128xbf16>,
    %18 = vector.extract_strided_slice %11 {offsets = [144, 0], sizes = [72, 128], strides = [1, 1]} : vector<936x128xf32> to vector<72x128xf32>
    %19 = arith.truncf %18 : vector<72x128xf32> to vector<72x128xbf16>
    %c0_9 = arith.constant 0 : index
    %c256 = arith.constant 256 : index
    %20 = vector.load %arg21[%c0_9, %c256] : memref<72x1664xbf16, #tpu.memory_space<vmem>>, vector<72x128xbf16>
    tpu.vector_store %arg21[%c0_9, %c256], %19 {strides = array<i32>} : memref<72x1664xbf16, #tpu.memory_space<vmem>>, vector<72x128xbf16>,
    %21 = vector.extract_strided_slice %11 {offsets = [216, 0], sizes = [72, 128], strides = [1, 1]} : vector<936x128xf32> to vector<72x128xf32>
    %22 = arith.truncf %21 : vector<72x128xf32> to vector<72x128xbf16>
    %c0_10 = arith.constant 0 : index
    %c384 = arith.constant 384 : index
    %23 = vector.load %arg21[%c0_10, %c384] : memref<72x1664xbf16, #tpu.memory_space<vmem>>, vector<72x128xbf16>
    tpu.vector_store %arg21[%c0_10, %c384], %22 {strides = array<i32>} : memref<72x1664xbf16, #tpu.memory_space<vmem>>, vector<72x128xbf16>,
    %24 = vector.extract_strided_slice %11 {offsets = [288, 0], sizes = [72, 128], strides = [1, 1]} : vector<936x128xf32> to vector<72x128xf32>
    %25 = arith.truncf %24 : vector<72x128xf32> to vector<72x128xbf16>
    %c0_11 = arith.constant 0 : index
    %c512 = arith.constant 512 : index
    %26 = vector.load %arg21[%c0_11, %c512] : memref<72x1664xbf16, #tpu.memory_space<vmem>>, vector<72x128xbf16>
    tpu.vector_store %arg21[%c0_11, %c512], %25 {strides = array<i32>} : memref<72x1664xbf16, #tpu.memory_space<vmem>>, vector<72x128xbf16>,
    %27 = vector.extract_strided_slice %11 {offsets = [360, 0], sizes = [72, 128], strides = [1, 1]} : vector<936x128xf32> to vector<72x128xf32>
    %28 = arith.truncf %27 : vector<72x128xf32> to vector<72x128xbf16>
    %c0_12 = arith.constant 0 : index
    %c640 = arith.constant 640 : index
    %29 = vector.load %arg21[%c0_12, %c640] : memref<72x1664xbf16, #tpu.memory_space<vmem>>, vector<72x128xbf16>
    tpu.vector_store %arg21[%c0_12, %c640], %28 {strides = array<i32>} : memref<72x1664xbf16, #tpu.memory_space<vmem>>, vector<72x128xbf16>,
    %30 = vector.extract_strided_slice %11 {offsets = [432, 0], sizes = [72, 128], strides = [1, 1]} : vector<936x128xf32> to vector<72x128xf32>
    %31 = arith.truncf %30 : vector<72x128xf32> to vector<72x128xbf16>
    %c0_13 = arith.constant 0 : index
    %c768 = arith.constant 768 : index
    %32 = vector.load %arg21[%c0_13, %c768] : memref<72x1664xbf16, #tpu.memory_space<vmem>>, vector<72x128xbf16>
    tpu.vector_store %arg21[%c0_13, %c768], %31 {strides = array<i32>} : memref<72x1664xbf16, #tpu.memory_space<vmem>>, vector<72x128xbf16>,
    %33 = vector.extract_strided_slice %11 {offsets = [504, 0], sizes = [72, 128], strides = [1, 1]} : vector<936x128xf32> to vector<72x128xf32>
    %34 = arith.truncf %33 : vector<72x128xf32> to vector<72x128xbf16>
    %c0_14 = arith.constant 0 : index
    %c896 = arith.constant 896 : index
    %35 = vector.load %arg21[%c0_14, %c896] : memref<72x1664xbf16, #tpu.memory_space<vmem>>, vector<72x128xbf16>
    tpu.vector_store %arg21[%c0_14, %c896], %34 {strides = array<i32>} : memref<72x1664xbf16, #tpu.memory_space<vmem>>, vector<72x128xbf16>,
    %36 = vector.extract_strided_slice %11 {offsets = [576, 0], sizes = [72, 128], strides = [1, 1]} : vector<936x128xf32> to vector<72x128xf32>
    %37 = arith.truncf %36 : vector<72x128xf32> to vector<72x128xbf16>
    %c0_15 = arith.constant 0 : index
    %c1024 = arith.constant 1024 : index
    %38 = vector.load %arg21[%c0_15, %c1024] : memref<72x1664xbf16, #tpu.memory_space<vmem>>, vector<72x128xbf16>
    tpu.vector_store %arg21[%c0_15, %c1024], %37 {strides = array<i32>} : memref<72x1664xbf16, #tpu.memory_space<vmem>>, vector<72x128xbf16>,
    %39 = vector.extract_strided_slice %11 {offsets = [648, 0], sizes = [72, 128], strides = [1, 1]} : vector<936x128xf32> to vector<72x128xf32>
    %40 = arith.truncf %39 : vector<72x128xf32> to vector<72x128xbf16>
    %c0_16 = arith.constant 0 : index
    %c1152 = arith.constant 1152 : index
    %41 = vector.load %arg21[%c0_16, %c1152] : memref<72x1664xbf16, #tpu.memory_space<vmem>>, vector<72x128xbf16>
    tpu.vector_store %arg21[%c0_16, %c1152], %40 {strides = array<i32>} : memref<72x1664xbf16, #tpu.memory_space<vmem>>, vector<72x128xbf16>,
    %42 = vector.extract_strided_slice %11 {offsets = [720, 0], sizes = [72, 128], strides = [1, 1]} : vector<936x128xf32> to vector<72x128xf32>
    %43 = arith.truncf %42 : vector<72x128xf32> to vector<72x128xbf16>
    %c0_17 = arith.constant 0 : index
    %c1280 = arith.constant 1280 : index
    %44 = vector.load %arg21[%c0_17, %c1280] : memref<72x1664xbf16, #tpu.memory_space<vmem>>, vector<72x128xbf16>
    tpu.vector_store %arg21[%c0_17, %c1280], %43 {strides = array<i32>} : memref<72x1664xbf16, #tpu.memory_space<vmem>>, vector<72x128xbf16>,
    %45 = vector.extract_strided_slice %11 {offsets = [792, 0], sizes = [72, 128], strides = [1, 1]} : vector<936x128xf32> to vector<72x128xf32>
    %46 = arith.truncf %45 : vector<72x128xf32> to vector<72x128xbf16>
    %c0_18 = arith.constant 0 : index
    %c1408 = arith.constant 1408 : index
    %47 = vector.load %arg21[%c0_18, %c1408] : memref<72x1664xbf16, #tpu.memory_space<vmem>>, vector<72x128xbf16>
    tpu.vector_store %arg21[%c0_18, %c1408], %46 {strides = array<i32>} : memref<72x1664xbf16, #tpu.memory_space<vmem>>, vector<72x128xbf16>,
    %48 = vector.extract_strided_slice %11 {offsets = [864, 0], sizes = [72, 128], strides = [1, 1]} : vector<936x128xf32> to vector<72x128xf32>
    %49 = arith.truncf %48 : vector<72x128xf32> to vector<72x128xbf16>
    %c0_19 = arith.constant 0 : index
    %c1536 = arith.constant 1536 : index
    %50 = vector.load %arg21[%c0_19, %c1536] : memref<72x1664xbf16, #tpu.memory_space<vmem>>, vector<72x128xbf16>
    tpu.vector_store %arg21[%c0_19, %c1536], %49 {strides = array<i32>} : memref<72x1664xbf16, #tpu.memory_space<vmem>>, vector<72x128xbf16>,
    %c0_i32_20 = arith.constant 0 : i32
    %51 = tpu.memref_slice %arg23[%c0_i32_20] : memref<2x!tpu.dma_semaphore, #tpu.memory_space<semaphore_mem>> -> memref<1x!tpu.dma_semaphore, #tpu.memory_space<semaphore_mem>>
    %52 = tpu.memref_squeeze %51 : memref<1x!tpu.dma_semaphore, #tpu.memory_space<semaphore_mem>> -> memref<!tpu.dma_semaphore, #tpu.memory_space<semaphore_mem>>
    tpu.wait_dma2 semaphore(%52 : memref<!tpu.dma_semaphore, #tpu.memory_space<semaphore_mem>>) src(%arg5 : memref<1664x128xbf16, #tpu.memory_space<any>>) dst(%arg19 : memref<1664x128xbf16, #tpu.memory_space<vmem>>)
    %c0_21 = arith.constant 0 : index
    %c0_22 = arith.constant 0 : index
    %53 = vector.load %arg21[%c0_21, %c0_22] : memref<72x1664xbf16, #tpu.memory_space<vmem>>, vector<72x1664xbf16>
    %c0_23 = arith.constant 0 : index
    %c0_24 = arith.constant 0 : index
    %54 = vector.load %arg19[%c0_23, %c0_24] : memref<1664x128xbf16, #tpu.memory_space<vmem>>, vector<1664x128xbf16>
    %cst_25 = arith.constant dense<0.000000e+00> : vector<72x128xf32>
    %55 = tpu.matmul %53, %54, %cst_25 {dimension_numbers = #tpu.dot_dimension_numbers<[1], [0], [0], [1], [0, 0, 1, 1], [], []>} : vector<72x1664xbf16>, vector<1664x128xbf16>, vector<72x128xf32> -> vector<72x128xf32>
    %c0_26 = arith.constant 0 : index
    %c0_27 = arith.constant 0 : index
    %56 = vector.load %arg6[%c0_26, %c0_27] : memref<1x128xf32, #tpu.memory_space<vmem>>, vector<1x128xf32>
    %57 = vector.broadcast %56 : vector<1x128xf32> to vector<72x128xf32>
    %58 = arith.addf %55, %57 : vector<72x128xf32>
    %cst_28 = arith.constant 0.000000e+00 : f32
    %59 = vector.broadcast %cst_28 : f32 to vector<72x128xf32>
    %60 = arith.maximumf %58, %59 : vector<72x128xf32>
    %61 = vector.extract_strided_slice %60 {offsets = [0, 0], sizes = [8, 128], strides = [1, 1]} : vector<72x128xf32> to vector<8x128xf32>
    %62 = arith.truncf %61 : vector<8x128xf32> to vector<8x128xbf16>
    %c0_29 = arith.constant 0 : index
    %c0_30 = arith.constant 0 : index
    %63 = vector.load %arg22[%c0_29, %c0_30] : memref<8x1280xbf16, #tpu.memory_space<vmem>>, vector<8x128xbf16>
    tpu.vector_store %arg22[%c0_29, %c0_30], %62 {strides = array<i32>} : memref<8x1280xbf16, #tpu.memory_space<vmem>>, vector<8x128xbf16>,
    %64 = vector.extract_strided_slice %60 {offsets = [8, 0], sizes = [8, 128], strides = [1, 1]} : vector<72x128xf32> to vector<8x128xf32>
    %65 = arith.truncf %64 : vector<8x128xf32> to vector<8x128xbf16>
    %c0_31 = arith.constant 0 : index
    %c128_32 = arith.constant 128 : index
    %66 = vector.load %arg22[%c0_31, %c128_32] : memref<8x1280xbf16, #tpu.memory_space<vmem>>, vector<8x128xbf16>
    tpu.vector_store %arg22[%c0_31, %c128_32], %65 {strides = array<i32>} : memref<8x1280xbf16, #tpu.memory_space<vmem>>, vector<8x128xbf16>,
    %67 = vector.extract_strided_slice %60 {offsets = [16, 0], sizes = [8, 128], strides = [1, 1]} : vector<72x128xf32> to vector<8x128xf32>
    %68 = arith.truncf %67 : vector<8x128xf32> to vector<8x128xbf16>
    %c0_33 = arith.constant 0 : index
    %c256_34 = arith.constant 256 : index
    %69 = vector.load %arg22[%c0_33, %c256_34] : memref<8x1280xbf16, #tpu.memory_space<vmem>>, vector<8x128xbf16>
    tpu.vector_store %arg22[%c0_33, %c256_34], %68 {strides = array<i32>} : memref<8x1280xbf16, #tpu.memory_space<vmem>>, vector<8x128xbf16>,
    %70 = vector.extract_strided_slice %60 {offsets = [24, 0], sizes = [8, 128], strides = [1, 1]} : vector<72x128xf32> to vector<8x128xf32>
    %71 = arith.truncf %70 : vector<8x128xf32> to vector<8x128xbf16>
    %c0_35 = arith.constant 0 : index
    %c384_36 = arith.constant 384 : index
    %72 = vector.load %arg22[%c0_35, %c384_36] : memref<8x1280xbf16, #tpu.memory_space<vmem>>, vector<8x128xbf16>
    tpu.vector_store %arg22[%c0_35, %c384_36], %71 {strides = array<i32>} : memref<8x1280xbf16, #tpu.memory_space<vmem>>, vector<8x128xbf16>,
    %73 = vector.extract_strided_slice %60 {offsets = [32, 0], sizes = [8, 128], strides = [1, 1]} : vector<72x128xf32> to vector<8x128xf32>
    %74 = arith.truncf %73 : vector<8x128xf32> to vector<8x128xbf16>
    %c0_37 = arith.constant 0 : index
    %c512_38 = arith.constant 512 : index
    %75 = vector.load %arg22[%c0_37, %c512_38] : memref<8x1280xbf16, #tpu.memory_space<vmem>>, vector<8x128xbf16>
    tpu.vector_store %arg22[%c0_37, %c512_38], %74 {strides = array<i32>} : memref<8x1280xbf16, #tpu.memory_space<vmem>>, vector<8x128xbf16>,
    %76 = vector.extract_strided_slice %60 {offsets = [40, 0], sizes = [8, 128], strides = [1, 1]} : vector<72x128xf32> to vector<8x128xf32>
    %77 = arith.truncf %76 : vector<8x128xf32> to vector<8x128xbf16>
    %c0_39 = arith.constant 0 : index
    %c640_40 = arith.constant 640 : index
    %78 = vector.load %arg22[%c0_39, %c640_40] : memref<8x1280xbf16, #tpu.memory_space<vmem>>, vector<8x128xbf16>
    tpu.vector_store %arg22[%c0_39, %c640_40], %77 {strides = array<i32>} : memref<8x1280xbf16, #tpu.memory_space<vmem>>, vector<8x128xbf16>,
    %79 = vector.extract_strided_slice %60 {offsets = [48, 0], sizes = [8, 128], strides = [1, 1]} : vector<72x128xf32> to vector<8x128xf32>
    %80 = arith.truncf %79 : vector<8x128xf32> to vector<8x128xbf16>
    %c0_41 = arith.constant 0 : index
    %c768_42 = arith.constant 768 : index
    %81 = vector.load %arg22[%c0_41, %c768_42] : memref<8x1280xbf16, #tpu.memory_space<vmem>>, vector<8x128xbf16>
    tpu.vector_store %arg22[%c0_41, %c768_42], %80 {strides = array<i32>} : memref<8x1280xbf16, #tpu.memory_space<vmem>>, vector<8x128xbf16>,
    %82 = vector.extract_strided_slice %60 {offsets = [56, 0], sizes = [8, 128], strides = [1, 1]} : vector<72x128xf32> to vector<8x128xf32>
    %83 = arith.truncf %82 : vector<8x128xf32> to vector<8x128xbf16>
    %c0_43 = arith.constant 0 : index
    %c896_44 = arith.constant 896 : index
    %84 = vector.load %arg22[%c0_43, %c896_44] : memref<8x1280xbf16, #tpu.memory_space<vmem>>, vector<8x128xbf16>
    tpu.vector_store %arg22[%c0_43, %c896_44], %83 {strides = array<i32>} : memref<8x1280xbf16, #tpu.memory_space<vmem>>, vector<8x128xbf16>,
    %85 = vector.extract_strided_slice %60 {offsets = [64, 0], sizes = [8, 128], strides = [1, 1]} : vector<72x128xf32> to vector<8x128xf32>
    %86 = arith.truncf %85 : vector<8x128xf32> to vector<8x128xbf16>
    %c0_45 = arith.constant 0 : index
    %c1024_46 = arith.constant 1024 : index
    %87 = vector.load %arg22[%c0_45, %c1024_46] : memref<8x1280xbf16, #tpu.memory_space<vmem>>, vector<8x128xbf16>
    tpu.vector_store %arg22[%c0_45, %c1024_46], %86 {strides = array<i32>} : memref<8x1280xbf16, #tpu.memory_space<vmem>>, vector<8x128xbf16>,
    %c0_47 = arith.constant 0 : index
    %c0_48 = arith.constant 0 : index
    %88 = vector.load %arg1[%c0_47, %c0_48] : memref<8x128xbf16, #tpu.memory_space<vmem>>, vector<8x128xbf16>
    %c0_49 = arith.constant 0 : index
    %c1152_50 = arith.constant 1152 : index
    %89 = vector.load %arg22[%c0_49, %c1152_50] : memref<8x1280xbf16, #tpu.memory_space<vmem>>, vector<8x128xbf16>
    tpu.vector_store %arg22[%c0_49, %c1152_50], %88 {strides = array<i32>} : memref<8x1280xbf16, #tpu.memory_space<vmem>>, vector<8x128xbf16>,
    %c1_i32_51 = arith.constant 1 : i32
    %90 = tpu.memref_slice %arg23[%c1_i32_51] : memref<2x!tpu.dma_semaphore, #tpu.memory_space<semaphore_mem>> -> memref<1x!tpu.dma_semaphore, #tpu.memory_space<semaphore_mem>>
    %91 = tpu.memref_squeeze %90 : memref<1x!tpu.dma_semaphore, #tpu.memory_space<semaphore_mem>> -> memref<!tpu.dma_semaphore, #tpu.memory_space<semaphore_mem>>
    tpu.wait_dma2 semaphore(%91 : memref<!tpu.dma_semaphore, #tpu.memory_space<semaphore_mem>>) src(%arg7 : memref<1280x128xbf16, #tpu.memory_space<any>>) dst(%arg20 : memref<1280x128xbf16, #tpu.memory_space<vmem>>)
    %c0_52 = arith.constant 0 : index
    %c0_53 = arith.constant 0 : index
    %92 = vector.load %arg22[%c0_52, %c0_53] : memref<8x1280xbf16, #tpu.memory_space<vmem>>, vector<8x1280xbf16>
    %c0_54 = arith.constant 0 : index
    %c0_55 = arith.constant 0 : index
    %93 = vector.load %arg20[%c0_54, %c0_55] : memref<1280x128xbf16, #tpu.memory_space<vmem>>, vector<1280x128xbf16>
    %cst_56 = arith.constant dense<0.000000e+00> : vector<8x128xf32>
    %94 = tpu.matmul %92, %93, %cst_56 {dimension_numbers = #tpu.dot_dimension_numbers<[1], [0], [0], [1], [0, 0, 1, 1], [], []>} : vector<8x1280xbf16>, vector<1280x128xbf16>, vector<8x128xf32> -> vector<8x128xf32>
    %c0_57 = arith.constant 0 : index
    %c0_58 = arith.constant 0 : index
    %95 = vector.load %arg8[%c0_57, %c0_58] : memref<1x128xf32, #tpu.memory_space<vmem>>, vector<1x128xf32>
    %96 = vector.broadcast %95 : vector<1x128xf32> to vector<8x128xf32>
    %97 = arith.addf %94, %96 : vector<8x128xf32>
    %cst_59 = arith.constant 0.000000e+00 : f32
    %98 = vector.broadcast %cst_59 : f32 to vector<8x128xf32>
    %99 = arith.maximumf %97, %98 : vector<8x128xf32>
    %c0_60 = arith.constant 0 : index
    %c0_61 = arith.constant 0 : index
    %100 = vector.load %arg12[%c0_60, %c0_61] : memref<128x8xf32, #tpu.memory_space<vmem>>, vector<128x8xf32>
    %cst_62 = arith.constant dense<0.000000e+00> : vector<8x8xf32>
    %101 = tpu.matmul %99, %100, %cst_62 {dimension_numbers = #tpu.dot_dimension_numbers<[1], [0], [0], [1], [0, 0, 1, 1], [], []>} : vector<8x128xf32>, vector<128x8xf32>, vector<8x8xf32> -> vector<8x8xf32>
    %c0_63 = arith.constant 0 : index
    %c0_64 = arith.constant 0 : index
    %102 = vector.load %arg13[%c0_63, %c0_64] : memref<1x8xf32, #tpu.memory_space<vmem>>, vector<1x8xf32>
    %103 = vector.broadcast %102 : vector<1x8xf32> to vector<8x8xf32>
    %104 = arith.addf %101, %103 : vector<8x8xf32>
    %c0_65 = arith.constant 0 : index
    %c0_66 = arith.constant 0 : index
    %105 = vector.load %arg14[%c0_65, %c0_66] : memref<128x8xf32, #tpu.memory_space<vmem>>, vector<128x8xf32>
    %cst_67 = arith.constant dense<0.000000e+00> : vector<8x8xf32>
    %106 = tpu.matmul %99, %105, %cst_67 {dimension_numbers = #tpu.dot_dimension_numbers<[1], [0], [0], [1], [0, 0, 1, 1], [], []>} : vector<8x128xf32>, vector<128x8xf32>, vector<8x8xf32> -> vector<8x8xf32>
    %c0_68 = arith.constant 0 : index
    %c0_69 = arith.constant 0 : index
    %107 = vector.load %arg15[%c0_68, %c0_69] : memref<1x8xf32, #tpu.memory_space<vmem>>, vector<1x8xf32>
    %108 = vector.broadcast %107 : vector<1x8xf32> to vector<8x8xf32>
    %109 = arith.addf %106, %108 : vector<8x8xf32>
    %cst_70 = arith.constant 0.000000e+00 : f32
    %110 = vector.broadcast %cst_70 : f32 to vector<8x8xf32>
    %111 = arith.maximumf %109, %110 : vector<8x8xf32>
    %112 = math.absf %109 : vector<8x8xf32>
    %cst_71 = arith.constant 0.000000e+00 : f32
    %113 = vector.broadcast %cst_71 : f32 to vector<8x8xf32>
    %114 = arith.subf %113, %112 : vector<8x8xf32>
    %115 = math.exp %114 : vector<8x8xf32>
    %cst_72 = arith.constant 1.000000e+00 : f32
    %116 = vector.broadcast %cst_72 : f32 to vector<8x8xf32>
    %117 = arith.addf %116, %115 : vector<8x8xf32>
    %118 = math.log %117 : vector<8x8xf32>
    %119 = arith.addf %111, %118 : vector<8x8xf32>
    %cst_73 = arith.constant 1.000000e-07 : f32
    %120 = vector.broadcast %cst_73 : f32 to vector<8x8xf32>
    %121 = arith.maximumf %119, %120 : vector<8x8xf32>
    %122 = tpu.iota {dimensions = array<i32: 0>} : vector<8x8xi32>
    %c2_i32 = arith.constant 2 : i32
    %123 = vector.broadcast %c2_i32 : i32 to vector<8x8xi32>
    %124 = arith.cmpi sge, %122, %123 : vector<8x8xi32>
    %c6_i32 = arith.constant 6 : i32
    %125 = vector.broadcast %c6_i32 : i32 to vector<8x8xi32>
    %126 = arith.cmpi slt, %122, %125 : vector<8x8xi32>
    %127 = arith.andi %124, %126 : vector<8x8xi1>
    %128 = arith.extui %127 : vector<8x8xi1> to vector<8x8xi32>
    %129 = arith.sitofp %128 : vector<8x8xi32> to vector<8x8xf32>
    %130 = arith.divf %129, %121 : vector<8x8xf32>
    %cst_74 = arith.constant dense<0.000000e+00> : vector<8xf32>
    %131 = vector.multi_reduction <add>, %130, %cst_74 [0] : vector<8x8xf32> to vector<8xf32>
    %132 = vector.shape_cast %131 : vector<8xf32> to vector<1x8xf32>
    %cst_75 = arith.constant 1.000000e+00 : f32
    %133 = vector.broadcast %cst_75 : f32 to vector<1x8xf32>
    %134 = arith.divf %133, %132 : vector<1x8xf32>
    %135 = arith.mulf %104, %130 : vector<8x8xf32>
    %cst_76 = arith.constant dense<0.000000e+00> : vector<8xf32>
    %136 = vector.multi_reduction <add>, %135, %cst_76 [0] : vector<8x8xf32> to vector<8xf32>
    %137 = vector.shape_cast %136 : vector<8xf32> to vector<1x8xf32>
    %138 = arith.mulf %134, %137 : vector<1x8xf32>
    %139 = math.sqrt %134 : vector<1x8xf32>
    %c0_77 = arith.constant 0 : index
    %c0_78 = arith.constant 0 : index
    %140 = vector.load %arg2[%c0_77, %c0_78] : memref<1x8xf32, #tpu.memory_space<vmem>>, vector<1x8xf32>
    %141 = arith.mulf %139, %140 : vector<1x8xf32>
    %142 = arith.addf %138, %141 : vector<1x8xf32>
    %143 = arith.mulf %138, %138 : vector<1x8xf32>
    %144 = arith.addf %134, %143 : vector<1x8xf32>
    %cst_79 = arith.constant 1.000000e+00 : f32
    %145 = vector.broadcast %cst_79 : f32 to vector<1x8xf32>
    %146 = arith.subf %144, %145 : vector<1x8xf32>
    %cst_80 = arith.constant 5.000000e-01 : f32
    %147 = vector.broadcast %cst_80 : f32 to vector<1x8xf32>
    %148 = arith.mulf %147, %146 : vector<1x8xf32>
    %149 = math.log %134 : vector<1x8xf32>
    %cst_81 = arith.constant 5.000000e-01 : f32
    %150 = vector.broadcast %cst_81 : f32 to vector<1x8xf32>
    %151 = arith.mulf %150, %149 : vector<1x8xf32>
    %152 = arith.subf %148, %151 : vector<1x8xf32>
    %cst_82 = arith.constant dense<0.000000e+00> : vector<1xf32>
    %153 = vector.multi_reduction <add>, %152, %cst_82 [1] : vector<1x8xf32> to vector<1xf32>
    %154 = vector.shape_cast %153 : vector<1xf32> to vector<1x1xf32>
    %c0_83 = arith.constant 0 : index
    %c0_84 = arith.constant 0 : index
    %155 = vector.load %arg18[%c0_83, %c0_84] : memref<1x1xf32, #tpu.memory_space<vmem>>, vector<1x1xf32>
    tpu.vector_store %arg18[%c0_83, %c0_84], %154 {strides = array<i32>} : memref<1x1xf32, #tpu.memory_space<vmem>>, vector<1x1xf32>,
    %c0_85 = arith.constant 0 : index
    %c0_86 = arith.constant 0 : index
    %156 = vector.load %arg9[%c0_85, %c0_86] : memref<8x128xf32, #tpu.memory_space<vmem>>, vector<8x128xf32>
    %cst_87 = arith.constant dense<0.000000e+00> : vector<1x128xf32>
    %157 = tpu.matmul %142, %156, %cst_87 {dimension_numbers = #tpu.dot_dimension_numbers<[1], [0], [0], [1], [0, 0, 1, 1], [], []>} : vector<1x8xf32>, vector<8x128xf32>, vector<1x128xf32> -> vector<1x128xf32>
    %158 = vector.broadcast %157 : vector<1x128xf32> to vector<8x128xf32>
    %159 = arith.addf %97, %158 : vector<8x128xf32>
    %cst_88 = arith.constant 0.000000e+00 : f32
    %160 = vector.broadcast %cst_88 : f32 to vector<8x128xf32>
    %161 = arith.maximumf %159, %160 : vector<8x128xf32>
    %c0_89 = arith.constant 0 : index
    %c0_90 = arith.constant 0 : index
    %162 = vector.load %arg10[%c0_89, %c0_90] : memref<128x128xf32, #tpu.memory_space<vmem>>, vector<128x128xf32>
    %cst_91 = arith.constant dense<0.000000e+00> : vector<8x128xf32>
    %163 = tpu.matmul %161, %162, %cst_91 {dimension_numbers = #tpu.dot_dimension_numbers<[1], [0], [0], [1], [0, 0, 1, 1], [], []>} : vector<8x128xf32>, vector<128x128xf32>, vector<8x128xf32> -> vector<8x128xf32>
    %c0_92 = arith.constant 0 : index
    %c0_93 = arith.constant 0 : index
    %164 = vector.load %arg11[%c0_92, %c0_93] : memref<1x128xf32, #tpu.memory_space<vmem>>, vector<1x128xf32>
    %165 = vector.broadcast %164 : vector<1x128xf32> to vector<8x128xf32>
    %166 = arith.addf %163, %165 : vector<8x128xf32>
    %cst_94 = arith.constant dense<0xFF800000> : vector<8xf32>
    %167 = vector.multi_reduction <maximumf>, %166, %cst_94 [1] : vector<8x128xf32> to vector<8xf32>
    %168 = vector.shape_cast %167 : vector<8xf32> to vector<8x1xf32>
    %169 = vector.broadcast %168 : vector<8x1xf32> to vector<8x128xf32>
    %170 = arith.subf %166, %169 : vector<8x128xf32>
    %171 = math.exp %170 : vector<8x128xf32>
    %c0_95 = arith.constant 0 : index
    %c0_96 = arith.constant 0 : index
    %172 = vector.load %arg16[%c0_95, %c0_96] : memref<128x128xf32, #tpu.memory_space<vmem>>, vector<128x128xf32>
    %cst_97 = arith.constant dense<0.000000e+00> : vector<8x128xf32>
    %173 = tpu.matmul %171, %172, %cst_97 {dimension_numbers = #tpu.dot_dimension_numbers<[1], [0], [0], [1], [0, 0, 1, 1], [], []>} : vector<8x128xf32>, vector<128x128xf32>, vector<8x128xf32> -> vector<8x128xf32>
    %174 = tpu.reciprocal %173 {approx = true} : vector<8x128xf32> -> vector<8x128xf32>
    %175 = arith.mulf %173, %174 : vector<8x128xf32>
    %cst_98 = arith.constant 2.000000e+00 : f32
    %176 = vector.broadcast %cst_98 : f32 to vector<8x128xf32>
    %177 = arith.subf %176, %175 : vector<8x128xf32>
    %178 = arith.mulf %174, %177 : vector<8x128xf32>
    %179 = arith.mulf %171, %178 : vector<8x128xf32>
    %c0_99 = arith.constant 0 : index
    %c0_100 = arith.constant 0 : index
    %180 = vector.load %arg17[%c0_99, %c0_100] : memref<8x128xf32, #tpu.memory_space<vmem>>, vector<8x128xf32>
    tpu.vector_store %arg17[%c0_99, %c0_100], %179 {strides = array<i32>} : memref<8x128xf32, #tpu.memory_space<vmem>>, vector<8x128xf32>,
    return
  }
}

</mosaic_0001>

<llo_original>
// kernel: pearl_dqn_forward.1
$region0: #{pearl_dqn_forward.1}
  #allocation0 [shape = 'u32[]', space=smem, size = 0x4, offset = 0x4, fixed_abs, tag = 'smem constant byte address 0x4 - core index']
  #allocation1 [shape = 'u32[144,128]{1,0:T(1,128)}', space=vmem, size = 0x12000, scoped, tag = 'internal scratch']
  #allocation2 [shape = 'bf16[1664,128]{1,0:T(8,128)(2,1)}', space=vmem, size = 0x68000, scoped, tag = 'scratch operand']
  #allocation3 [shape = 'bf16[1280,128]{1,0:T(8,128)(2,1)}', space=vmem, size = 0x50000, scoped, tag = 'scratch operand']
  #allocation4 [shape = 'bf16[72,1664]{1,0:T(8,128)(2,1)}', space=vmem, size = 0x3a800, scoped, tag = 'scratch operand']
  #allocation5 [shape = 'bf16[8,1280]{1,0:T(8,128)(2,1)}', space=vmem, size = 0x5000, scoped, tag = 'scratch operand']
  #allocation6 [shape = 's32[2]{0}', space=sflag, size = 0x8, scoped, tag = 'scratch operand']
  #allocation9 [shape = 's32[]', space=sflag, size = 0x4, offset = 0, fixed_abs, tag = 'sflag constant byte address 0x0 - dummy sync flag']
  #allocation10 [shape = 's32[]', space=sflag, size = 0x4, offset = 0, fixed_abs, tag = 'sflag constant byte address 0x0 - dummy sync flag']
  %s0 = inlined_call_operand.vmem [shape: bf16[936,256], index: 0, kind: input, shape index: {}]
  %s1 = inlined_call_operand.vmem [shape: bf16[8,128], index: 1, kind: input, shape index: {}]
  %s2 = inlined_call_operand.vmem [shape: f32[1,8], index: 2, kind: input, shape index: {}]
  %s3 = inlined_call_operand.vmem [shape: bf16[256,128], index: 3, kind: input, shape index: {}]
  %s4 = inlined_call_operand.vmem [shape: f32[1,128], index: 4, kind: input, shape index: {}]
  %s5 = inlined_call_operand.vmem [shape: bf16[1664,128], index: 5, kind: input, shape index: {}]
  %s6 = inlined_call_operand.vmem [shape: f32[1,128], index: 6, kind: input, shape index: {}]
  %s7 = inlined_call_operand.vmem [shape: bf16[1280,128], index: 7, kind: input, shape index: {}]
  %s8 = inlined_call_operand.vmem [shape: f32[1,128], index: 8, kind: input, shape index: {}]
  %s9 = inlined_call_operand.vmem [shape: f32[8,128], index: 9, kind: input, shape index: {}]
  %s10 = inlined_call_operand.vmem [shape: f32[128,128], index: 10, kind: input, shape index: {}]
  %s11 = inlined_call_operand.vmem [shape: f32[1,128], index: 11, kind: input, shape index: {}]
  %s12 = inlined_call_operand.vmem [shape: f32[128,8], index: 12, kind: input, shape index: {}]
  %s13 = inlined_call_operand.vmem [shape: f32[1,8], index: 13, kind: input, shape index: {}]
  %s14 = inlined_call_operand.vmem [shape: f32[128,8], index: 14, kind: input, shape index: {}]
  %s15 = inlined_call_operand.vmem [shape: f32[1,8], index: 15, kind: input, shape index: {}]
  %s16 = inlined_call_operand.vmem [shape: f32[128,128], index: 16, kind: input, shape index: {}]
  %s17 = inlined_call_operand.vmem [shape: f32[8,128], index: 17, kind: output, shape index: {0}]
  %s18 = inlined_call_operand.hbm [shape: f32[1,1], index: 18, kind: output, shape index: {1}]
  %19 = xla_tuple %s17, %s18
  %s20 = sld [smem:[#allocation0]]
  $region146: #{pearl_dqn_forward.1} parent=0
    _
  %s22 = ssub.s32 1, %s20
  %s23 = scalar_select 0, %s22, %s20
  $region1: #{pearl_dqn_forward.1} parent=0
    #allocation7 [shape = 'u8[512]{0}', space=vmem, size = 0x400, scoped, tag = 'output window, operand 1, single buffered']
    #allocation8 [shape = 's32[1]{0}', space=sflag, size = 0x4, scoped, tag = 'scoped memory for pearl_dqn_forward.1']
    %24 = vsyncpa [#allocation8], 0
    // Predicated region
    $region2: #{pearl_dqn_forward.1} parent=1 // pred_check
      _
    $region3: #{pearl_dqn_forward.1} parent=1 // pred_check_branch
      %26 = sbr.rel (0) target = $region5
    $region4: #{pearl_dqn_forward.1} parent=1 // pred_region
      _
    $region5: #{pearl_dqn_forward.1} parent=1 // pred_fallthru
      _
    // Predicated region
    $region6: #{pearl_dqn_forward.1} parent=1 // pred_check
      _
    $region7: #{pearl_dqn_forward.1} parent=1 // pred_check_branch
      %28 = sbr.rel (0) target = $region9
    $region8: #{pearl_dqn_forward.1} parent=1 // pred_region
      _
    $region9: #{pearl_dqn_forward.1} parent=1 // pred_fallthru
      _
    // Predicated region
    $region10: #{pearl_dqn_forward.1} parent=1 // pred_check
      _
    $region11: #{pearl_dqn_forward.1} parent=1 // pred_check_branch
      %30 = sbr.rel (0) target = $region13
    $region12: #{pearl_dqn_forward.1} parent=1 // pred_region
      _
    $region13: #{pearl_dqn_forward.1} parent=1 // pred_fallthru
      _
    // Predicated region
    $region14: #{pearl_dqn_forward.1} parent=1 // pred_check
      _
    $region15: #{pearl_dqn_forward.1} parent=1 // pred_check_branch
      %32 = sbr.rel (0) target = $region17
    $region16: #{pearl_dqn_forward.1} parent=1 // pred_region
      _
    $region17: #{pearl_dqn_forward.1} parent=1 // pred_fallthru
      _
    // Predicated region
    $region18: #{pearl_dqn_forward.1} parent=1 // pred_check
      _
    $region19: #{pearl_dqn_forward.1} parent=1 // pred_check_branch
      %34 = sbr.rel (0) target = $region21
    $region20: #{pearl_dqn_forward.1} parent=1 // pred_region
      _
    $region21: #{pearl_dqn_forward.1} parent=1 // pred_fallthru
      _
    // Predicated region
    $region22: #{pearl_dqn_forward.1} parent=1 // pred_check
      _
    $region23: #{pearl_dqn_forward.1} parent=1 // pred_check_branch
      %36 = sbr.rel (0) target = $region25
    $region24: #{pearl_dqn_forward.1} parent=1 // pred_region
      _
    $region25: #{pearl_dqn_forward.1} parent=1 // pred_fallthru
      _
    // Predicated region
    $region26: #{pearl_dqn_forward.1} parent=1 // pred_check
      _
    $region27: #{pearl_dqn_forward.1} parent=1 // pred_check_branch
      %38 = sbr.rel (0) target = $region29
    $region28: #{pearl_dqn_forward.1} parent=1 // pred_region
      _
    $region29: #{pearl_dqn_forward.1} parent=1 // pred_fallthru
      _
    // Predicated region
    $region30: #{pearl_dqn_forward.1} parent=1 // pred_check
      _
    $region31: #{pearl_dqn_forward.1} parent=1 // pred_check_branch
      %40 = sbr.rel (0) target = $region33
    $region32: #{pearl_dqn_forward.1} parent=1 // pred_region
      _
    $region33: #{pearl_dqn_forward.1} parent=1 // pred_fallthru
      _
    // Predicated region
    $region34: #{pearl_dqn_forward.1} parent=1 // pred_check
      _
    $region35: #{pearl_dqn_forward.1} parent=1 // pred_check_branch
      %42 = sbr.rel (0) target = $region37
    $region36: #{pearl_dqn_forward.1} parent=1 // pred_region
      _
    $region37: #{pearl_dqn_forward.1} parent=1 // pred_fallthru
      _
    // Predicated region
    $region38: #{pearl_dqn_forward.1} parent=1 // pred_check
      _
    $region39: #{pearl_dqn_forward.1} parent=1 // pred_check_branch
      %44 = sbr.rel (0) target = $region41
    $region40: #{pearl_dqn_forward.1} parent=1 // pred_region
      _
    $region41: #{pearl_dqn_forward.1} parent=1 // pred_fallthru
      _
    // Predicated region
    $region42: #{pearl_dqn_forward.1} parent=1 // pred_check
      _
    $region43: #{pearl_dqn_forward.1} parent=1 // pred_check_branch
      %46 = sbr.rel (0) target = $region45
    $region44: #{pearl_dqn_forward.1} parent=1 // pred_region
      _
    $region45: #{pearl_dqn_forward.1} parent=1 // pred_fallthru
      _
    // Predicated region
    $region46: #{pearl_dqn_forward.1} parent=1 // pred_check
      _
    $region47: #{pearl_dqn_forward.1} parent=1 // pred_check_branch
      %48 = sbr.rel (0) target = $region49
    $region48: #{pearl_dqn_forward.1} parent=1 // pred_region
      _
    $region49: #{pearl_dqn_forward.1} parent=1 // pred_fallthru
      _
    // Predicated region
    $region50: #{pearl_dqn_forward.1} parent=1 // pred_check
      _
    $region51: #{pearl_dqn_forward.1} parent=1 // pred_check_branch
      %50 = sbr.rel (0) target = $region53
    $region52: #{pearl_dqn_forward.1} parent=1 // pred_region
      _
    $region53: #{pearl_dqn_forward.1} parent=1 // pred_fallthru
      _
    // Predicated region
    $region54: #{pearl_dqn_forward.1} parent=1 // pred_check
      _
    $region55: #{pearl_dqn_forward.1} parent=1 // pred_check_branch
      %52 = sbr.rel (0) target = $region57
    $region56: #{pearl_dqn_forward.1} parent=1 // pred_region
      _
    $region57: #{pearl_dqn_forward.1} parent=1 // pred_fallthru
      _
    // Predicated region
    $region58: #{pearl_dqn_forward.1} parent=1 // pred_check
      _
    $region59: #{pearl_dqn_forward.1} parent=1 // pred_check_branch
      %54 = sbr.rel (0) target = $region61
    $region60: #{pearl_dqn_forward.1} parent=1 // pred_region
      _
    $region61: #{pearl_dqn_forward.1} parent=1 // pred_fallthru
      _
    %p57 = scmp.lt.u32.totalorder 832, 8
    %p58 = pneg %p57
    // Predicated region
    $region62: #{pearl_dqn_forward.1} parent=1 // pred_check
      _
    $region63: #{pearl_dqn_forward.1} parent=1 // pred_check_branch
      %60 = sbr.rel (%p57) target = $region65
    $region64: #{pearl_dqn_forward.1} parent=1 // pred_region
      %s76 = sand.u32 832, 7
      %p77 = scmp.eq.s32.totalorder %s76, 0
      // Predicated region
      $region77: #{pearl_dqn_forward.1} parent=64 // pred_check
        %p78 = pneg %p77
      $region78: #{pearl_dqn_forward.1} parent=64 // pred_check_branch
        %80 = sbr.rel (%p78) target = $region80
      $region79: #{pearl_dqn_forward.1} parent=64 // pred_region
        loop: start=0, step=1, limit=1
        $region81: #{pearl_dqn_forward.1} parent=79 // loop_pre_header
          _
        $region82: #{pearl_dqn_forward.1} parent=79 // loop_header
          %s82 = sphi 0, %s86
          %p83 = scmp.ge.s32.totalorder %s82, 1
          %s87 = sphi %s5, %s5
          %s88 = sphi [#allocation2], [#allocation2]
        $region83: #{pearl_dqn_forward.1} parent=79 // loop_header_branch
          %85 = sbr.rel (%p83) target = $region87
        $region84: #{pearl_dqn_forward.1} parent=79 // loop_body
          %v89 = vld [vmem:[%s87] sm:$0xff]
          %90 = vst [vmem:[%s88] sm:$0xff] %v89
          %v91 = vld [vmem:[%s87 + $0x8] sm:$0xff]
          %92 = vst [vmem:[%s88 + $0x8] sm:$0xff] %v91
          %v93 = vld [vmem:[%s87 + $0x10] sm:$0xff]
          %94 = vst [vmem:[%s88 + $0x10] sm:$0xff] %v93
          %v95 = vld [vmem:[%s87 + $0x18] sm:$0xff]
          %96 = vst [vmem:[%s88 + $0x18] sm:$0xff] %v95
          %v97 = vld [vmem:[%s87 + $0x20] sm:$0xff]
          %98 = vst [vmem:[%s88 + $0x20] sm:$0xff] %v97
          %v99 = vld [vmem:[%s87 + $0x28] sm:$0xff]
          %100 = vst [vmem:[%s88 + $0x28] sm:$0xff] %v99
          %v101 = vld [vmem:[%s87 + $0x30] sm:$0xff]
          %102 = vst [vmem:[%s88 + $0x30] sm:$0xff] %v101
          %v103 = vld [vmem:[%s87 + $0x38] sm:$0xff]
          %104 = vst [vmem:[%s88 + $0x38] sm:$0xff] %v103
          %v105 = vld [vmem:[%s87 + $0x40] sm:$0xff]
          %106 = vst [vmem:[%s88 + $0x40] sm:$0xff] %v105
          %v107 = vld [vmem:[%s87 + $0x48] sm:$0xff]
          %108 = vst [vmem:[%s88 + $0x48] sm:$0xff] %v107
          %v109 = vld [vmem:[%s87 + $0x50] sm:$0xff]
          %110 = vst [vmem:[%s88 + $0x50] sm:$0xff] %v109
          %v111 = vld [vmem:[%s87 + $0x58] sm:$0xff]
          %112 = vst [vmem:[%s88 + $0x58] sm:$0xff] %v111
          %v113 = vld [vmem:[%s87 + $0x60] sm:$0xff]
          %114 = vst [vmem:[%s88 + $0x60] sm:$0xff] %v113
          %v115 = vld [vmem:[%s87 + $0x68] sm:$0xff]
          %116 = vst [vmem:[%s88 + $0x68] sm:$0xff] %v115
          %v117 = vld [vmem:[%s87 + $0x70] sm:$0xff]
          %118 = vst [vmem:[%s88 + $0x70] sm:$0xff] %v117
          %v119 = vld [vmem:[%s87 + $0x78] sm:$0xff]
          %120 = vst [vmem:[%s88 + $0x78] sm:$0xff] %v119
          %v121 = vld [vmem:[%s87 + $0x80] sm:$0xff]
          %122 = vst [vmem:[%s88 + $0x80] sm:$0xff] %v121
          %v123 = vld [vmem:[%s87 + $0x88] sm:$0xff]
          %124 = vst [vmem:[%s88 + $0x88] sm:$0xff] %v123
          %v125 = vld [vmem:[%s87 + $0x90] sm:$0xff]
          %126 = vst [vmem:[%s88 + $0x90] sm:$0xff] %v125
          %v127 = vld [vmem:[%s87 + $0x98] sm:$0xff]
          %128 = vst [vmem:[%s88 + $0x98] sm:$0xff] %v127
          %v129 = vld [vmem:[%s87 + $0xa0] sm:$0xff]
          %130 = vst [vmem:[%s88 + $0xa0] sm:$0xff] %v129
          %v131 = vld [vmem:[%s87 + $0xa8] sm:$0xff]
          %132 = vst [vmem:[%s88 + $0xa8] sm:$0xff] %v131
          %v133 = vld [vmem:[%s87 + $0xb0] sm:$0xff]
          %134 = vst [vmem:[%s88 + $0xb0] sm:$0xff] %v133
          %v135 = vld [vmem:[%s87 + $0xb8] sm:$0xff]
          %136 = vst [vmem:[%s88 + $0xb8] sm:$0xff] %v135
          %v137 = vld [vmem:[%s87 + $0xc0] sm:$0xff]
          %138 = vst [vmem:[%s88 + $0xc0] sm:$0xff] %v137
          %v139 = vld [vmem:[%s87 + $0xc8] sm:$0xff]
          %140 = vst [vmem:[%s88 + $0xc8] sm:$0xff] %v139
          %v141 = vld [vmem:[%s87 + $0xd0] sm:$0xff]
          %142 = vst [vmem:[%s88 + $0xd0] sm:$0xff] %v141
          %v143 = vld [vmem:[%s87 + $0xd8] sm:$0xff]
          %144 = vst [vmem:[%s88 + $0xd8] sm:$0xff] %v143
          %v145 = vld [vmem:[%s87 + $0xe0] sm:$0xff]
          %146 = vst [vmem:[%s88 + $0xe0] sm:$0xff] %v145
          %v147 = vld [vmem:[%s87 + $0xe8] sm:$0xff]
          %148 = vst [vmem:[%s88 + $0xe8] sm:$0xff] %v147
          %v149 = vld [vmem:[%s87 + $0xf0] sm:$0xff]
          %150 = vst [vmem:[%s88 + $0xf0] sm:$0xff] %v149
          %v151 = vld [vmem:[%s87 + $0xf8] sm:$0xff]
          %152 = vst [vmem:[%s88 + $0xf8] sm:$0xff] %v151
          %v153 = vld [vmem:[%s87 + $0x100] sm:$0xff]
          %154 = vst [vmem:[%s88 + $0x100] sm:$0xff] %v153
          %v155 = vld [vmem:[%s87 + $0x108] sm:$0xff]
          %156 = vst [vmem:[%s88 + $0x108] sm:$0xff] %v155
          %v157 = vld [vmem:[%s87 + $0x110] sm:$0xff]
          %158 = vst [vmem:[%s88 + $0x110] sm:$0xff] %v157
          %v159 = vld [vmem:[%s87 + $0x118] sm:$0xff]
          %160 = vst [vmem:[%s88 + $0x118] sm:$0xff] %v159
          %v161 = vld [vmem:[%s87 + $0x120] sm:$0xff]
          %162 = vst [vmem:[%s88 + $0x120] sm:$0xff] %v161
          %v163 = vld [vmem:[%s87 + $0x128] sm:$0xff]
          %164 = vst [vmem:[%s88 + $0x128] sm:$0xff] %v163
          %v165 = vld [vmem:[%s87 + $0x130] sm:$0xff]
          %166 = vst [vmem:[%s88 + $0x130] sm:$0xff] %v165
          %v167 = vld [vmem:[%s87 + $0x138] sm:$0xff]
          %168 = vst [vmem:[%s88 + $0x138] sm:$0xff] %v167
          %v169 = vld [vmem:[%s87 + $0x140] sm:$0xff]
          %170 = vst [vmem:[%s88 + $0x140] sm:$0xff] %v169
          %v171 = vld [vmem:[%s87 + $0x148] sm:$0xff]
          %172 = vst [vmem:[%s88 + $0x148] sm:$0xff] %v171
          %v173 = vld [vmem:[%s87 + $0x150] sm:$0xff]
          %174 = vst [vmem:[%s88 + $0x150] sm:$0xff] %v173
          %v175 = vld [vmem:[%s87 + $0x158] sm:$0xff]
          %176 = vst [vmem:[%s88 + $0x158] sm:$0xff] %v175
          %v177 = vld [vmem:[%s87 + $0x160] sm:$0xff]
          %178 = vst [vmem:[%s88 + $0x160] sm:$0xff] %v177
          %v179 = vld [vmem:[%s87 + $0x168] sm:$0xff]
          %180 = vst [vmem:[%s88 + $0x168] sm:$0xff] %v179
          %v181 = vld [vmem:[%s87 + $0x170] sm:$0xff]
          %182 = vst [vmem:[%s88 + $0x170] sm:$0xff] %v181
          %v183 = vld [vmem:[%s87 + $0x178] sm:$0xff]
          %184 = vst [vmem:[%s88 + $0x178] sm:$0xff] %v183
          %v185 = vld [vmem:[%s87 + $0x180] sm:$0xff]
          %186 = vst [vmem:[%s88 + $0x180] sm:$0xff] %v185
          %v187 = vld [vmem:[%s87 + $0x188] sm:$0xff]
          %188 = vst [vmem:[%s88 + $0x188] sm:$0xff] %v187
          %v189 = vld [vmem:[%s87 + $0x190] sm:$0xff]
          %190 = vst [vmem:[%s88 + $0x190] sm:$0xff] %v189
          %v191 = vld [vmem:[%s87 + $0x198] sm:$0xff]
          %192 = vst [vmem:[%s88 + $0x198] sm:$0xff] %v191
          %v193 = vld [vmem:[%s87 + $0x1a0] sm:$0xff]
          %194 = vst [vmem:[%s88 + $0x1a0] sm:$0xff] %v193
          %v195 = vld [vmem:[%s87 + $0x1a8] sm:$0xff]
          %196 = vst [vmem:[%s88 + $0x1a8] sm:$0xff] %v195
          %v197 = vld [vmem:[%s87 + $0x1b0] sm:$0xff]
          %198 = vst [vmem:[%s88 + $0x1b0] sm:$0xff] %v197
          %v199 = vld [vmem:[%s87 + $0x1b8] sm:$0xff]
          %200 = vst [vmem:[%s88 + $0x1b8] sm:$0xff] %v199
          %v201 = vld [vmem:[%s87 + $0x1c0] sm:$0xff]
          %202 = vst [vmem:[%s88 + $0x1c0] sm:$0xff] %v201
          %v203 = vld [vmem:[%s87 + $0x1c8] sm:$0xff]
          %204 = vst [vmem:[%s88 + $0x1c8] sm:$0xff] %v203
          %v205 = vld [vmem:[%s87 + $0x1d0] sm:$0xff]
          %206 = vst [vmem:[%s88 + $0x1d0] sm:$0xff] %v205
          %v207 = vld [vmem:[%s87 + $0x1d8] sm:$0xff]
          %208 = vst [vmem:[%s88 + $0x1d8] sm:$0xff] %v207
          %v209 = vld [vmem:[%s87 + $0x1e0] sm:$0xff]
          %210 = vst [vmem:[%s88 + $0x1e0] sm:$0xff] %v209
          %v211 = vld [vmem:[%s87 + $0x1e8] sm:$0xff]
          %212 = vst [vmem:[%s88 + $0x1e8] sm:$0xff] %v211
          %v213 = vld [vmem:[%s87 + $0x1f0] sm:$0xff]
          %214 = vst [vmem:[%s88 + $0x1f0] sm:$0xff] %v213
          %v215 = vld [vmem:[%s87 + $0x1f8] sm:$0xff]
          %216 = vst [vmem:[%s88 + $0x1f8] sm:$0xff] %v215
          %v217 = vld [vmem:[%s87 + $0x200] sm:$0xff]
          %218 = vst [vmem:[%s88 + $0x200] sm:$0xff] %v217
          %v219 = vld [vmem:[%s87 + $0x208] sm:$0xff]
          %220 = vst [vmem:[%s88 + $0x208] sm:$0xff] %v219
          %v221 = vld [vmem:[%s87 + $0x210] sm:$0xff]
          %222 = vst [vmem:[%s88 + $0x210] sm:$0xff] %v221
          %v223 = vld [vmem:[%s87 + $0x218] sm:$0xff]
          %224 = vst [vmem:[%s88 + $0x218] sm:$0xff] %v223
          %v225 = vld [vmem:[%s87 + $0x220] sm:$0xff]
          %226 = vst [vmem:[%s88 + $0x220] sm:$0xff] %v225
          %v227 = vld [vmem:[%s87 + $0x228] sm:$0xff]
          %228 = vst [vmem:[%s88 + $0x228] sm:$0xff] %v227
          %v229 = vld [vmem:[%s87 + $0x230] sm:$0xff]
          %230 = vst [vmem:[%s88 + $0x230] sm:$0xff] %v229
          %v231 = vld [vmem:[%s87 + $0x238] sm:$0xff]
          %232 = vst [vmem:[%s88 + $0x238] sm:$0xff] %v231
          %v233 = vld [vmem:[%s87 + $0x240] sm:$0xff]
          %234 = vst [vmem:[%s88 + $0x240] sm:$0xff] %v233
          %v235 = vld [vmem:[%s87 + $0x248] sm:$0xff]
          %236 = vst [vmem:[%s88 + $0x248] sm:$0xff] %v235
          %v237 = vld [vmem:[%s87 + $0x250] sm:$0xff]
          %238 = vst [vmem:[%s88 + $0x250] sm:$0xff] %v237
          %v239 = vld [vmem:[%s87 + $0x258] sm:$0xff]
          %240 = vst [vmem:[%s88 + $0x258] sm:$0xff] %v239
          %v241 = vld [vmem:[%s87 + $0x260] sm:$0xff]
          %242 = vst [vmem:[%s88 + $0x260] sm:$0xff] %v241
          %v243 = vld [vmem:[%s87 + $0x268] sm:$0xff]
          %244 = vst [vmem:[%s88 + $0x268] sm:$0xff] %v243
          %v245 = vld [vmem:[%s87 + $0x270] sm:$0xff]
          %246 = vst [vmem:[%s88 + $0x270] sm:$0xff] %v245
          %v247 = vld [vmem:[%s87 + $0x278] sm:$0xff]
          %248 = vst [vmem:[%s88 + $0x278] sm:$0xff] %v247
          %v249 = vld [vmem:[%s87 + $0x280] sm:$0xff]
          %250 = vst [vmem:[%s88 + $0x280] sm:$0xff] %v249
          %v251 = vld [vmem:[%s87 + $0x288] sm:$0xff]
          %252 = vst [vmem:[%s88 + $0x288] sm:$0xff] %v251
          %v253 = vld [vmem:[%s87 + $0x290] sm:$0xff]
          %254 = vst [vmem:[%s88 + $0x290] sm:$0xff] %v253
          %v255 = vld [vmem:[%s87 + $0x298] sm:$0xff]
          %256 = vst [vmem:[%s88 + $0x298] sm:$0xff] %v255
          %v257 = vld [vmem:[%s87 + $0x2a0] sm:$0xff]
          %258 = vst [vmem:[%s88 + $0x2a0] sm:$0xff] %v257
          %v259 = vld [vmem:[%s87 + $0x2a8] sm:$0xff]
          %260 = vst [vmem:[%s88 + $0x2a8] sm:$0xff] %v259
          %v261 = vld [vmem:[%s87 + $0x2b0] sm:$0xff]
          %262 = vst [vmem:[%s88 + $0x2b0] sm:$0xff] %v261
          %v263 = vld [vmem:[%s87 + $0x2b8] sm:$0xff]
          %264 = vst [vmem:[%s88 + $0x2b8] sm:$0xff] %v263
          %v265 = vld [vmem:[%s87 + $0x2c0] sm:$0xff]
          %266 = vst [vmem:[%s88 + $0x2c0] sm:$0xff] %v265
          %v267 = vld [vmem:[%s87 + $0x2c8] sm:$0xff]
          %268 = vst [vmem:[%s88 + $0x2c8] sm:$0xff] %v267
          %v269 = vld [vmem:[%s87 + $0x2d0] sm:$0xff]
          %270 = vst [vmem:[%s88 + $0x2d0] sm:$0xff] %v269
          %v271 = vld [vmem:[%s87 + $0x2d8] sm:$0xff]
          %272 = vst [vmem:[%s88 + $0x2d8] sm:$0xff] %v271
          %v273 = vld [vmem:[%s87 + $0x2e0] sm:$0xff]
          %274 = vst [vmem:[%s88 + $0x2e0] sm:$0xff] %v273
          %v275 = vld [vmem:[%s87 + $0x2e8] sm:$0xff]
          %276 = vst [vmem:[%s88 + $0x2e8] sm:$0xff] %v275
          %v277 = vld [vmem:[%s87 + $0x2f0] sm:$0xff]
          %278 = vst [vmem:[%s88 + $0x2f0] sm:$0xff] %v277
          %v279 = vld [vmem:[%s87 + $0x2f8] sm:$0xff]
          %280 = vst [vmem:[%s88 + $0x2f8] sm:$0xff] %v279
          %v281 = vld [vmem:[%s87 + $0x300] sm:$0xff]
          %282 = vst [vmem:[%s88 + $0x300] sm:$0xff] %v281
          %v283 = vld [vmem:[%s87 + $0x308] sm:$0xff]
          %284 = vst [vmem:[%s88 + $0x308] sm:$0xff] %v283
          %v285 = vld [vmem:[%s87 + $0x310] sm:$0xff]
          %286 = vst [vmem:[%s88 + $0x310] sm:$0xff] %v285
          %v287 = vld [vmem:[%s87 + $0x318] sm:$0xff]
          %288 = vst [vmem:[%s88 + $0x318] sm:$0xff] %v287
          %v289 = vld [vmem:[%s87 + $0x320] sm:$0xff]
          %290 = vst [vmem:[%s88 + $0x320] sm:$0xff] %v289
          %v291 = vld [vmem:[%s87 + $0x328] sm:$0xff]
          %292 = vst [vmem:[%s88 + $0x328] sm:$0xff] %v291
          %v293 = vld [vmem:[%s87 + $0x330] sm:$0xff]
          %294 = vst [vmem:[%s88 + $0x330] sm:$0xff] %v293
          %v295 = vld [vmem:[%s87 + $0x338] sm:$0xff]
          %296 = vst [vmem:[%s88 + $0x338] sm:$0xff] %v295
        $region85: #{pearl_dqn_forward.1} parent=79 // loop_footer
          %s86 = sadd.s32 1, %s82
        $region86: #{pearl_dqn_forward.1} parent=79 // loop_footer_branch
          %81 = sbr.rel target = $region82
        $region87: #{pearl_dqn_forward.1} parent=79 // loop_exit
          _
      $region80: #{pearl_dqn_forward.1} parent=64 // pred_fallthru
        _
      %p297 = pneg %p77
      // Predicated region
      $region88: #{pearl_dqn_forward.1} parent=64 // pred_check
        _
      $region89: #{pearl_dqn_forward.1} parent=64 // pred_check_branch
        %299 = sbr.rel (%p77) target = $region91
      $region90: #{pearl_dqn_forward.1} parent=64 // pred_region
        %s300 = sand.u32 832, 7
      $region91: #{pearl_dqn_forward.1} parent=64 // pred_fallthru
        _
    $region65: #{pearl_dqn_forward.1} parent=1 // pred_fallthru
      _
    // Predicated region
    $region66: #{pearl_dqn_forward.1} parent=1 // pred_check
      %p61 = pneg %p57
    $region67: #{pearl_dqn_forward.1} parent=1 // pred_check_branch
      %63 = sbr.rel (%p61) target = $region69
    $region68: #{pearl_dqn_forward.1} parent=1 // pred_region
      %s64 = sshll.u32 1, 832
      %s65 = ssub.s32 %s64, 1
      loop: start=0, step=1, limit=1
      $region70: #{pearl_dqn_forward.1} parent=68 // loop_pre_header
        _
      $region71: #{pearl_dqn_forward.1} parent=68 // loop_header
        %s67 = sphi 0, %s71
        %p68 = scmp.ge.s32.totalorder %s67, 1
        %s72 = sphi %s5, %s5
        %s73 = sphi [#allocation2], [#allocation2]
      $region72: #{pearl_dqn_forward.1} parent=68 // loop_header_branch
        %70 = sbr.rel (%p68) target = $region76
      $region73: #{pearl_dqn_forward.1} parent=68 // loop_body
        %v74 = vld [vmem:[%s72] sm:%s65]
        %75 = vst [vmem:[%s73] sm:%s65] %v74
      $region74: #{pearl_dqn_forward.1} parent=68 // loop_footer
        %s71 = sadd.s32 1, %s67
      $region75: #{pearl_dqn_forward.1} parent=68 // loop_footer_branch
        %66 = sbr.rel target = $region71
      $region76: #{pearl_dqn_forward.1} parent=68 // loop_exit
        _
    $region69: #{pearl_dqn_forward.1} parent=1 // pred_fallthru
      _
    // Predicated region
    $region92: #{pearl_dqn_forward.1} parent=1 // pred_check
      _
    $region93: #{pearl_dqn_forward.1} parent=1 // pred_check_branch
      %303 = sbr.rel (0) target = $region95
    $region94: #{pearl_dqn_forward.1} parent=1 // pred_region
      %304 = vsyncadd [#allocation6], 13312
    $region95: #{pearl_dqn_forward.1} parent=1 // pred_fallthru
      _
    %s305 = scalar_lea.sflag [#allocation6], 1
    %p307 = scmp.lt.u32.totalorder 640, 8
    %p308 = pneg %p307
    // Predicated region
    $region96: #{pearl_dqn_forward.1} parent=1 // pred_check
      _
    $region97: #{pearl_dqn_forward.1} parent=1 // pred_check_branch
      %310 = sbr.rel (%p307) target = $region99
    $region98: #{pearl_dqn_forward.1} parent=1 // pred_region
      %s326 = sand.u32 640, 7
      %p327 = scmp.eq.s32.totalorder %s326, 0
      // Predicated region
      $region111: #{pearl_dqn_forward.1} parent=98 // pred_check
        %p328 = pneg %p327
      $region112: #{pearl_dqn_forward.1} parent=98 // pred_check_branch
        %330 = sbr.rel (%p328) target = $region114
      $region113: #{pearl_dqn_forward.1} parent=98 // pred_region
        loop: start=0, step=1, limit=1
        $region115: #{pearl_dqn_forward.1} parent=113 // loop_pre_header
          _
        $region116: #{pearl_dqn_forward.1} parent=113 // loop_header
          %s332 = sphi 0, %s336
          %p333 = scmp.ge.s32.totalorder %s332, 1
          %s337 = sphi %s7, %s7
          %s338 = sphi [#allocation3], [#allocation3]
        $region117: #{pearl_dqn_forward.1} parent=113 // loop_header_branch
          %335 = sbr.rel (%p333) target = $region121
        $region118: #{pearl_dqn_forward.1} parent=113 // loop_body
          %v339 = vld [vmem:[%s337] sm:$0xff]
          %340 = vst [vmem:[%s338] sm:$0xff] %v339
          %v341 = vld [vmem:[%s337 + $0x8] sm:$0xff]
          %342 = vst [vmem:[%s338 + $0x8] sm:$0xff] %v341
          %v343 = vld [vmem:[%s337 + $0x10] sm:$0xff]
          %344 = vst [vmem:[%s338 + $0x10] sm:$0xff] %v343
          %v345 = vld [vmem:[%s337 + $0x18] sm:$0xff]
          %346 = vst [vmem:[%s338 + $0x18] sm:$0xff] %v345
          %v347 = vld [vmem:[%s337 + $0x20] sm:$0xff]
          %348 = vst [vmem:[%s338 + $0x20] sm:$0xff] %v347
          %v349 = vld [vmem:[%s337 + $0x28] sm:$0xff]
          %350 = vst [vmem:[%s338 + $0x28] sm:$0xff] %v349
          %v351 = vld [vmem:[%s337 + $0x30] sm:$0xff]
          %352 = vst [vmem:[%s338 + $0x30] sm:$0xff] %v351
          %v353 = vld [vmem:[%s337 + $0x38] sm:$0xff]
          %354 = vst [vmem:[%s338 + $0x38] sm:$0xff] %v353
          %v355 = vld [vmem:[%s337 + $0x40] sm:$0xff]
          %356 = vst [vmem:[%s338 + $0x40] sm:$0xff] %v355
          %v357 = vld [vmem:[%s337 + $0x48] sm:$0xff]
          %358 = vst [vmem:[%s338 + $0x48] sm:$0xff] %v357
          %v359 = vld [vmem:[%s337 + $0x50] sm:$0xff]
          %360 = vst [vmem:[%s338 + $0x50] sm:$0xff] %v359
          %v361 = vld [vmem:[%s337 + $0x58] sm:$0xff]
          %362 = vst [vmem:[%s338 + $0x58] sm:$0xff] %v361
          %v363 = vld [vmem:[%s337 + $0x60] sm:$0xff]
          %364 = vst [vmem:[%s338 + $0x60] sm:$0xff] %v363
          %v365 = vld [vmem:[%s337 + $0x68] sm:$0xff]
          %366 = vst [vmem:[%s338 + $0x68] sm:$0xff] %v365
          %v367 = vld [vmem:[%s337 + $0x70] sm:$0xff]
          %368 = vst [vmem:[%s338 + $0x70] sm:$0xff] %v367
          %v369 = vld [vmem:[%s337 + $0x78] sm:$0xff]
          %370 = vst [vmem:[%s338 + $0x78] sm:$0xff] %v369
          %v371 = vld [vmem:[%s337 + $0x80] sm:$0xff]
          %372 = vst [vmem:[%s338 + $0x80] sm:$0xff] %v371
          %v373 = vld [vmem:[%s337 + $0x88] sm:$0xff]
          %374 = vst [vmem:[%s338 + $0x88] sm:$0xff] %v373
          %v375 = vld [vmem:[%s337 + $0x90] sm:$0xff]
          %376 = vst [vmem:[%s338 + $0x90] sm:$0xff] %v375
          %v377 = vld [vmem:[%s337 + $0x98] sm:$0xff]
          %378 = vst [vmem:[%s338 + $0x98] sm:$0xff] %v377
          %v379 = vld [vmem:[%s337 + $0xa0] sm:$0xff]
          %380 = vst [vmem:[%s338 + $0xa0] sm:$0xff] %v379
          %v381 = vld [vmem:[%s337 + $0xa8] sm:$0xff]
          %382 = vst [vmem:[%s338 + $0xa8] sm:$0xff] %v381
          %v383 = vld [vmem:[%s337 + $0xb0] sm:$0xff]
          %384 = vst [vmem:[%s338 + $0xb0] sm:$0xff] %v383
          %v385 = vld [vmem:[%s337 + $0xb8] sm:$0xff]
          %386 = vst [vmem:[%s338 + $0xb8] sm:$0xff] %v385
          %v387 = vld [vmem:[%s337 + $0xc0] sm:$0xff]
          %388 = vst [vmem:[%s338 + $0xc0] sm:$0xff] %v387
          %v389 = vld [vmem:[%s337 + $0xc8] sm:$0xff]
          %390 = vst [vmem:[%s338 + $0xc8] sm:$0xff] %v389
          %v391 = vld [vmem:[%s337 + $0xd0] sm:$0xff]
          %392 = vst [vmem:[%s338 + $0xd0] sm:$0xff] %v391
          %v393 = vld [vmem:[%s337 + $0xd8] sm:$0xff]
          %394 = vst [vmem:[%s338 + $0xd8] sm:$0xff] %v393
          %v395 = vld [vmem:[%s337 + $0xe0] sm:$0xff]
          %396 = vst [vmem:[%s338 + $0xe0] sm:$0xff] %v395
          %v397 = vld [vmem:[%s337 + $0xe8] sm:$0xff]
          %398 = vst [vmem:[%s338 + $0xe8] sm:$0xff] %v397
          %v399 = vld [vmem:[%s337 + $0xf0] sm:$0xff]
          %400 = vst [vmem:[%s338 + $0xf0] sm:$0xff] %v399
          %v401 = vld [vmem:[%s337 + $0xf8] sm:$0xff]
          %402 = vst [vmem:[%s338 + $0xf8] sm:$0xff] %v401
          %v403 = vld [vmem:[%s337 + $0x100] sm:$0xff]
          %404 = vst [vmem:[%s338 + $0x100] sm:$0xff] %v403
          %v405 = vld [vmem:[%s337 + $0x108] sm:$0xff]
          %406 = vst [vmem:[%s338 + $0x108] sm:$0xff] %v405
          %v407 = vld [vmem:[%s337 + $0x110] sm:$0xff]
          %408 = vst [vmem:[%s338 + $0x110] sm:$0xff] %v407
          %v409 = vld [vmem:[%s337 + $0x118] sm:$0xff]
          %410 = vst [vmem:[%s338 + $0x118] sm:$0xff] %v409
          %v411 = vld [vmem:[%s337 + $0x120] sm:$0xff]
          %412 = vst [vmem:[%s338 + $0x120] sm:$0xff] %v411
          %v413 = vld [vmem:[%s337 + $0x128] sm:$0xff]
          %414 = vst [vmem:[%s338 + $0x128] sm:$0xff] %v413
          %v415 = vld [vmem:[%s337 + $0x130] sm:$0xff]
          %416 = vst [vmem:[%s338 + $0x130] sm:$0xff] %v415
          %v417 = vld [vmem:[%s337 + $0x138] sm:$0xff]
          %418 = vst [vmem:[%s338 + $0x138] sm:$0xff] %v417
          %v419 = vld [vmem:[%s337 + $0x140] sm:$0xff]
          %420 = vst [vmem:[%s338 + $0x140] sm:$0xff] %v419
          %v421 = vld [vmem:[%s337 + $0x148] sm:$0xff]
          %422 = vst [vmem:[%s338 + $0x148] sm:$0xff] %v421
          %v423 = vld [vmem:[%s337 + $0x150] sm:$0xff]
          %424 = vst [vmem:[%s338 + $0x150] sm:$0xff] %v423
          %v425 = vld [vmem:[%s337 + $0x158] sm:$0xff]
          %426 = vst [vmem:[%s338 + $0x158] sm:$0xff] %v425
          %v427 = vld [vmem:[%s337 + $0x160] sm:$0xff]
          %428 = vst [vmem:[%s338 + $0x160] sm:$0xff] %v427
          %v429 = vld [vmem:[%s337 + $0x168] sm:$0xff]
          %430 = vst [vmem:[%s338 + $0x168] sm:$0xff] %v429
          %v431 = vld [vmem:[%s337 + $0x170] sm:$0xff]
          %432 = vst [vmem:[%s338 + $0x170] sm:$0xff] %v431
          %v433 = vld [vmem:[%s337 + $0x178] sm:$0xff]
          %434 = vst [vmem:[%s338 + $0x178] sm:$0xff] %v433
          %v435 = vld [vmem:[%s337 + $0x180] sm:$0xff]
          %436 = vst [vmem:[%s338 + $0x180] sm:$0xff] %v435
          %v437 = vld [vmem:[%s337 + $0x188] sm:$0xff]
          %438 = vst [vmem:[%s338 + $0x188] sm:$0xff] %v437
          %v439 = vld [vmem:[%s337 + $0x190] sm:$0xff]
          %440 = vst [vmem:[%s338 + $0x190] sm:$0xff] %v439
          %v441 = vld [vmem:[%s337 + $0x198] sm:$0xff]
          %442 = vst [vmem:[%s338 + $0x198] sm:$0xff] %v441
          %v443 = vld [vmem:[%s337 + $0x1a0] sm:$0xff]
          %444 = vst [vmem:[%s338 + $0x1a0] sm:$0xff] %v443
          %v445 = vld [vmem:[%s337 + $0x1a8] sm:$0xff]
          %446 = vst [vmem:[%s338 + $0x1a8] sm:$0xff] %v445
          %v447 = vld [vmem:[%s337 + $0x1b0] sm:$0xff]
          %448 = vst [vmem:[%s338 + $0x1b0] sm:$0xff] %v447
          %v449 = vld [vmem:[%s337 + $0x1b8] sm:$0xff]
          %450 = vst [vmem:[%s338 + $0x1b8] sm:$0xff] %v449
          %v451 = vld [vmem:[%s337 + $0x1c0] sm:$0xff]
          %452 = vst [vmem:[%s338 + $0x1c0] sm:$0xff] %v451
          %v453 = vld [vmem:[%s337 + $0x1c8] sm:$0xff]
          %454 = vst [vmem:[%s338 + $0x1c8] sm:$0xff] %v453
          %v455 = vld [vmem:[%s337 + $0x1d0] sm:$0xff]
          %456 = vst [vmem:[%s338 + $0x1d0] sm:$0xff] %v455
          %v457 = vld [vmem:[%s337 + $0x1d8] sm:$0xff]
          %458 = vst [vmem:[%s338 + $0x1d8] sm:$0xff] %v457
          %v459 = vld [vmem:[%s337 + $0x1e0] sm:$0xff]
          %460 = vst [vmem:[%s338 + $0x1e0] sm:$0xff] %v459
          %v461 = vld [vmem:[%s337 + $0x1e8] sm:$0xff]
          %462 = vst [vmem:[%s338 + $0x1e8] sm:$0xff] %v461
          %v463 = vld [vmem:[%s337 + $0x1f0] sm:$0xff]
          %464 = vst [vmem:[%s338 + $0x1f0] sm:$0xff] %v463
          %v465 = vld [vmem:[%s337 + $0x1f8] sm:$0xff]
          %466 = vst [vmem:[%s338 + $0x1f8] sm:$0xff] %v465
          %v467 = vld [vmem:[%s337 + $0x200] sm:$0xff]
          %468 = vst [vmem:[%s338 + $0x200] sm:$0xff] %v467
          %v469 = vld [vmem:[%s337 + $0x208] sm:$0xff]
          %470 = vst [vmem:[%s338 + $0x208] sm:$0xff] %v469
          %v471 = vld [vmem:[%s337 + $0x210] sm:$0xff]
          %472 = vst [vmem:[%s338 + $0x210] sm:$0xff] %v471
          %v473 = vld [vmem:[%s337 + $0x218] sm:$0xff]
          %474 = vst [vmem:[%s338 + $0x218] sm:$0xff] %v473
          %v475 = vld [vmem:[%s337 + $0x220] sm:$0xff]
          %476 = vst [vmem:[%s338 + $0x220] sm:$0xff] %v475
          %v477 = vld [vmem:[%s337 + $0x228] sm:$0xff]
          %478 = vst [vmem:[%s338 + $0x228] sm:$0xff] %v477
          %v479 = vld [vmem:[%s337 + $0x230] sm:$0xff]
          %480 = vst [vmem:[%s338 + $0x230] sm:$0xff] %v479
          %v481 = vld [vmem:[%s337 + $0x238] sm:$0xff]
          %482 = vst [vmem:[%s338 + $0x238] sm:$0xff] %v481
          %v483 = vld [vmem:[%s337 + $0x240] sm:$0xff]
          %484 = vst [vmem:[%s338 + $0x240] sm:$0xff] %v483
          %v485 = vld [vmem:[%s337 + $0x248] sm:$0xff]
          %486 = vst [vmem:[%s338 + $0x248] sm:$0xff] %v485
          %v487 = vld [vmem:[%s337 + $0x250] sm:$0xff]
          %488 = vst [vmem:[%s338 + $0x250] sm:$0xff] %v487
          %v489 = vld [vmem:[%s337 + $0x258] sm:$0xff]
          %490 = vst [vmem:[%s338 + $0x258] sm:$0xff] %v489
          %v491 = vld [vmem:[%s337 + $0x260] sm:$0xff]
          %492 = vst [vmem:[%s338 + $0x260] sm:$0xff] %v491
          %v493 = vld [vmem:[%s337 + $0x268] sm:$0xff]
          %494 = vst [vmem:[%s338 + $0x268] sm:$0xff] %v493
          %v495 = vld [vmem:[%s337 + $0x270] sm:$0xff]
          %496 = vst [vmem:[%s338 + $0x270] sm:$0xff] %v495
          %v497 = vld [vmem:[%s337 + $0x278] sm:$0xff]
          %498 = vst [vmem:[%s338 + $0x278] sm:$0xff] %v497
        $region119: #{pearl_dqn_forward.1} parent=113 // loop_footer
          %s336 = sadd.s32 1, %s332
        $region120: #{pearl_dqn_forward.1} parent=113 // loop_footer_branch
          %331 = sbr.rel target = $region116
        $region121: #{pearl_dqn_forward.1} parent=113 // loop_exit
          _
      $region114: #{pearl_dqn_forward.1} parent=98 // pred_fallthru
        _
      %p499 = pneg %p327
      // Predicated region
      $region122: #{pearl_dqn_forward.1} parent=98 // pred_check
        _
      $region123: #{pearl_dqn_forward.1} parent=98 // pred_check_branch
        %501 = sbr.rel (%p327) target = $region125
      $region124: #{pearl_dqn_forward.1} parent=98 // pred_region
        %s502 = sand.u32 640, 7
      $region125: #{pearl_dqn_forward.1} parent=98 // pred_fallthru
        _
    $region99: #{pearl_dqn_forward.1} parent=1 // pred_fallthru
      _
    // Predicated region
    $region100: #{pearl_dqn_forward.1} parent=1 // pred_check
      %p311 = pneg %p307
    $region101: #{pearl_dqn_forward.1} parent=1 // pred_check_branch
      %313 = sbr.rel (%p311) target = $region103
    $region102: #{pearl_dqn_forward.1} parent=1 // pred_region
      %s314 = sshll.u32 1, 640
      %s315 = ssub.s32 %s314, 1
      loop: start=0, step=1, limit=1
      $region104: #{pearl_dqn_forward.1} parent=102 // loop_pre_header
        _
      $region105: #{pearl_dqn_forward.1} parent=102 // loop_header
        %s317 = sphi 0, %s321
        %p318 = scmp.ge.s32.totalorder %s317, 1
        %s322 = sphi %s7, %s7
        %s323 = sphi [#allocation3], [#allocation3]
      $region106: #{pearl_dqn_forward.1} parent=102 // loop_header_branch
        %320 = sbr.rel (%p318) target = $region110
      $region107: #{pearl_dqn_forward.1} parent=102 // loop_body
        %v324 = vld [vmem:[%s322] sm:%s315]
        %325 = vst [vmem:[%s323] sm:%s315] %v324
      $region108: #{pearl_dqn_forward.1} parent=102 // loop_footer
        %s321 = sadd.s32 1, %s317
      $region109: #{pearl_dqn_forward.1} parent=102 // loop_footer_branch
        %316 = sbr.rel target = $region105
      $region110: #{pearl_dqn_forward.1} parent=102 // loop_exit
        _
    $region103: #{pearl_dqn_forward.1} parent=1 // pred_fallthru
      _
    // Predicated region
    $region126: #{pearl_dqn_forward.1} parent=1 // pred_check
      _
    $region127: #{pearl_dqn_forward.1} parent=1 // pred_check_branch
      %505 = sbr.rel (0) target = $region129
    $region128: #{pearl_dqn_forward.1} parent=1 // pred_region
      %506 = vsyncadd %s305, 10240
    $region129: #{pearl_dqn_forward.1} parent=1 // pred_fallthru
      _
    %v507 = vld [vmem:[%s0] sm:$0xff]
    %v508 = vld [vmem:[%s0 + $0x8] sm:$0xff]
    %v509 = vld [vmem:[%s0 + $0x10] sm:$0xff]
    %v510 = vld [vmem:[%s0 + $0x18] sm:$0xff]
    %v511 = vld [vmem:[%s0 + $0x20] sm:$0xff]
    %v512 = vld [vmem:[%s0 + $0x28] sm:$0xff]
    %v513 = vld [vmem:[%s0 + $0x30] sm:$0xff]
    %v514 = vld [vmem:[%s0 + $0x38] sm:$0xff]
    %v515 = vld [vmem:[%s0 + $0x40] sm:$0xff]
    %v516 = vld [vmem:[%s0 + $0x48] sm:$0xff]
    %v517 = vld [vmem:[%s0 + $0x50] sm:$0xff]
    %v518 = vld [vmem:[%s0 + $0x58] sm:$0xff]
    %v519 = vld [vmem:[%s0 + $0x60] sm:$0xff]
    %v520 = vld [vmem:[%s0 + $0x68] sm:$0xff]
    %v521 = vld [vmem:[%s0 + $0x70] sm:$0xff]
    %v522 = vld [vmem:[%s0 + $0x78] sm:$0xff]
    %v523 = vld [vmem:[%s0 + $0x80] sm:$0xff]
    %v524 = vld [vmem:[%s0 + $0x88] sm:$0xff]
    %v525 = vld [vmem:[%s0 + $0x90] sm:$0xff]
    %v526 = vld [vmem:[%s0 + $0x98] sm:$0xff]
    %v527 = vld [vmem:[%s0 + $0xa0] sm:$0xff]
    %v528 = vld [vmem:[%s0 + $0xa8] sm:$0xff]
    %v529 = vld [vmem:[%s0 + $0xb0] sm:$0xff]
    %v530 = vld [vmem:[%s0 + $0xb8] sm:$0xff]
    %v531 = vld [vmem:[%s0 + $0xc0] sm:$0xff]
    %v532 = vld [vmem:[%s0 + $0xc8] sm:$0xff]
    %v533 = vld [vmem:[%s0 + $0xd0] sm:$0xff]
    %v534 = vld [vmem:[%s0 + $0xd8] sm:$0xff]
    %v535 = vld [vmem:[%s0 + $0xe0] sm:$0xff]
    %v536 = vld [vmem:[%s0 + $0xe8] sm:$0xff]
    %v537 = vld [vmem:[%s0 + $0xf0] sm:$0xff]
    %v538 = vld [vmem:[%s0 + $0xf8] sm:$0xff]
    %v539 = vld [vmem:[%s0 + $0x100] sm:$0xff]
    %v540 = vld [vmem:[%s0 + $0x108] sm:$0xff]
    %v541 = vld [vmem:[%s0 + $0x110] sm:$0xff]
    %v542 = vld [vmem:[%s0 + $0x118] sm:$0xff]
    %v543 = vld [vmem:[%s0 + $0x120] sm:$0xff]
    %v544 = vld [vmem:[%s0 + $0x128] sm:$0xff]
    %v545 = vld [vmem:[%s0 + $0x130] sm:$0xff]
    %v546 = vld [vmem:[%s0 + $0x138] sm:$0xff]
    %v547 = vld [vmem:[%s0 + $0x140] sm:$0xff]
    %v548 = vld [vmem:[%s0 + $0x148] sm:$0xff]
    %v549 = vld [vmem:[%s0 + $0x150] sm:$0xff]
    %v550 = vld [vmem:[%s0 + $0x158] sm:$0xff]
    %v551 = vld [vmem:[%s0 + $0x160] sm:$0xff]
    %v552 = vld [vmem:[%s0 + $0x168] sm:$0xff]
    %v553 = vld [vmem:[%s0 + $0x170] sm:$0xff]
    %v554 = vld [vmem:[%s0 + $0x178] sm:$0xff]
    %v555 = vld [vmem:[%s0 + $0x180] sm:$0xff]
    %v556 = vld [vmem:[%s0 + $0x188] sm:$0xff]
    %v557 = vld [vmem:[%s0 + $0x190] sm:$0xff]
    %v558 = vld [vmem:[%s0 + $0x198] sm:$0xff]
    %v559 = vld [vmem:[%s0 + $0x1a0] sm:$0xff]
    %v560 = vld [vmem:[%s0 + $0x1a8] sm:$0xff]
    %v561 = vld [vmem:[%s0 + $0x1b0] sm:$0xff]
    %v562 = vld [vmem:[%s0 + $0x1b8] sm:$0xff]
    %v563 = vld [vmem:[%s0 + $0x1c0] sm:$0xff]
    %v564 = vld [vmem:[%s0 + $0x1c8] sm:$0xff]
    %v565 = vld [vmem:[%s0 + $0x1d0] sm:$0xff]
    %v566 = vld [vmem:[%s0 + $0x1d8] sm:$0xff]
    %v567 = vld [vmem:[%s0 + $0x1e0] sm:$0xff]
    %v568 = vld [vmem:[%s0 + $0x1e8] sm:$0xff]
    %v569 = vld [vmem:[%s0 + $0x1f0] sm:$0xff]
    %v570 = vld [vmem:[%s0 + $0x1f8] sm:$0xff]
    %v571 = vld [vmem:[%s0 + $0x200] sm:$0xff]
    %v572 = vld [vmem:[%s0 + $0x208] sm:$0xff]
    %v573 = vld [vmem:[%s0 + $0x210] sm:$0xff]
    %v574 = vld [vmem:[%s0 + $0x218] sm:$0xff]
    %v575 = vld [vmem:[%s0 + $0x220] sm:$0xff]
    %v576 = vld [vmem:[%s0 + $0x228] sm:$0xff]
    %v577 = vld [vmem:[%s0 + $0x230] sm:$0xff]
    %v578 = vld [vmem:[%s0 + $0x238] sm:$0xff]
    %v579 = vld [vmem:[%s0 + $0x240] sm:$0xff]
    %v580 = vld [vmem:[%s0 + $0x248] sm:$0xff]
    %v581 = vld [vmem:[%s0 + $0x250] sm:$0xff]
    %v582 = vld [vmem:[%s0 + $0x258] sm:$0xff]
    %v583 = vld [vmem:[%s0 + $0x260] sm:$0xff]
    %v584 = vld [vmem:[%s0 + $0x268] sm:$0xff]
    %v585 = vld [vmem:[%s0 + $0x270] sm:$0xff]
    %v586 = vld [vmem:[%s0 + $0x278] sm:$0xff]
    %v587 = vld [vmem:[%s0 + $0x280] sm:$0xff]
    %v588 = vld [vmem:[%s0 + $0x288] sm:$0xff]
    %v589 = vld [vmem:[%s0 + $0x290] sm:$0xff]
    %v590 = vld [vmem:[%s0 + $0x298] sm:$0xff]
    %v591 = vld [vmem:[%s0 + $0x2a0] sm:$0xff]
    %v592 = vld [vmem:[%s0 + $0x2a8] sm:$0xff]
    %v593 = vld [vmem:[%s0 + $0x2b0] sm:$0xff]
    %v594 = vld [vmem:[%s0 + $0x2b8] sm:$0xff]
    %v595 = vld [vmem:[%s0 + $0x2c0] sm:$0xff]
    %v596 = vld [vmem:[%s0 + $0x2c8] sm:$0xff]
    %v597 = vld [vmem:[%s0 + $0x2d0] sm:$0xff]
    %v598 = vld [vmem:[%s0 + $0x2d8] sm:$0xff]
    %v599 = vld [vmem:[%s0 + $0x2e0] sm:$0xff]
    %v600 = vld [vmem:[%s0 + $0x2e8] sm:$0xff]
    %v601 = vld [vmem:[%s0 + $0x2f0] sm:$0xff]
    %v602 = vld [vmem:[%s0 + $0x2f8] sm:$0xff]
    %v603 = vld [vmem:[%s0 + $0x300] sm:$0xff]
    %v604 = vld [vmem:[%s0 + $0x308] sm:$0xff]
    %v605 = vld [vmem:[%s0 + $0x310] sm:$0xff]
    %v606 = vld [vmem:[%s0 + $0x318] sm:$0xff]
    %v607 = vld [vmem:[%s0 + $0x320] sm:$0xff]
    %v608 = vld [vmem:[%s0 + $0x328] sm:$0xff]
    %v609 = vld [vmem:[%s0 + $0x330] sm:$0xff]
    %v610 = vld [vmem:[%s0 + $0x338] sm:$0xff]
    %v611 = vld [vmem:[%s0 + $0x340] sm:$0xff]
    %v612 = vld [vmem:[%s0 + $0x348] sm:$0xff]
    %v613 = vld [vmem:[%s0 + $0x350] sm:$0xff]
    %v614 = vld [vmem:[%s0 + $0x358] sm:$0xff]
    %v615 = vld [vmem:[%s0 + $0x360] sm:$0xff]
    %v616 = vld [vmem:[%s0 + $0x368] sm:$0xff]
    %v617 = vld [vmem:[%s0 + $0x370] sm:$0xff]
    %v618 = vld [vmem:[%s0 + $0x378] sm:$0xff]
    %v619 = vld [vmem:[%s0 + $0x380] sm:$0xff]
    %v620 = vld [vmem:[%s0 + $0x388] sm:$0xff]
    %v621 = vld [vmem:[%s0 + $0x390] sm:$0xff]
    %v622 = vld [vmem:[%s0 + $0x398] sm:$0xff]
    %v623 = vld [vmem:[%s0 + $0x3a0] sm:$0xff]
    %v624 = vld [vmem:[%s3] sm:$0xf]
    %v625 = vld [vmem:[%s3 + $0x4] sm:$0xf]
    %v626 = vld [vmem:[%s3 + $0x8] sm:$0xf]
    %v627 = vld [vmem:[%s3 + $0xc] sm:$0xf]
    %v628 = vld [vmem:[%s3 + $0x10] sm:$0xf]
    %v629 = vld [vmem:[%s3 + $0x14] sm:$0xf]
    %v630 = vld [vmem:[%s3 + $0x18] sm:$0xf]
    %v631 = vld [vmem:[%s3 + $0x1c] sm:$0xf]
    %v632 = vld [vmem:[%s3 + $0x20] sm:$0xf]
    %v633 = vld [vmem:[%s3 + $0x24] sm:$0xf]
    %v634 = vld [vmem:[%s3 + $0x28] sm:$0xf]
    %v635 = vld [vmem:[%s3 + $0x2c] sm:$0xf]
    %v636 = vld [vmem:[%s3 + $0x30] sm:$0xf]
    %v637 = vld [vmem:[%s3 + $0x34] sm:$0xf]
    %v638 = vld [vmem:[%s3 + $0x38] sm:$0xf]
    %v639 = vld [vmem:[%s3 + $0x3c] sm:$0xf]
    %v640 = vld [vmem:[%s3 + $0x40] sm:$0xf]
    %v641 = vld [vmem:[%s3 + $0x44] sm:$0xf]
    %v642 = vld [vmem:[%s3 + $0x48] sm:$0xf]
    %v643 = vld [vmem:[%s3 + $0x4c] sm:$0xf]
    %v644 = vld [vmem:[%s3 + $0x50] sm:$0xf]
    %v645 = vld [vmem:[%s3 + $0x54] sm:$0xf]
    %v646 = vld [vmem:[%s3 + $0x58] sm:$0xf]
    %v647 = vld [vmem:[%s3 + $0x5c] sm:$0xf]
    %v648 = vld [vmem:[%s3 + $0x60] sm:$0xf]
    %v649 = vld [vmem:[%s3 + $0x64] sm:$0xf]
    %v650 = vld [vmem:[%s3 + $0x68] sm:$0xf]
    %v651 = vld [vmem:[%s3 + $0x6c] sm:$0xf]
    %v652 = vld [vmem:[%s3 + $0x70] sm:$0xf]
    %v653 = vld [vmem:[%s3 + $0x74] sm:$0xf]
    %v654 = vld [vmem:[%s3 + $0x78] sm:$0xf]
    %v655 = vld [vmem:[%s3 + $0x7c] sm:$0xf]
    %v656 = vld [vmem:[%s4] sm:$0x1]
    %v658 = vlaneseq
    %v659 = vshrl.u32 %v658, 7
    %v660 = vsub.s32 0, %v659
    %v661 = vrot.slane %v656, %v660
    %v780 = vunpack.c.l.b16 %v507
    %v781 = vunpack.c.h.b16 %v507
    %v782 = vunpack.c.l.b16 %v508
    %v783 = vunpack.c.h.b16 %v508
    %v784 = vunpack.c.l.b16 %v509
    %v785 = vunpack.c.h.b16 %v509
    %v786 = vunpack.c.l.b16 %v510
    %v787 = vunpack.c.h.b16 %v510
    %v788 = vunpack.c.l.b16 %v511
    %v789 = vunpack.c.h.b16 %v511
    %v790 = vunpack.c.l.b16 %v512
    %v791 = vunpack.c.h.b16 %v512
    %v792 = vunpack.c.l.b16 %v513
    %v793 = vunpack.c.h.b16 %v513
    %v794 = vunpack.c.l.b16 %v514
    %v795 = vunpack.c.h.b16 %v514
    %v796 = vunpack.c.l.b16 %v515
    %v797 = vunpack.c.h.b16 %v515
    %v798 = vunpack.c.l.b16 %v516
    %v799 = vunpack.c.h.b16 %v516
    %v800 = vunpack.c.l.b16 %v517
    %v801 = vunpack.c.h.b16 %v517
    %v802 = vunpack.c.l.b16 %v518
    %v803 = vunpack.c.h.b16 %v518
    %v804 = vunpack.c.l.b16 %v519
    %v805 = vunpack.c.h.b16 %v519
    %v806 = vunpack.c.l.b16 %v520
    %v807 = vunpack.c.h.b16 %v520
    %v808 = vunpack.c.l.b16 %v521
    %v809 = vunpack.c.h.b16 %v521
    %v810 = vunpack.c.l.b16 %v522
    %v811 = vunpack.c.h.b16 %v522
    %v812 = vunpack.c.l.b16 %v523
    %v813 = vunpack.c.h.b16 %v523
    %v814 = vunpack.c.l.b16 %v524
    %v815 = vunpack.c.h.b16 %v524
    %v816 = vunpack.c.l.b16 %v525
    %v817 = vunpack.c.h.b16 %v525
    %v818 = vunpack.c.l.b16 %v526
    %v819 = vunpack.c.h.b16 %v526
    %v820 = vunpack.c.l.b16 %v527
    %v821 = vunpack.c.h.b16 %v527
    %v822 = vunpack.c.l.b16 %v528
    %v823 = vunpack.c.h.b16 %v528
    %v824 = vunpack.c.l.b16 %v529
    %v825 = vunpack.c.h.b16 %v529
    %v826 = vunpack.c.l.b16 %v530
    %v827 = vunpack.c.h.b16 %v530
    %v828 = vunpack.c.l.b16 %v531
    %v829 = vunpack.c.h.b16 %v531
    %v830 = vunpack.c.l.b16 %v532
    %v831 = vunpack.c.h.b16 %v532
    %v832 = vunpack.c.l.b16 %v533
    %v833 = vunpack.c.h.b16 %v533
    %v834 = vunpack.c.l.b16 %v534
    %v835 = vunpack.c.h.b16 %v534
    %v836 = vunpack.c.l.b16 %v535
    %v837 = vunpack.c.h.b16 %v535
    %v838 = vunpack.c.l.b16 %v536
    %v839 = vunpack.c.h.b16 %v536
    %v840 = vunpack.c.l.b16 %v537
    %v841 = vunpack.c.h.b16 %v537
    %v842 = vunpack.c.l.b16 %v538
    %v843 = vunpack.c.h.b16 %v538
    %v844 = vunpack.c.l.b16 %v539
    %v845 = vunpack.c.h.b16 %v539
    %v846 = vunpack.c.l.b16 %v540
    %v847 = vunpack.c.h.b16 %v540
    %v848 = vunpack.c.l.b16 %v541
    %v849 = vunpack.c.h.b16 %v541
    %v850 = vunpack.c.l.b16 %v542
    %v851 = vunpack.c.h.b16 %v542
    %v852 = vunpack.c.l.b16 %v543
    %v853 = vunpack.c.h.b16 %v543
    %v854 = vunpack.c.l.b16 %v544
    %v855 = vunpack.c.h.b16 %v544
    %v856 = vunpack.c.l.b16 %v545
    %v857 = vunpack.c.h.b16 %v545
    %v858 = vunpack.c.l.b16 %v546
    %v859 = vunpack.c.h.b16 %v546
    %v860 = vunpack.c.l.b16 %v547
    %v861 = vunpack.c.h.b16 %v547
    %v862 = vunpack.c.l.b16 %v548
    %v863 = vunpack.c.h.b16 %v548
    %v864 = vunpack.c.l.b16 %v549
    %v865 = vunpack.c.h.b16 %v549
    %v866 = vunpack.c.l.b16 %v550
    %v867 = vunpack.c.h.b16 %v550
    %v868 = vunpack.c.l.b16 %v551
    %v869 = vunpack.c.h.b16 %v551
    %v870 = vunpack.c.l.b16 %v552
    %v871 = vunpack.c.h.b16 %v552
    %v872 = vunpack.c.l.b16 %v553
    %v873 = vunpack.c.h.b16 %v553
    %v874 = vunpack.c.l.b16 %v554
    %v875 = vunpack.c.h.b16 %v554
    %v876 = vunpack.c.l.b16 %v555
    %v877 = vunpack.c.h.b16 %v555
    %v878 = vunpack.c.l.b16 %v556
    %v879 = vunpack.c.h.b16 %v556
    %v880 = vunpack.c.l.b16 %v557
    %v881 = vunpack.c.h.b16 %v557
    %v882 = vunpack.c.l.b16 %v558
    %v883 = vunpack.c.h.b16 %v558
    %v884 = vunpack.c.l.b16 %v559
    %v885 = vunpack.c.h.b16 %v559
    %v886 = vunpack.c.l.b16 %v560
    %v887 = vunpack.c.h.b16 %v560
    %v888 = vunpack.c.l.b16 %v561
    %v889 = vunpack.c.h.b16 %v561
    %v890 = vunpack.c.l.b16 %v562
    %v891 = vunpack.c.h.b16 %v562
    %v892 = vunpack.c.l.b16 %v563
    %v893 = vunpack.c.h.b16 %v563
    %v894 = vunpack.c.l.b16 %v564
    %v895 = vunpack.c.h.b16 %v564
    %v896 = vunpack.c.l.b16 %v565
    %v897 = vunpack.c.h.b16 %v565
    %v898 = vunpack.c.l.b16 %v566
    %v899 = vunpack.c.h.b16 %v566
    %v900 = vunpack.c.l.b16 %v567
    %v901 = vunpack.c.h.b16 %v567
    %v902 = vunpack.c.l.b16 %v568
    %v903 = vunpack.c.h.b16 %v568
    %v904 = vunpack.c.l.b16 %v569
    %v905 = vunpack.c.h.b16 %v569
    %v906 = vunpack.c.l.b16 %v570
    %v907 = vunpack.c.h.b16 %v570
    %v908 = vunpack.c.l.b16 %v571
    %v909 = vunpack.c.h.b16 %v571
    %v910 = vunpack.c.l.b16 %v572
    %v911 = vunpack.c.h.b16 %v572
    %v912 = vunpack.c.l.b16 %v573
    %v913 = vunpack.c.h.b16 %v573
    %v914 = vunpack.c.l.b16 %v574
    %v915 = vunpack.c.h.b16 %v574
    %v916 = vunpack.c.l.b16 %v575
    %v917 = vunpack.c.h.b16 %v575
    %v918 = vunpack.c.l.b16 %v576
    %v919 = vunpack.c.h.b16 %v576
    %v920 = vunpack.c.l.b16 %v577
    %v921 = vunpack.c.h.b16 %v577
    %v922 = vunpack.c.l.b16 %v578
    %v923 = vunpack.c.h.b16 %v578
    %v924 = vunpack.c.l.b16 %v579
    %v925 = vunpack.c.h.b16 %v579
    %v926 = vunpack.c.l.b16 %v580
    %v927 = vunpack.c.h.b16 %v580
    %v928 = vunpack.c.l.b16 %v581
    %v929 = vunpack.c.h.b16 %v581
    %v930 = vunpack.c.l.b16 %v582
    %v931 = vunpack.c.h.b16 %v582
    %v932 = vunpack.c.l.b16 %v583
    %v933 = vunpack.c.h.b16 %v583
    %v934 = vunpack.c.l.b16 %v584
    %v935 = vunpack.c.h.b16 %v584
    %v936 = vunpack.c.l.b16 %v585
    %v937 = vunpack.c.h.b16 %v585
    %v938 = vunpack.c.l.b16 %v586
    %v939 = vunpack.c.h.b16 %v586
    %v940 = vunpack.c.l.b16 %v587
    %v941 = vunpack.c.h.b16 %v587
    %v942 = vunpack.c.l.b16 %v588
    %v943 = vunpack.c.h.b16 %v588
    %v944 = vunpack.c.l.b16 %v589
    %v945 = vunpack.c.h.b16 %v589
    %v946 = vunpack.c.l.b16 %v590
    %v947 = vunpack.c.h.b16 %v590
    %v948 = vunpack.c.l.b16 %v591
    %v949 = vunpack.c.h.b16 %v591
    %v950 = vunpack.c.l.b16 %v592
    %v951 = vunpack.c.h.b16 %v592
    %v952 = vunpack.c.l.b16 %v593
    %v953 = vunpack.c.h.b16 %v593
    %v954 = vunpack.c.l.b16 %v594
    %v955 = vunpack.c.h.b16 %v594
    %v956 = vunpack.c.l.b16 %v595
    %v957 = vunpack.c.h.b16 %v595
    %v958 = vunpack.c.l.b16 %v596
    %v959 = vunpack.c.h.b16 %v596
    %v960 = vunpack.c.l.b16 %v597
    %v961 = vunpack.c.h.b16 %v597
    %v962 = vunpack.c.l.b16 %v598
    %v963 = vunpack.c.h.b16 %v598
    %v964 = vunpack.c.l.b16 %v599
    %v965 = vunpack.c.h.b16 %v599
    %v966 = vunpack.c.l.b16 %v600
    %v967 = vunpack.c.h.b16 %v600
    %v968 = vunpack.c.l.b16 %v601
    %v969 = vunpack.c.h.b16 %v601
    %v970 = vunpack.c.l.b16 %v602
    %v971 = vunpack.c.h.b16 %v602
    %v972 = vunpack.c.l.b16 %v603
    %v973 = vunpack.c.h.b16 %v603
    %v974 = vunpack.c.l.b16 %v604
    %v975 = vunpack.c.h.b16 %v604
    %v976 = vunpack.c.l.b16 %v605
    %v977 = vunpack.c.h.b16 %v605
    %v978 = vunpack.c.l.b16 %v606
    %v979 = vunpack.c.h.b16 %v606
    %v980 = vunpack.c.l.b16 %v607
    %v981 = vunpack.c.h.b16 %v607
    %v982 = vunpack.c.l.b16 %v608
    %v983 = vunpack.c.h.b16 %v608
    %v984 = vunpack.c.l.b16 %v609
    %v985 = vunpack.c.h.b16 %v609
    %v986 = vunpack.c.l.b16 %v610
    %v987 = vunpack.c.h.b16 %v610
    %v988 = vunpack.c.l.b16 %v611
    %v989 = vunpack.c.h.b16 %v611
    %v990 = vunpack.c.l.b16 %v612
    %v991 = vunpack.c.h.b16 %v612
    %v992 = vunpack.c.l.b16 %v613
    %v993 = vunpack.c.h.b16 %v613
    %v994 = vunpack.c.l.b16 %v614
    %v995 = vunpack.c.h.b16 %v614
    %v996 = vunpack.c.l.b16 %v615
    %v997 = vunpack.c.h.b16 %v615
    %v998 = vunpack.c.l.b16 %v616
    %v999 = vunpack.c.h.b16 %v616
    %v1000 = vunpack.c.l.b16 %v617
    %v1001 = vunpack.c.h.b16 %v617
    %v1002 = vunpack.c.l.b16 %v618
    %v1003 = vunpack.c.h.b16 %v618
    %v1004 = vunpack.c.l.b16 %v619
    %v1005 = vunpack.c.h.b16 %v619
    %v1006 = vunpack.c.l.b16 %v620
    %v1007 = vunpack.c.h.b16 %v620
    %v1008 = vunpack.c.l.b16 %v621
    %v1009 = vunpack.c.h.b16 %v621
    %v1010 = vunpack.c.l.b16 %v622
    %v1011 = vunpack.c.h.b16 %v622
    %v1012 = vunpack.c.l.b16 %v623
    %v1013 = vunpack.c.h.b16 %v623
    %v1014 = vpack.c.b16 %v782, %v780
    %v1015 = vpack.c.b16 %v783, %v781
    %v1016 = vpack.c.b16 %v786, %v784
    %v1017 = vpack.c.b16 %v787, %v785
    %v1018 = vpack.c.b16 %v790, %v788
    %v1019 = vpack.c.b16 %v791, %v789
    %v1020 = vpack.c.b16 %v794, %v792
    %v1021 = vpack.c.b16 %v795, %v793
    %v1022 = vpack.c.b16 %v798, %v796
    %v1023 = vpack.c.b16 %v799, %v797
    %v1024 = vpack.c.b16 %v802, %v800
    %v1025 = vpack.c.b16 %v803, %v801
    %v1026 = vpack.c.b16 %v806, %v804
    %v1027 = vpack.c.b16 %v807, %v805
    %v1028 = vpack.c.b16 %v810, %v808
    %v1029 = vpack.c.b16 %v811, %v809
    %v1030 = vpack.c.b16 %v814, %v812
    %v1031 = vpack.c.b16 %v815, %v813
    %v1032 = vpack.c.b16 %v818, %v816
    %v1033 = vpack.c.b16 %v819, %v817
    %v1034 = vpack.c.b16 %v822, %v820
    %v1035 = vpack.c.b16 %v823, %v821
    %v1036 = vpack.c.b16 %v826, %v824
    %v1037 = vpack.c.b16 %v827, %v825
    %v1038 = vpack.c.b16 %v830, %v828
    %v1039 = vpack.c.b16 %v831, %v829
    %v1040 = vpack.c.b16 %v834, %v832
    %v1041 = vpack.c.b16 %v835, %v833
    %v1042 = vpack.c.b16 %v838, %v836
    %v1043 = vpack.c.b16 %v839, %v837
    %v1044 = vpack.c.b16 %v842, %v840
    %v1045 = vpack.c.b16 %v843, %v841
    %v1046 = vpack.c.b16 %v846, %v844
    %v1047 = vpack.c.b16 %v847, %v845
    %v1048 = vpack.c.b16 %v850, %v848
    %v1049 = vpack.c.b16 %v851, %v849
    %v1050 = vpack.c.b16 %v854, %v852
    %v1051 = vpack.c.b16 %v855, %v853
    %v1052 = vpack.c.b16 %v858, %v856
    %v1053 = vpack.c.b16 %v859, %v857
    %v1054 = vpack.c.b16 %v862, %v860
    %v1055 = vpack.c.b16 %v863, %v861
    %v1056 = vpack.c.b16 %v866, %v864
    %v1057 = vpack.c.b16 %v867, %v865
    %v1058 = vpack.c.b16 %v870, %v868
    %v1059 = vpack.c.b16 %v871, %v869
    %v1060 = vpack.c.b16 %v874, %v872
    %v1061 = vpack.c.b16 %v875, %v873
    %v1062 = vpack.c.b16 %v878, %v876
    %v1063 = vpack.c.b16 %v879, %v877
    %v1064 = vpack.c.b16 %v882, %v880
    %v1065 = vpack.c.b16 %v883, %v881
    %v1066 = vpack.c.b16 %v886, %v884
    %v1067 = vpack.c.b16 %v887, %v885
    %v1068 = vpack.c.b16 %v890, %v888
    %v1069 = vpack.c.b16 %v891, %v889
    %v1070 = vpack.c.b16 %v894, %v892
    %v1071 = vpack.c.b16 %v895, %v893
    %v1072 = vpack.c.b16 %v898, %v896
    %v1073 = vpack.c.b16 %v899, %v897
    %v1074 = vpack.c.b16 %v902, %v900
    %v1075 = vpack.c.b16 %v903, %v901
    %v1076 = vpack.c.b16 %v906, %v904
    %v1077 = vpack.c.b16 %v907, %v905
    %v1078 = vpack.c.b16 %v910, %v908
    %v1079 = vpack.c.b16 %v911, %v909
    %v1080 = vpack.c.b16 %v914, %v912
    %v1081 = vpack.c.b16 %v915, %v913
    %v1082 = vpack.c.b16 %v918, %v916
    %v1083 = vpack.c.b16 %v919, %v917
    %v1084 = vpack.c.b16 %v922, %v920
    %v1085 = vpack.c.b16 %v923, %v921
    %v1086 = vpack.c.b16 %v926, %v924
    %v1087 = vpack.c.b16 %v927, %v925
    %v1088 = vpack.c.b16 %v930, %v928
    %v1089 = vpack.c.b16 %v931, %v929
    %v1090 = vpack.c.b16 %v934, %v932
    %v1091 = vpack.c.b16 %v935, %v933
    %v1092 = vpack.c.b16 %v938, %v936
    %v1093 = vpack.c.b16 %v939, %v937
    %v1094 = vpack.c.b16 %v942, %v940
    %v1095 = vpack.c.b16 %v943, %v941
    %v1096 = vpack.c.b16 %v946, %v944
    %v1097 = vpack.c.b16 %v947, %v945
    %v1098 = vpack.c.b16 %v950, %v948
    %v1099 = vpack.c.b16 %v951, %v949
    %v1100 = vpack.c.b16 %v954, %v952
    %v1101 = vpack.c.b16 %v955, %v953
    %v1102 = vpack.c.b16 %v958, %v956
    %v1103 = vpack.c.b16 %v959, %v957
    %v1104 = vpack.c.b16 %v962, %v960
    %v1105 = vpack.c.b16 %v963, %v961
    %v1106 = vpack.c.b16 %v966, %v964
    %v1107 = vpack.c.b16 %v967, %v965
    %v1108 = vpack.c.b16 %v970, %v968
    %v1109 = vpack.c.b16 %v971, %v969
    %v1110 = vpack.c.b16 %v974, %v972
    %v1111 = vpack.c.b16 %v975, %v973
    %v1112 = vpack.c.b16 %v978, %v976
    %v1113 = vpack.c.b16 %v979, %v977
    %v1114 = vpack.c.b16 %v982, %v980
    %v1115 = vpack.c.b16 %v983, %v981
    %v1116 = vpack.c.b16 %v986, %v984
    %v1117 = vpack.c.b16 %v987, %v985
    %v1118 = vpack.c.b16 %v990, %v988
    %v1119 = vpack.c.b16 %v991, %v989
    %v1120 = vpack.c.b16 %v994, %v992
    %v1121 = vpack.c.b16 %v995, %v993
    %v1122 = vpack.c.b16 %v998, %v996
    %v1123 = vpack.c.b16 %v999, %v997
    %v1124 = vpack.c.b16 %v1002, %v1000
    %v1125 = vpack.c.b16 %v1003, %v1001
    %v1126 = vpack.c.b16 %v1006, %v1004
    %v1127 = vpack.c.b16 %v1007, %v1005
    %v1128 = vpack.c.b16 %v1010, %v1008
    %v1129 = vpack.c.b16 %v1011, %v1009
    %v1130 = vpack.c.b16 %v1012, %v1012
    %v1131 = vpack.c.b16 %v1013, %v1013
    %v1282 = vunpack.c.l.b16 %v624
    %v1283 = vunpack.c.l.b16 %v625
    %v1284 = vunpack.c.l.b16 %v626
    %v1285 = vunpack.c.l.b16 %v627
    %v1286 = vunpack.c.l.b16 %v628
    %v1287 = vunpack.c.l.b16 %v629
    %v1288 = vunpack.c.l.b16 %v630
    %v1289 = vunpack.c.l.b16 %v631
    %v1290 = vunpack.c.l.b16 %v632
    %v1291 = vunpack.c.l.b16 %v633
    %v1292 = vunpack.c.l.b16 %v634
    %v1293 = vunpack.c.l.b16 %v635
    %v1294 = vunpack.c.l.b16 %v636
    %v1295 = vunpack.c.l.b16 %v637
    %v1296 = vunpack.c.l.b16 %v638
    %v1297 = vunpack.c.l.b16 %v639
    %v1298 = vunpack.c.l.b16 %v640
    %v1299 = vunpack.c.l.b16 %v641
    %v1300 = vunpack.c.l.b16 %v642
    %v1301 = vunpack.c.l.b16 %v643
    %v1302 = vunpack.c.l.b16 %v644
    %v1303 = vunpack.c.l.b16 %v645
    %v1304 = vunpack.c.l.b16 %v646
    %v1305 = vunpack.c.l.b16 %v647
    %v1306 = vunpack.c.l.b16 %v648
    %v1307 = vunpack.c.l.b16 %v649
    %v1308 = vunpack.c.l.b16 %v650
    %v1309 = vunpack.c.l.b16 %v651
    %v1310 = vunpack.c.l.b16 %v652
    %v1311 = vunpack.c.l.b16 %v653
    %v1312 = vunpack.c.l.b16 %v654
    %v1313 = vunpack.c.l.b16 %v655
    %v1314 = vpack.c.b16 %v1283, %v1282
    %v1315 = vpack.c.b16 %v1285, %v1284
    %v1316 = vpack.c.b16 %v1287, %v1286
    %v1317 = vpack.c.b16 %v1289, %v1288
    %v1318 = vpack.c.b16 %v1291, %v1290
    %v1319 = vpack.c.b16 %v1293, %v1292
    %v1320 = vpack.c.b16 %v1295, %v1294
    %v1321 = vpack.c.b16 %v1297, %v1296
    %v1322 = vpack.c.b16 %v1299, %v1298
    %v1323 = vpack.c.b16 %v1301, %v1300
    %v1324 = vpack.c.b16 %v1303, %v1302
    %v1325 = vpack.c.b16 %v1305, %v1304
    %v1326 = vpack.c.b16 %v1307, %v1306
    %v1327 = vpack.c.b16 %v1309, %v1308
    %v1328 = vpack.c.b16 %v1311, %v1310
    %v1329 = vpack.c.b16 %v1313, %v1312
    %1346 = vmatprep.subr.bf16.mxu0 0
    %1347 = vmatpush1.bf16.msra.mxu0 %v1321
    %1348 = vmatprep.subr.bf16.mxu0 0
    %1349 = vmatpush1.bf16.msra.mxu0 %v1320
    %1350 = vmatprep.subr.bf16.mxu0 0
    %1351 = vmatpush1.bf16.msra.mxu0 %v1319
    %1352 = vmatprep.subr.bf16.mxu0 0
    %1353 = vmatpush1.bf16.msra.mxu0 %v1318
    %1354 = vmatprep.subr.bf16.mxu0 0
    %1355 = vmatpush1.bf16.msra.mxu0 %v1317
    %1356 = vmatprep.subr.bf16.mxu0 0
    %1357 = vmatpush1.bf16.msra.mxu0 %v1316
    %1358 = vmatprep.subr.bf16.mxu0 0
    %1359 = vmatpush1.bf16.msra.mxu0 %v1315
    %1360 = vmatprep.subr.bf16.mxu0 0
    %1361 = vmatpush1.bf16.msra.mxu0 %v1314
    %1362 = vmatprep.subr.bf16.mxu0 0
    %1363 = vmatpush2.bf16.msra.mxu0 %v1329
    %1364 = vmatprep.subr.bf16.mxu0 0
    %1365 = vmatpush2.bf16.msra.mxu0 %v1328
    %1366 = vmatprep.subr.bf16.mxu0 0
    %1367 = vmatpush2.bf16.msra.mxu0 %v1327
    %1368 = vmatprep.subr.bf16.mxu0 0
    %1369 = vmatpush2.bf16.msra.mxu0 %v1326
    %1370 = vmatprep.subr.bf16.mxu0 0
    %1371 = vmatpush2.bf16.msra.mxu0 %v1325
    %1372 = vmatprep.subr.bf16.mxu0 0
    %1373 = vmatpush2.bf16.msra.mxu0 %v1324
    %1374 = vmatprep.subr.bf16.mxu0 0
    %1375 = vmatpush2.bf16.msra.mxu0 %v1323
    %1376 = vmatprep.subr.bf16.mxu0 0
    %1377 = vmatpush2.bf16.msra.mxu0 %v1322
    %1378 = vmatprep.mubr.bf16.mxu0 %v1015
    %1379 = vmatmul.mubr.bf16.gmra.mxu0 %v1014
    %v1380 = vpop.f32.mrf.mxu0
    %v1381 = vadd.f32 %v661, %v1380
    %v1382 = vpop.f32.mrf.mxu0
    %v1383 = vpop.f32.mrf.mxu0
    %v1384 = vadd.f32 %v661, %v1383
    %v1385 = vpop.f32.mrf.mxu0
    %1386 = vmatprep.mubr.bf16.mxu0 %v1017
    %1387 = vmatmul.mubr.bf16.gmra.mxu0 %v1016
    %v1388 = vpop.f32.mrf.mxu0
    %v1389 = vadd.f32 %v661, %v1388
    %v1390 = vpop.f32.mrf.mxu0
    %v1391 = vpop.f32.mrf.mxu0
    %v1392 = vadd.f32 %v661, %v1391
    %v1393 = vpop.f32.mrf.mxu0
    %1394 = vmatprep.mubr.bf16.mxu0 %v1019
    %1395 = vmatmul.mubr.bf16.gmra.mxu0 %v1018
    %v1396 = vpop.f32.mrf.mxu0
    %v1397 = vadd.f32 %v661, %v1396
    %v1398 = vpop.f32.mrf.mxu0
    %v1399 = vpop.f32.mrf.mxu0
    %v1400 = vadd.f32 %v661, %v1399
    %v1401 = vpop.f32.mrf.mxu0
    %1402 = vmatprep.mubr.bf16.mxu0 %v1021
    %1403 = vmatmul.mubr.bf16.gmra.mxu0 %v1020
    %v1404 = vpop.f32.mrf.mxu0
    %v1405 = vadd.f32 %v661, %v1404
    %v1406 = vpop.f32.mrf.mxu0
    %v1407 = vpop.f32.mrf.mxu0
    %v1408 = vadd.f32 %v661, %v1407
    %v1409 = vpop.f32.mrf.mxu0
    %1410 = vmatprep.mubr.bf16.mxu0 %v1023
    %1411 = vmatmul.mubr.bf16.gmra.mxu0 %v1022
    %v1412 = vpop.f32.mrf.mxu0
    %v1413 = vadd.f32 %v661, %v1412
    %v1414 = vpop.f32.mrf.mxu0
    %v1415 = vpop.f32.mrf.mxu0
    %v1416 = vadd.f32 %v661, %v1415
    %v1417 = vpop.f32.mrf.mxu0
    %1418 = vmatprep.mubr.bf16.mxu0 %v1025
    %1419 = vmatmul.mubr.bf16.gmra.mxu0 %v1024
    %v1420 = vpop.f32.mrf.mxu0
    %v1421 = vadd.f32 %v661, %v1420
    %v1422 = vpop.f32.mrf.mxu0
    %v1423 = vpop.f32.mrf.mxu0
    %v1424 = vadd.f32 %v661, %v1423
    %v1425 = vpop.f32.mrf.mxu0
    %1426 = vmatprep.mubr.bf16.mxu0 %v1027
    %1427 = vmatmul.mubr.bf16.gmra.mxu0 %v1026
    %v1428 = vpop.f32.mrf.mxu0
    %v1429 = vadd.f32 %v661, %v1428
    %v1430 = vpop.f32.mrf.mxu0
    %v1431 = vpop.f32.mrf.mxu0
    %v1432 = vadd.f32 %v661, %v1431
    %v1433 = vpop.f32.mrf.mxu0
    %1434 = vmatprep.mubr.bf16.mxu0 %v1029
    %1435 = vmatmul.mubr.bf16.gmra.mxu0 %v1028
    %v1436 = vpop.f32.mrf.mxu0
    %v1437 = vadd.f32 %v661, %v1436
    %v1438 = vpop.f32.mrf.mxu0
    %v1439 = vpop.f32.mrf.mxu0
    %v1440 = vadd.f32 %v661, %v1439
    %v1441 = vpop.f32.mrf.mxu0
    %1442 = vmatprep.mubr.bf16.mxu0 %v1031
    %1443 = vmatmul.mubr.bf16.gmra.mxu0 %v1030
    %v1444 = vpop.f32.mrf.mxu0
    %v1445 = vadd.f32 %v661, %v1444
    %v1446 = vpop.f32.mrf.mxu0
    %v1447 = vpop.f32.mrf.mxu0
    %v1448 = vadd.f32 %v661, %v1447
    %v1449 = vpop.f32.mrf.mxu0
    %1450 = vmatprep.mubr.bf16.mxu0 %v1033
    %1451 = vmatmul.mubr.bf16.gmra.mxu0 %v1032
    %v1452 = vpop.f32.mrf.mxu0
    %v1453 = vadd.f32 %v661, %v1452
    %v1454 = vpop.f32.mrf.mxu0
    %v1455 = vpop.f32.mrf.mxu0
    %v1456 = vadd.f32 %v661, %v1455
    %v1457 = vpop.f32.mrf.mxu0
    %1458 = vmatprep.mubr.bf16.mxu0 %v1035
    %1459 = vmatmul.mubr.bf16.gmra.mxu0 %v1034
    %v1460 = vpop.f32.mrf.mxu0
    %v1461 = vadd.f32 %v661, %v1460
    %v1462 = vpop.f32.mrf.mxu0
    %v1463 = vpop.f32.mrf.mxu0
    %v1464 = vadd.f32 %v661, %v1463
    %v1465 = vpop.f32.mrf.mxu0
    %1466 = vmatprep.mubr.bf16.mxu0 %v1037
    %1467 = vmatmul.mubr.bf16.gmra.mxu0 %v1036
    %v1468 = vpop.f32.mrf.mxu0
    %v1469 = vadd.f32 %v661, %v1468
    %v1470 = vpop.f32.mrf.mxu0
    %v1471 = vpop.f32.mrf.mxu0
    %v1472 = vadd.f32 %v661, %v1471
    %v1473 = vpop.f32.mrf.mxu0
    %1474 = vmatprep.mubr.bf16.mxu0 %v1039
    %1475 = vmatmul.mubr.bf16.gmra.mxu0 %v1038
    %v1476 = vpop.f32.mrf.mxu0
    %v1477 = vadd.f32 %v661, %v1476
    %v1478 = vpop.f32.mrf.mxu0
    %v1479 = vpop.f32.mrf.mxu0
    %v1480 = vadd.f32 %v661, %v1479
    %v1481 = vpop.f32.mrf.mxu0
    %1482 = vmatprep.mubr.bf16.mxu0 %v1041
    %1483 = vmatmul.mubr.bf16.gmra.mxu0 %v1040
    %v1484 = vpop.f32.mrf.mxu0
    %v1485 = vadd.f32 %v661, %v1484
    %v1486 = vpop.f32.mrf.mxu0
    %v1487 = vpop.f32.mrf.mxu0
    %v1488 = vadd.f32 %v661, %v1487
    %v1489 = vpop.f32.mrf.mxu0
    %1490 = vmatprep.mubr.bf16.mxu0 %v1043
    %1491 = vmatmul.mubr.bf16.gmra.mxu0 %v1042
    %v1492 = vpop.f32.mrf.mxu0
    %v1493 = vadd.f32 %v661, %v1492
    %v1494 = vpop.f32.mrf.mxu0
    %v1495 = vpop.f32.mrf.mxu0
    %v1496 = vadd.f32 %v661, %v1495
    %v1497 = vpop.f32.mrf.mxu0
    %1498 = vmatprep.mubr.bf16.mxu0 %v1045
    %1499 = vmatmul.mubr.bf16.gmra.mxu0 %v1044
    %v1500 = vpop.f32.mrf.mxu0
    %v1501 = vadd.f32 %v661, %v1500
    %v1502 = vpop.f32.mrf.mxu0
    %v1503 = vpop.f32.mrf.mxu0
    %v1504 = vadd.f32 %v661, %v1503
    %v1505 = vpop.f32.mrf.mxu0
    %1506 = vmatprep.mubr.bf16.mxu0 %v1047
    %1507 = vmatmul.mubr.bf16.gmra.mxu0 %v1046
    %v1508 = vpop.f32.mrf.mxu0
    %v1509 = vadd.f32 %v661, %v1508
    %v1510 = vpop.f32.mrf.mxu0
    %v1511 = vpop.f32.mrf.mxu0
    %v1512 = vadd.f32 %v661, %v1511
    %v1513 = vpop.f32.mrf.mxu0
    %1514 = vmatprep.mubr.bf16.mxu0 %v1049
    %1515 = vmatmul.mubr.bf16.gmra.mxu0 %v1048
    %v1516 = vpop.f32.mrf.mxu0
    %v1517 = vadd.f32 %v661, %v1516
    %v1518 = vpop.f32.mrf.mxu0
    %v1519 = vpop.f32.mrf.mxu0
    %v1520 = vadd.f32 %v661, %v1519
    %v1521 = vpop.f32.mrf.mxu0
    %1522 = vmatprep.mubr.bf16.mxu0 %v1051
    %1523 = vmatmul.mubr.bf16.gmra.mxu0 %v1050
    %v1524 = vpop.f32.mrf.mxu0
    %v1525 = vadd.f32 %v661, %v1524
    %v1526 = vpop.f32.mrf.mxu0
    %v1527 = vpop.f32.mrf.mxu0
    %v1528 = vadd.f32 %v661, %v1527
    %v1529 = vpop.f32.mrf.mxu0
    %1530 = vmatprep.mubr.bf16.mxu0 %v1053
    %1531 = vmatmul.mubr.bf16.gmra.mxu0 %v1052
    %v1532 = vpop.f32.mrf.mxu0
    %v1533 = vadd.f32 %v661, %v1532
    %v1534 = vpop.f32.mrf.mxu0
    %v1535 = vpop.f32.mrf.mxu0
    %v1536 = vadd.f32 %v661, %v1535
    %v1537 = vpop.f32.mrf.mxu0
    %1538 = vmatprep.mubr.bf16.mxu0 %v1055
    %1539 = vmatmul.mubr.bf16.gmra.mxu0 %v1054
    %v1540 = vpop.f32.mrf.mxu0
    %v1541 = vadd.f32 %v661, %v1540
    %v1542 = vpop.f32.mrf.mxu0
    %v1543 = vpop.f32.mrf.mxu0
    %v1544 = vadd.f32 %v661, %v1543
    %v1545 = vpop.f32.mrf.mxu0
    %1546 = vmatprep.mubr.bf16.mxu0 %v1057
    %1547 = vmatmul.mubr.bf16.gmra.mxu0 %v1056
    %v1548 = vpop.f32.mrf.mxu0
    %v1549 = vadd.f32 %v661, %v1548
    %v1550 = vpop.f32.mrf.mxu0
    %v1551 = vpop.f32.mrf.mxu0
    %v1552 = vadd.f32 %v661, %v1551
    %v1553 = vpop.f32.mrf.mxu0
    %1554 = vmatprep.mubr.bf16.mxu0 %v1059
    %1555 = vmatmul.mubr.bf16.gmra.mxu0 %v1058
    %v1556 = vpop.f32.mrf.mxu0
    %v1557 = vadd.f32 %v661, %v1556
    %v1558 = vpop.f32.mrf.mxu0
    %v1559 = vpop.f32.mrf.mxu0
    %v1560 = vadd.f32 %v661, %v1559
    %v1561 = vpop.f32.mrf.mxu0
    %1562 = vmatprep.mubr.bf16.mxu0 %v1061
    %1563 = vmatmul.mubr.bf16.gmra.mxu0 %v1060
    %v1564 = vpop.f32.mrf.mxu0
    %v1565 = vadd.f32 %v661, %v1564
    %v1566 = vpop.f32.mrf.mxu0
    %v1567 = vpop.f32.mrf.mxu0
    %v1568 = vadd.f32 %v661, %v1567
    %v1569 = vpop.f32.mrf.mxu0
    %1570 = vmatprep.mubr.bf16.mxu0 %v1063
    %1571 = vmatmul.mubr.bf16.gmra.mxu0 %v1062
    %v1572 = vpop.f32.mrf.mxu0
    %v1573 = vadd.f32 %v661, %v1572
    %v1574 = vpop.f32.mrf.mxu0
    %v1575 = vpop.f32.mrf.mxu0
    %v1576 = vadd.f32 %v661, %v1575
    %v1577 = vpop.f32.mrf.mxu0
    %1578 = vmatprep.mubr.bf16.mxu0 %v1065
    %1579 = vmatmul.mubr.bf16.gmra.mxu0 %v1064
    %v1580 = vpop.f32.mrf.mxu0
    %v1581 = vadd.f32 %v661, %v1580
    %v1582 = vpop.f32.mrf.mxu0
    %v1583 = vpop.f32.mrf.mxu0
    %v1584 = vadd.f32 %v661, %v1583
    %v1585 = vpop.f32.mrf.mxu0
    %1586 = vmatprep.mubr.bf16.mxu0 %v1067
    %1587 = vmatmul.mubr.bf16.gmra.mxu0 %v1066
    %v1588 = vpop.f32.mrf.mxu0
    %v1589 = vadd.f32 %v661, %v1588
    %v1590 = vpop.f32.mrf.mxu0
    %v1591 = vpop.f32.mrf.mxu0
    %v1592 = vadd.f32 %v661, %v1591
    %v1593 = vpop.f32.mrf.mxu0
    %1594 = vmatprep.mubr.bf16.mxu0 %v1069
    %1595 = vmatmul.mubr.bf16.gmra.mxu0 %v1068
    %v1596 = vpop.f32.mrf.mxu0
    %v1597 = vadd.f32 %v661, %v1596
    %v1598 = vpop.f32.mrf.mxu0
    %v1599 = vpop.f32.mrf.mxu0
    %v1600 = vadd.f32 %v661, %v1599
    %v1601 = vpop.f32.mrf.mxu0
    %1602 = vmatprep.mubr.bf16.mxu0 %v1071
    %1603 = vmatmul.mubr.bf16.gmra.mxu0 %v1070
    %v1604 = vpop.f32.mrf.mxu0
    %v1605 = vadd.f32 %v661, %v1604
    %v1606 = vpop.f32.mrf.mxu0
    %v1607 = vpop.f32.mrf.mxu0
    %v1608 = vadd.f32 %v661, %v1607
    %v1609 = vpop.f32.mrf.mxu0
    %1610 = vmatprep.mubr.bf16.mxu0 %v1073
    %1611 = vmatmul.mubr.bf16.gmra.mxu0 %v1072
    %v1612 = vpop.f32.mrf.mxu0
    %v1613 = vadd.f32 %v661, %v1612
    %v1614 = vpop.f32.mrf.mxu0
    %v1615 = vpop.f32.mrf.mxu0
    %v1616 = vadd.f32 %v661, %v1615
    %v1617 = vpop.f32.mrf.mxu0
    %1618 = vmatprep.mubr.bf16.mxu0 %v1075
    %1619 = vmatmul.mubr.bf16.gmra.mxu0 %v1074
    %v1620 = vpop.f32.mrf.mxu0
    %v1621 = vadd.f32 %v661, %v1620
    %v1622 = vpop.f32.mrf.mxu0
    %v1623 = vpop.f32.mrf.mxu0
    %v1624 = vadd.f32 %v661, %v1623
    %v1625 = vpop.f32.mrf.mxu0
    %1626 = vmatprep.mubr.bf16.mxu0 %v1077
    %1627 = vmatmul.mubr.bf16.gmra.mxu0 %v1076
    %v1628 = vpop.f32.mrf.mxu0
    %v1629 = vadd.f32 %v661, %v1628
    %v1630 = vpop.f32.mrf.mxu0
    %v1631 = vpop.f32.mrf.mxu0
    %v1632 = vadd.f32 %v661, %v1631
    %v1633 = vpop.f32.mrf.mxu0
    %1634 = vmatprep.mubr.bf16.mxu0 %v1079
    %1635 = vmatmul.mubr.bf16.gmra.mxu0 %v1078
    %v1636 = vpop.f32.mrf.mxu0
    %v1637 = vadd.f32 %v661, %v1636
    %v1638 = vpop.f32.mrf.mxu0
    %v1639 = vpop.f32.mrf.mxu0
    %v1640 = vadd.f32 %v661, %v1639
    %v1641 = vpop.f32.mrf.mxu0
    %1642 = vmatprep.mubr.bf16.mxu0 %v1081
    %1643 = vmatmul.mubr.bf16.gmra.mxu0 %v1080
    %v1644 = vpop.f32.mrf.mxu0
    %v1645 = vadd.f32 %v661, %v1644
    %v1646 = vpop.f32.mrf.mxu0
    %v1647 = vpop.f32.mrf.mxu0
    %v1648 = vadd.f32 %v661, %v1647
    %v1649 = vpop.f32.mrf.mxu0
    %1650 = vmatprep.mubr.bf16.mxu0 %v1083
    %1651 = vmatmul.mubr.bf16.gmra.mxu0 %v1082
    %v1652 = vpop.f32.mrf.mxu0
    %v1653 = vadd.f32 %v661, %v1652
    %v1654 = vpop.f32.mrf.mxu0
    %v1655 = vpop.f32.mrf.mxu0
    %v1656 = vadd.f32 %v661, %v1655
    %v1657 = vpop.f32.mrf.mxu0
    %1658 = vmatprep.mubr.bf16.mxu0 %v1085
    %1659 = vmatmul.mubr.bf16.gmra.mxu0 %v1084
    %v1660 = vpop.f32.mrf.mxu0
    %v1661 = vadd.f32 %v661, %v1660
    %v1662 = vpop.f32.mrf.mxu0
    %v1663 = vpop.f32.mrf.mxu0
    %v1664 = vadd.f32 %v661, %v1663
    %v1665 = vpop.f32.mrf.mxu0
    %1666 = vmatprep.mubr.bf16.mxu0 %v1087
    %1667 = vmatmul.mubr.bf16.gmra.mxu0 %v1086
    %v1668 = vpop.f32.mrf.mxu0
    %v1669 = vadd.f32 %v661, %v1668
    %v1670 = vpop.f32.mrf.mxu0
    %v1671 = vpop.f32.mrf.mxu0
    %v1672 = vadd.f32 %v661, %v1671
    %v1673 = vpop.f32.mrf.mxu0
    %1674 = vmatprep.mubr.bf16.mxu0 %v1089
    %1675 = vmatmul.mubr.bf16.gmra.mxu0 %v1088
    %v1676 = vpop.f32.mrf.mxu0
    %v1677 = vadd.f32 %v661, %v1676
    %v1678 = vpop.f32.mrf.mxu0
    %v1679 = vpop.f32.mrf.mxu0
    %v1680 = vadd.f32 %v661, %v1679
    %v1681 = vpop.f32.mrf.mxu0
    %1682 = vmatprep.mubr.bf16.mxu0 %v1091
    %1683 = vmatmul.mubr.bf16.gmra.mxu0 %v1090
    %v1684 = vpop.f32.mrf.mxu0
    %v1685 = vadd.f32 %v661, %v1684
    %v1686 = vpop.f32.mrf.mxu0
    %v1687 = vpop.f32.mrf.mxu0
    %v1688 = vadd.f32 %v661, %v1687
    %v1689 = vpop.f32.mrf.mxu0
    %1690 = vmatprep.mubr.bf16.mxu0 %v1093
    %1691 = vmatmul.mubr.bf16.gmra.mxu0 %v1092
    %v1692 = vpop.f32.mrf.mxu0
    %v1693 = vadd.f32 %v661, %v1692
    %v1694 = vpop.f32.mrf.mxu0
    %v1695 = vpop.f32.mrf.mxu0
    %v1696 = vadd.f32 %v661, %v1695
    %v1697 = vpop.f32.mrf.mxu0
    %1698 = vmatprep.mubr.bf16.mxu0 %v1095
    %1699 = vmatmul.mubr.bf16.gmra.mxu0 %v1094
    %v1700 = vpop.f32.mrf.mxu0
    %v1701 = vadd.f32 %v661, %v1700
    %v1702 = vpop.f32.mrf.mxu0
    %v1703 = vpop.f32.mrf.mxu0
    %v1704 = vadd.f32 %v661, %v1703
    %v1705 = vpop.f32.mrf.mxu0
    %1706 = vmatprep.mubr.bf16.mxu0 %v1097
    %1707 = vmatmul.mubr.bf16.gmra.mxu0 %v1096
    %v1708 = vpop.f32.mrf.mxu0
    %v1709 = vadd.f32 %v661, %v1708
    %v1710 = vpop.f32.mrf.mxu0
    %v1711 = vpop.f32.mrf.mxu0
    %v1712 = vadd.f32 %v661, %v1711
    %v1713 = vpop.f32.mrf.mxu0
    %1714 = vmatprep.mubr.bf16.mxu0 %v1099
    %1715 = vmatmul.mubr.bf16.gmra.mxu0 %v1098
    %v1716 = vpop.f32.mrf.mxu0
    %v1717 = vadd.f32 %v661, %v1716
    %v1718 = vpop.f32.mrf.mxu0
    %v1719 = vpop.f32.mrf.mxu0
    %v1720 = vadd.f32 %v661, %v1719
    %v1721 = vpop.f32.mrf.mxu0
    %1722 = vmatprep.mubr.bf16.mxu0 %v1101
    %1723 = vmatmul.mubr.bf16.gmra.mxu0 %v1100
    %v1724 = vpop.f32.mrf.mxu0
    %v1725 = vadd.f32 %v661, %v1724
    %v1726 = vpop.f32.mrf.mxu0
    %v1727 = vpop.f32.mrf.mxu0
    %v1728 = vadd.f32 %v661, %v1727
    %v1729 = vpop.f32.mrf.mxu0
    %1730 = vmatprep.mubr.bf16.mxu0 %v1103
    %1731 = vmatmul.mubr.bf16.gmra.mxu0 %v1102
    %v1732 = vpop.f32.mrf.mxu0
    %v1733 = vadd.f32 %v661, %v1732
    %v1734 = vpop.f32.mrf.mxu0
    %v1735 = vpop.f32.mrf.mxu0
    %v1736 = vadd.f32 %v661, %v1735
    %v1737 = vpop.f32.mrf.mxu0
    %1738 = vmatprep.mubr.bf16.mxu0 %v1105
    %1739 = vmatmul.mubr.bf16.gmra.mxu0 %v1104
    %v1740 = vpop.f32.mrf.mxu0
    %v1741 = vadd.f32 %v661, %v1740
    %v1742 = vpop.f32.mrf.mxu0
    %v1743 = vpop.f32.mrf.mxu0
    %v1744 = vadd.f32 %v661, %v1743
    %v1745 = vpop.f32.mrf.mxu0
    %1746 = vmatprep.mubr.bf16.mxu0 %v1107
    %1747 = vmatmul.mubr.bf16.gmra.mxu0 %v1106
    %v1748 = vpop.f32.mrf.mxu0
    %v1749 = vadd.f32 %v661, %v1748
    %v1750 = vpop.f32.mrf.mxu0
    %v1751 = vpop.f32.mrf.mxu0
    %v1752 = vadd.f32 %v661, %v1751
    %v1753 = vpop.f32.mrf.mxu0
    %1754 = vmatprep.mubr.bf16.mxu0 %v1109
    %1755 = vmatmul.mubr.bf16.gmra.mxu0 %v1108
    %v1756 = vpop.f32.mrf.mxu0
    %v1757 = vadd.f32 %v661, %v1756
    %v1758 = vpop.f32.mrf.mxu0
    %v1759 = vpop.f32.mrf.mxu0
    %v1760 = vadd.f32 %v661, %v1759
    %v1761 = vpop.f32.mrf.mxu0
    %1762 = vmatprep.mubr.bf16.mxu0 %v1111
    %1763 = vmatmul.mubr.bf16.gmra.mxu0 %v1110
    %v1764 = vpop.f32.mrf.mxu0
    %v1765 = vadd.f32 %v661, %v1764
    %v1766 = vpop.f32.mrf.mxu0
    %v1767 = vpop.f32.mrf.mxu0
    %v1768 = vadd.f32 %v661, %v1767
    %v1769 = vpop.f32.mrf.mxu0
    %1770 = vmatprep.mubr.bf16.mxu0 %v1113
    %1771 = vmatmul.mubr.bf16.gmra.mxu0 %v1112
    %v1772 = vpop.f32.mrf.mxu0
    %v1773 = vadd.f32 %v661, %v1772
    %v1774 = vpop.f32.mrf.mxu0
    %v1775 = vpop.f32.mrf.mxu0
    %v1776 = vadd.f32 %v661, %v1775
    %v1777 = vpop.f32.mrf.mxu0
    %1778 = vmatprep.mubr.bf16.mxu0 %v1115
    %1779 = vmatmul.mubr.bf16.gmra.mxu0 %v1114
    %v1780 = vpop.f32.mrf.mxu0
    %v1781 = vadd.f32 %v661, %v1780
    %v1782 = vpop.f32.mrf.mxu0
    %v1783 = vpop.f32.mrf.mxu0
    %v1784 = vadd.f32 %v661, %v1783
    %v1785 = vpop.f32.mrf.mxu0
    %1786 = vmatprep.mubr.bf16.mxu0 %v1117
    %1787 = vmatmul.mubr.bf16.gmra.mxu0 %v1116
    %v1788 = vpop.f32.mrf.mxu0
    %v1789 = vadd.f32 %v661, %v1788
    %v1790 = vpop.f32.mrf.mxu0
    %v1791 = vpop.f32.mrf.mxu0
    %v1792 = vadd.f32 %v661, %v1791
    %v1793 = vpop.f32.mrf.mxu0
    %1794 = vmatprep.mubr.bf16.mxu0 %v1119
    %1795 = vmatmul.mubr.bf16.gmra.mxu0 %v1118
    %v1796 = vpop.f32.mrf.mxu0
    %v1797 = vadd.f32 %v661, %v1796
    %v1798 = vpop.f32.mrf.mxu0
    %v1799 = vpop.f32.mrf.mxu0
    %v1800 = vadd.f32 %v661, %v1799
    %v1801 = vpop.f32.mrf.mxu0
    %1802 = vmatprep.mubr.bf16.mxu0 %v1121
    %1803 = vmatmul.mubr.bf16.gmra.mxu0 %v1120
    %v1804 = vpop.f32.mrf.mxu0
    %v1805 = vadd.f32 %v661, %v1804
    %v1806 = vpop.f32.mrf.mxu0
    %v1807 = vpop.f32.mrf.mxu0
    %v1808 = vadd.f32 %v661, %v1807
    %v1809 = vpop.f32.mrf.mxu0
    %1810 = vmatprep.mubr.bf16.mxu0 %v1123
    %1811 = vmatmul.mubr.bf16.gmra.mxu0 %v1122
    %v1812 = vpop.f32.mrf.mxu0
    %v1813 = vadd.f32 %v661, %v1812
    %v1814 = vpop.f32.mrf.mxu0
    %v1815 = vpop.f32.mrf.mxu0
    %v1816 = vadd.f32 %v661, %v1815
    %v1817 = vpop.f32.mrf.mxu0
    %1818 = vmatprep.mubr.bf16.mxu0 %v1125
    %1819 = vmatmul.mubr.bf16.gmra.mxu0 %v1124
    %v1820 = vpop.f32.mrf.mxu0
    %v1821 = vadd.f32 %v661, %v1820
    %v1822 = vpop.f32.mrf.mxu0
    %v1823 = vpop.f32.mrf.mxu0
    %v1824 = vadd.f32 %v661, %v1823
    %v1825 = vpop.f32.mrf.mxu0
    %1826 = vmatprep.mubr.bf16.mxu0 %v1127
    %1827 = vmatmul.mubr.bf16.gmra.mxu0 %v1126
    %v1828 = vpop.f32.mrf.mxu0
    %v1829 = vadd.f32 %v661, %v1828
    %v1830 = vpop.f32.mrf.mxu0
    %v1831 = vpop.f32.mrf.mxu0
    %v1832 = vadd.f32 %v661, %v1831
    %v1833 = vpop.f32.mrf.mxu0
    %1834 = vmatprep.mubr.bf16.mxu0 %v1129
    %1835 = vmatmul.mubr.bf16.gmra.mxu0 %v1128
    %v1836 = vpop.f32.mrf.mxu0
    %v1837 = vadd.f32 %v661, %v1836
    %v1838 = vpop.f32.mrf.mxu0
    %v1839 = vpop.f32.mrf.mxu0
    %v1840 = vadd.f32 %v661, %v1839
    %v1841 = vpop.f32.mrf.mxu0
    %1842 = vmatprep.mubr.bf16.mxu0 %v1131
    %1843 = vmatmul.mubr.bf16.gmra.mxu0 %v1130
    %v1844 = vpop.f32.mrf.mxu0
    %v1845 = vadd.f32 %v661, %v1844
    %v1846 = vpop.f32.mrf.mxu0
    %v1847 = vpop.f32.mrf.mxu0
    %v1848 = vpop.f32.mrf.mxu0
    %1849 = vdwg.mxu0
    %v1850 = vmax.f32 %v1381, 0.0
    %v1851 = vmax.f32 %v1384, 0.0
    %v1852 = vmax.f32 %v1389, 0.0
    %v1853 = vmax.f32 %v1392, 0.0
    %v1854 = vmax.f32 %v1397, 0.0
    %v1855 = vmax.f32 %v1400, 0.0
    %v1856 = vmax.f32 %v1405, 0.0
    %v1857 = vmax.f32 %v1408, 0.0
    %v1858 = vmax.f32 %v1413, 0.0
    %v1859 = vmax.f32 %v1416, 0.0
    %v1860 = vmax.f32 %v1421, 0.0
    %v1861 = vmax.f32 %v1424, 0.0
    %v1862 = vmax.f32 %v1429, 0.0
    %v1863 = vmax.f32 %v1432, 0.0
    %v1864 = vmax.f32 %v1437, 0.0
    %v1865 = vmax.f32 %v1440, 0.0
    %v1866 = vmax.f32 %v1445, 0.0
    %v1867 = vmax.f32 %v1448, 0.0
    %v1868 = vmax.f32 %v1453, 0.0
    %v1869 = vmax.f32 %v1456, 0.0
    %v1870 = vmax.f32 %v1461, 0.0
    %v1871 = vmax.f32 %v1464, 0.0
    %v1872 = vmax.f32 %v1469, 0.0
    %v1873 = vmax.f32 %v1472, 0.0
    %v1874 = vmax.f32 %v1477, 0.0
    %v1875 = vmax.f32 %v1480, 0.0
    %v1876 = vmax.f32 %v1485, 0.0
    %v1877 = vmax.f32 %v1488, 0.0
    %v1878 = vmax.f32 %v1493, 0.0
    %v1879 = vmax.f32 %v1496, 0.0
    %v1880 = vmax.f32 %v1501, 0.0
    %v1881 = vmax.f32 %v1504, 0.0
    %v1882 = vmax.f32 %v1509, 0.0
    %v1883 = vmax.f32 %v1512, 0.0
    %v1884 = vmax.f32 %v1517, 0.0
    %v1885 = vmax.f32 %v1520, 0.0
    %v1886 = vmax.f32 %v1525, 0.0
    %v1887 = vmax.f32 %v1528, 0.0
    %v1888 = vmax.f32 %v1533, 0.0
    %v1889 = vmax.f32 %v1536, 0.0
    %v1890 = vmax.f32 %v1541, 0.0
    %v1891 = vmax.f32 %v1544, 0.0
    %v1892 = vmax.f32 %v1549, 0.0
    %v1893 = vmax.f32 %v1552, 0.0
    %v1894 = vmax.f32 %v1557, 0.0
    %v1895 = vmax.f32 %v1560, 0.0
    %v1896 = vmax.f32 %v1565, 0.0
    %v1897 = vmax.f32 %v1568, 0.0
    %v1898 = vmax.f32 %v1573, 0.0
    %v1899 = vmax.f32 %v1576, 0.0
    %v1900 = vmax.f32 %v1581, 0.0
    %v1901 = vmax.f32 %v1584, 0.0
    %v1902 = vmax.f32 %v1589, 0.0
    %v1903 = vmax.f32 %v1592, 0.0
    %v1904 = vmax.f32 %v1597, 0.0
    %v1905 = vmax.f32 %v1600, 0.0
    %v1906 = vmax.f32 %v1605, 0.0
    %v1907 = vmax.f32 %v1608, 0.0
    %v1908 = vmax.f32 %v1613, 0.0
    %v1909 = vmax.f32 %v1616, 0.0
    %v1910 = vmax.f32 %v1621, 0.0
    %v1911 = vmax.f32 %v1624, 0.0
    %v1912 = vmax.f32 %v1629, 0.0
    %v1913 = vmax.f32 %v1632, 0.0
    %v1914 = vmax.f32 %v1637, 0.0
    %v1915 = vmax.f32 %v1640, 0.0
    %v1916 = vmax.f32 %v1645, 0.0
    %v1917 = vmax.f32 %v1648, 0.0
    %v1918 = vmax.f32 %v1653, 0.0
    %v1919 = vmax.f32 %v1656, 0.0
    %v1920 = vmax.f32 %v1661, 0.0
    %v1921 = vmax.f32 %v1664, 0.0
    %v1922 = vmax.f32 %v1669, 0.0
    %v1923 = vmax.f32 %v1672, 0.0
    %v1924 = vmax.f32 %v1677, 0.0
    %v1925 = vmax.f32 %v1680, 0.0
    %v1926 = vmax.f32 %v1685, 0.0
    %v1927 = vmax.f32 %v1688, 0.0
    %v1928 = vmax.f32 %v1693, 0.0
    %v1929 = vmax.f32 %v1696, 0.0
    %v1930 = vmax.f32 %v1701, 0.0
    %v1931 = vmax.f32 %v1704, 0.0
    %v1932 = vmax.f32 %v1709, 0.0
    %v1933 = vmax.f32 %v1712, 0.0
    %v1934 = vmax.f32 %v1717, 0.0
    %v1935 = vmax.f32 %v1720, 0.0
    %v1936 = vmax.f32 %v1725, 0.0
    %v1937 = vmax.f32 %v1728, 0.0
    %v1938 = vmax.f32 %v1733, 0.0
    %v1939 = vmax.f32 %v1736, 0.0
    %v1940 = vmax.f32 %v1741, 0.0
    %v1941 = vmax.f32 %v1744, 0.0
    %v1942 = vmax.f32 %v1749, 0.0
    %v1943 = vmax.f32 %v1752, 0.0
    %v1944 = vmax.f32 %v1757, 0.0
    %v1945 = vmax.f32 %v1760, 0.0
    %v1946 = vmax.f32 %v1765, 0.0
    %v1947 = vmax.f32 %v1768, 0.0
    %v1948 = vmax.f32 %v1773, 0.0
    %v1949 = vmax.f32 %v1776, 0.0
    %v1950 = vmax.f32 %v1781, 0.0
    %v1951 = vmax.f32 %v1784, 0.0
    %v1952 = vmax.f32 %v1789, 0.0
    %v1953 = vmax.f32 %v1792, 0.0
    %v1954 = vmax.f32 %v1797, 0.0
    %v1955 = vmax.f32 %v1800, 0.0
    %v1956 = vmax.f32 %v1805, 0.0
    %v1957 = vmax.f32 %v1808, 0.0
    %v1958 = vmax.f32 %v1813, 0.0
    %v1959 = vmax.f32 %v1816, 0.0
    %v1960 = vmax.f32 %v1821, 0.0
    %v1961 = vmax.f32 %v1824, 0.0
    %v1962 = vmax.f32 %v1829, 0.0
    %v1963 = vmax.f32 %v1832, 0.0
    %v1964 = vmax.f32 %v1837, 0.0
    %v1965 = vmax.f32 %v1840, 0.0
    %v1966 = vmax.f32 %v1845, 0.0
    %v1967 = vpack.c.bf16 %v1851, %v1850
    %v1968 = vpack.c.bf16 %v1853, %v1852
    %v1969 = vpack.c.bf16 %v1855, %v1854
    %v1970 = vpack.c.bf16 %v1857, %v1856
    %v1971 = vpack.c.bf16 %v1858, %v1858
    %v1977 = vunpack.c.l.b16 %v1967
    %v1978 = vunpack.c.h.b16 %v1967
    %v1979 = vunpack.c.l.b16 %v1968
    %v1980 = vunpack.c.h.b16 %v1968
    %v1981 = vunpack.c.l.b16 %v1969
    %v1982 = vunpack.c.h.b16 %v1969
    %v1983 = vunpack.c.l.b16 %v1970
    %v1984 = vunpack.c.h.b16 %v1970
    %v1985 = vunpack.c.l.b16 %v1971
    %v1986 = vpack.c.b16 %v1977, %v1977
    %v1987 = vpack.c.b16 %v1978, %v1978
    %v1988 = vpack.c.b16 %v1979, %v1979
    %v1989 = vpack.c.b16 %v1980, %v1980
    %v1990 = vpack.c.b16 %v1981, %v1981
    %v1991 = vpack.c.b16 %v1982, %v1982
    %v1992 = vpack.c.b16 %v1983, %v1983
    %v1993 = vpack.c.b16 %v1984, %v1984
    %v1994 = vpack.c.b16 %v1985, %v1985
    %2004 = vst [vmem:[#allocation4] sm:$0xf] %v1986
    %2005 = vst [vmem:[#allocation4 + $0x34] sm:$0xf] %v1987
    %2006 = vst [vmem:[#allocation4 + $0x68] sm:$0xf] %v1988
    %2007 = vst [vmem:[#allocation4 + $0x9c] sm:$0xf] %v1989
    %2008 = vst [vmem:[#allocation4 + $0xd0] sm:$0xf] %v1990
    %2009 = vst [vmem:[#allocation4 + $0x104] sm:$0xf] %v1991
    %2010 = vst [vmem:[#allocation4 + $0x138] sm:$0xf] %v1992
    %2011 = vst [vmem:[#allocation4 + $0x16c] sm:$0xf] %v1993
    %2012 = vst [vmem:[#allocation4 + $0x1a0] sm:$0xf] %v1994
    %v2013 = vpack.c.bf16 %v1860, %v1859
    %v2014 = vpack.c.bf16 %v1862, %v1861
    %v2015 = vpack.c.bf16 %v1864, %v1863
    %v2016 = vpack.c.bf16 %v1866, %v1865
    %v2017 = vpack.c.bf16 %v1867, %v1867
    %v2023 = vunpack.c.l.b16 %v2013
    %v2024 = vunpack.c.h.b16 %v2013
    %v2025 = vunpack.c.l.b16 %v2014
    %v2026 = vunpack.c.h.b16 %v2014
    %v2027 = vunpack.c.l.b16 %v2015
    %v2028 = vunpack.c.h.b16 %v2015
    %v2029 = vunpack.c.l.b16 %v2016
    %v2030 = vunpack.c.h.b16 %v2016
    %v2031 = vunpack.c.l.b16 %v2017
    %v2032 = vpack.c.b16 %v2023, %v2023
    %v2033 = vpack.c.b16 %v2024, %v2024
    %v2034 = vpack.c.b16 %v2025, %v2025
    %v2035 = vpack.c.b16 %v2026, %v2026
    %v2036 = vpack.c.b16 %v2027, %v2027
    %v2037 = vpack.c.b16 %v2028, %v2028
    %v2038 = vpack.c.b16 %v2029, %v2029
    %v2039 = vpack.c.b16 %v2030, %v2030
    %v2040 = vpack.c.b16 %v2031, %v2031
    %2050 = vst [vmem:[#allocation4 + $0x4] sm:$0xf] %v2032
    %2051 = vst [vmem:[#allocation4 + $0x38] sm:$0xf] %v2033
    %2052 = vst [vmem:[#allocation4 + $0x6c] sm:$0xf] %v2034
    %2053 = vst [vmem:[#allocation4 + $0xa0] sm:$0xf] %v2035
    %2054 = vst [vmem:[#allocation4 + $0xd4] sm:$0xf] %v2036
    %2055 = vst [vmem:[#allocation4 + $0x108] sm:$0xf] %v2037
    %2056 = vst [vmem:[#allocation4 + $0x13c] sm:$0xf] %v2038
    %2057 = vst [vmem:[#allocation4 + $0x170] sm:$0xf] %v2039
    %2058 = vst [vmem:[#allocation4 + $0x1a4] sm:$0xf] %v2040
    %v2059 = vpack.c.bf16 %v1869, %v1868
    %v2060 = vpack.c.bf16 %v1871, %v1870
    %v2061 = vpack.c.bf16 %v1873, %v1872
    %v2062 = vpack.c.bf16 %v1875, %v1874
    %v2063 = vpack.c.bf16 %v1876, %v1876
    %v2069 = vunpack.c.l.b16 %v2059
    %v2070 = vunpack.c.h.b16 %v2059
    %v2071 = vunpack.c.l.b16 %v2060
    %v2072 = vunpack.c.h.b16 %v2060
    %v2073 = vunpack.c.l.b16 %v2061
    %v2074 = vunpack.c.h.b16 %v2061
    %v2075 = vunpack.c.l.b16 %v2062
    %v2076 = vunpack.c.h.b16 %v2062
    %v2077 = vunpack.c.l.b16 %v2063
    %v2078 = vpack.c.b16 %v2069, %v2069
    %v2079 = vpack.c.b16 %v2070, %v2070
    %v2080 = vpack.c.b16 %v2071, %v2071
    %v2081 = vpack.c.b16 %v2072, %v2072
    %v2082 = vpack.c.b16 %v2073, %v2073
    %v2083 = vpack.c.b16 %v2074, %v2074
    %v2084 = vpack.c.b16 %v2075, %v2075
    %v2085 = vpack.c.b16 %v2076, %v2076
    %v2086 = vpack.c.b16 %v2077, %v2077
    %2096 = vst [vmem:[#allocation4 + $0x8] sm:$0xf] %v2078
    %2097 = vst [vmem:[#allocation4 + $0x3c] sm:$0xf] %v2079
    %2098 = vst [vmem:[#allocation4 + $0x70] sm:$0xf] %v2080
    %2099 = vst [vmem:[#allocation4 + $0xa4] sm:$0xf] %v2081
    %2100 = vst [vmem:[#allocation4 + $0xd8] sm:$0xf] %v2082
    %2101 = vst [vmem:[#allocation4 + $0x10c] sm:$0xf] %v2083
    %2102 = vst [vmem:[#allocation4 + $0x140] sm:$0xf] %v2084
    %2103 = vst [vmem:[#allocation4 + $0x174] sm:$0xf] %v2085
    %2104 = vst [vmem:[#allocation4 + $0x1a8] sm:$0xf] %v2086
    %v2105 = vpack.c.bf16 %v1878, %v1877
    %v2106 = vpack.c.bf16 %v1880, %v1879
    %v2107 = vpack.c.bf16 %v1882, %v1881
    %v2108 = vpack.c.bf16 %v1884, %v1883
    %v2109 = vpack.c.bf16 %v1885, %v1885
    %v2115 = vunpack.c.l.b16 %v2105
    %v2116 = vunpack.c.h.b16 %v2105
    %v2117 = vunpack.c.l.b16 %v2106
    %v2118 = vunpack.c.h.b16 %v2106
    %v2119 = vunpack.c.l.b16 %v2107
    %v2120 = vunpack.c.h.b16 %v2107
    %v2121 = vunpack.c.l.b16 %v2108
    %v2122 = vunpack.c.h.b16 %v2108
    %v2123 = vunpack.c.l.b16 %v2109
    %v2124 = vpack.c.b16 %v2115, %v2115
    %v2125 = vpack.c.b16 %v2116, %v2116
    %v2126 = vpack.c.b16 %v2117, %v2117
    %v2127 = vpack.c.b16 %v2118, %v2118
    %v2128 = vpack.c.b16 %v2119, %v2119
    %v2129 = vpack.c.b16 %v2120, %v2120
    %v2130 = vpack.c.b16 %v2121, %v2121
    %v2131 = vpack.c.b16 %v2122, %v2122
    %v2132 = vpack.c.b16 %v2123, %v2123
    %2142 = vst [vmem:[#allocation4 + $0xc] sm:$0xf] %v2124
    %2143 = vst [vmem:[#allocation4 + $0x40] sm:$0xf] %v2125
    %2144 = vst [vmem:[#allocation4 + $0x74] sm:$0xf] %v2126
    %2145 = vst [vmem:[#allocation4 + $0xa8] sm:$0xf] %v2127
    %2146 = vst [vmem:[#allocation4 + $0xdc] sm:$0xf] %v2128
    %2147 = vst [vmem:[#allocation4 + $0x110] sm:$0xf] %v2129
    %2148 = vst [vmem:[#allocation4 + $0x144] sm:$0xf] %v2130
    %2149 = vst [vmem:[#allocation4 + $0x178] sm:$0xf] %v2131
    %2150 = vst [vmem:[#allocation4 + $0x1ac] sm:$0xf] %v2132
    %v2151 = vpack.c.bf16 %v1887, %v1886
    %v2152 = vpack.c.bf16 %v1889, %v1888
    %v2153 = vpack.c.bf16 %v1891, %v1890
    %v2154 = vpack.c.bf16 %v1893, %v1892
    %v2155 = vpack.c.bf16 %v1894, %v1894
    %v2161 = vunpack.c.l.b16 %v2151
    %v2162 = vunpack.c.h.b16 %v2151
    %v2163 = vunpack.c.l.b16 %v2152
    %v2164 = vunpack.c.h.b16 %v2152
    %v2165 = vunpack.c.l.b16 %v2153
    %v2166 = vunpack.c.h.b16 %v2153
    %v2167 = vunpack.c.l.b16 %v2154
    %v2168 = vunpack.c.h.b16 %v2154
    %v2169 = vunpack.c.l.b16 %v2155
    %v2170 = vpack.c.b16 %v2161, %v2161
    %v2171 = vpack.c.b16 %v2162, %v2162
    %v2172 = vpack.c.b16 %v2163, %v2163
    %v2173 = vpack.c.b16 %v2164, %v2164
    %v2174 = vpack.c.b16 %v2165, %v2165
    %v2175 = vpack.c.b16 %v2166, %v2166
    %v2176 = vpack.c.b16 %v2167, %v2167
    %v2177 = vpack.c.b16 %v2168, %v2168
    %v2178 = vpack.c.b16 %v2169, %v2169
    %2188 = vst [vmem:[#allocation4 + $0x10] sm:$0xf] %v2170
    %2189 = vst [vmem:[#allocation4 + $0x44] sm:$0xf] %v2171
    %2190 = vst [vmem:[#allocation4 + $0x78] sm:$0xf] %v2172
    %2191 = vst [vmem:[#allocation4 + $0xac] sm:$0xf] %v2173
    %2192 = vst [vmem:[#allocation4 + $0xe0] sm:$0xf] %v2174
    %2193 = vst [vmem:[#allocation4 + $0x114] sm:$0xf] %v2175
    %2194 = vst [vmem:[#allocation4 + $0x148] sm:$0xf] %v2176
    %2195 = vst [vmem:[#allocation4 + $0x17c] sm:$0xf] %v2177
    %2196 = vst [vmem:[#allocation4 + $0x1b0] sm:$0xf] %v2178
    %v2197 = vpack.c.bf16 %v1896, %v1895
    %v2198 = vpack.c.bf16 %v1898, %v1897
    %v2199 = vpack.c.bf16 %v1900, %v1899
    %v2200 = vpack.c.bf16 %v1902, %v1901
    %v2201 = vpack.c.bf16 %v1903, %v1903
    %v2207 = vunpack.c.l.b16 %v2197
    %v2208 = vunpack.c.h.b16 %v2197
    %v2209 = vunpack.c.l.b16 %v2198
    %v2210 = vunpack.c.h.b16 %v2198
    %v2211 = vunpack.c.l.b16 %v2199
    %v2212 = vunpack.c.h.b16 %v2199
    %v2213 = vunpack.c.l.b16 %v2200
    %v2214 = vunpack.c.h.b16 %v2200
    %v2215 = vunpack.c.l.b16 %v2201
    %v2216 = vpack.c.b16 %v2207, %v2207
    %v2217 = vpack.c.b16 %v2208, %v2208
    %v2218 = vpack.c.b16 %v2209, %v2209
    %v2219 = vpack.c.b16 %v2210, %v2210
    %v2220 = vpack.c.b16 %v2211, %v2211
    %v2221 = vpack.c.b16 %v2212, %v2212
    %v2222 = vpack.c.b16 %v2213, %v2213
    %v2223 = vpack.c.b16 %v2214, %v2214
    %v2224 = vpack.c.b16 %v2215, %v2215
    %2234 = vst [vmem:[#allocation4 + $0x14] sm:$0xf] %v2216
    %2235 = vst [vmem:[#allocation4 + $0x48] sm:$0xf] %v2217
    %2236 = vst [vmem:[#allocation4 + $0x7c] sm:$0xf] %v2218
    %2237 = vst [vmem:[#allocation4 + $0xb0] sm:$0xf] %v2219
    %2238 = vst [vmem:[#allocation4 + $0xe4] sm:$0xf] %v2220
    %2239 = vst [vmem:[#allocation4 + $0x118] sm:$0xf] %v2221
    %2240 = vst [vmem:[#allocation4 + $0x14c] sm:$0xf] %v2222
    %2241 = vst [vmem:[#allocation4 + $0x180] sm:$0xf] %v2223
    %2242 = vst [vmem:[#allocation4 + $0x1b4] sm:$0xf] %v2224
    %v2243 = vpack.c.bf16 %v1905, %v1904
    %v2244 = vpack.c.bf16 %v1907, %v1906
    %v2245 = vpack.c.bf16 %v1909, %v1908
    %v2246 = vpack.c.bf16 %v1911, %v1910
    %v2247 = vpack.c.bf16 %v1912, %v1912
    %v2253 = vunpack.c.l.b16 %v2243
    %v2254 = vunpack.c.h.b16 %v2243
    %v2255 = vunpack.c.l.b16 %v2244
    %v2256 = vunpack.c.h.b16 %v2244
    %v2257 = vunpack.c.l.b16 %v2245
    %v2258 = vunpack.c.h.b16 %v2245
    %v2259 = vunpack.c.l.b16 %v2246
    %v2260 = vunpack.c.h.b16 %v2246
    %v2261 = vunpack.c.l.b16 %v2247
    %v2262 = vpack.c.b16 %v2253, %v2253
    %v2263 = vpack.c.b16 %v2254, %v2254
    %v2264 = vpack.c.b16 %v2255, %v2255
    %v2265 = vpack.c.b16 %v2256, %v2256
    %v2266 = vpack.c.b16 %v2257, %v2257
    %v2267 = vpack.c.b16 %v2258, %v2258
    %v2268 = vpack.c.b16 %v2259, %v2259
    %v2269 = vpack.c.b16 %v2260, %v2260
    %v2270 = vpack.c.b16 %v2261, %v2261
    %2280 = vst [vmem:[#allocation4 + $0x18] sm:$0xf] %v2262
    %2281 = vst [vmem:[#allocation4 + $0x4c] sm:$0xf] %v2263
    %2282 = vst [vmem:[#allocation4 + $0x80] sm:$0xf] %v2264
    %2283 = vst [vmem:[#allocation4 + $0xb4] sm:$0xf] %v2265
    %2284 = vst [vmem:[#allocation4 + $0xe8] sm:$0xf] %v2266
    %2285 = vst [vmem:[#allocation4 + $0x11c] sm:$0xf] %v2267
    %2286 = vst [vmem:[#allocation4 + $0x150] sm:$0xf] %v2268
    %2287 = vst [vmem:[#allocation4 + $0x184] sm:$0xf] %v2269
    %2288 = vst [vmem:[#allocation4 + $0x1b8] sm:$0xf] %v2270
    %v2289 = vpack.c.bf16 %v1914, %v1913
    %v2290 = vpack.c.bf16 %v1916, %v1915
    %v2291 = vpack.c.bf16 %v1918, %v1917
    %v2292 = vpack.c.bf16 %v1920, %v1919
    %v2293 = vpack.c.bf16 %v1921, %v1921
    %v2299 = vunpack.c.l.b16 %v2289
    %v2300 = vunpack.c.h.b16 %v2289
    %v2301 = vunpack.c.l.b16 %v2290
    %v2302 = vunpack.c.h.b16 %v2290
    %v2303 = vunpack.c.l.b16 %v2291
    %v2304 = vunpack.c.h.b16 %v2291
    %v2305 = vunpack.c.l.b16 %v2292
    %v2306 = vunpack.c.h.b16 %v2292
    %v2307 = vunpack.c.l.b16 %v2293
    %v2308 = vpack.c.b16 %v2299, %v2299
    %v2309 = vpack.c.b16 %v2300, %v2300
    %v2310 = vpack.c.b16 %v2301, %v2301
    %v2311 = vpack.c.b16 %v2302, %v2302
    %v2312 = vpack.c.b16 %v2303, %v2303
    %v2313 = vpack.c.b16 %v2304, %v2304
    %v2314 = vpack.c.b16 %v2305, %v2305
    %v2315 = vpack.c.b16 %v2306, %v2306
    %v2316 = vpack.c.b16 %v2307, %v2307
    %2326 = vst [vmem:[#allocation4 + $0x1c] sm:$0xf] %v2308
    %2327 = vst [vmem:[#allocation4 + $0x50] sm:$0xf] %v2309
    %2328 = vst [vmem:[#allocation4 + $0x84] sm:$0xf] %v2310
    %2329 = vst [vmem:[#allocation4 + $0xb8] sm:$0xf] %v2311
    %2330 = vst [vmem:[#allocation4 + $0xec] sm:$0xf] %v2312
    %2331 = vst [vmem:[#allocation4 + $0x120] sm:$0xf] %v2313
    %2332 = vst [vmem:[#allocation4 + $0x154] sm:$0xf] %v2314
    %2333 = vst [vmem:[#allocation4 + $0x188] sm:$0xf] %v2315
    %2334 = vst [vmem:[#allocation4 + $0x1bc] sm:$0xf] %v2316
    %v2335 = vpack.c.bf16 %v1923, %v1922
    %v2336 = vpack.c.bf16 %v1925, %v1924
    %v2337 = vpack.c.bf16 %v1927, %v1926
    %v2338 = vpack.c.bf16 %v1929, %v1928
    %v2339 = vpack.c.bf16 %v1930, %v1930
    %v2345 = vunpack.c.l.b16 %v2335
    %v2346 = vunpack.c.h.b16 %v2335
    %v2347 = vunpack.c.l.b16 %v2336
    %v2348 = vunpack.c.h.b16 %v2336
    %v2349 = vunpack.c.l.b16 %v2337
    %v2350 = vunpack.c.h.b16 %v2337
    %v2351 = vunpack.c.l.b16 %v2338
    %v2352 = vunpack.c.h.b16 %v2338
    %v2353 = vunpack.c.l.b16 %v2339
    %v2354 = vpack.c.b16 %v2345, %v2345
    %v2355 = vpack.c.b16 %v2346, %v2346
    %v2356 = vpack.c.b16 %v2347, %v2347
    %v2357 = vpack.c.b16 %v2348, %v2348
    %v2358 = vpack.c.b16 %v2349, %v2349
    %v2359 = vpack.c.b16 %v2350, %v2350
    %v2360 = vpack.c.b16 %v2351, %v2351
    %v2361 = vpack.c.b16 %v2352, %v2352
    %v2362 = vpack.c.b16 %v2353, %v2353
    %2372 = vst [vmem:[#allocation4 + $0x20] sm:$0xf] %v2354
    %2373 = vst [vmem:[#allocation4 + $0x54] sm:$0xf] %v2355
    %2374 = vst [vmem:[#allocation4 + $0x88] sm:$0xf] %v2356
    %2375 = vst [vmem:[#allocation4 + $0xbc] sm:$0xf] %v2357
    %2376 = vst [vmem:[#allocation4 + $0xf0] sm:$0xf] %v2358
    %2377 = vst [vmem:[#allocation4 + $0x124] sm:$0xf] %v2359
    %2378 = vst [vmem:[#allocation4 + $0x158] sm:$0xf] %v2360
    %2379 = vst [vmem:[#allocation4 + $0x18c] sm:$0xf] %v2361
    %2380 = vst [vmem:[#allocation4 + $0x1c0] sm:$0xf] %v2362
    %v2381 = vpack.c.bf16 %v1932, %v1931
    %v2382 = vpack.c.bf16 %v1934, %v1933
    %v2383 = vpack.c.bf16 %v1936, %v1935
    %v2384 = vpack.c.bf16 %v1938, %v1937
    %v2385 = vpack.c.bf16 %v1939, %v1939
    %v2391 = vunpack.c.l.b16 %v2381
    %v2392 = vunpack.c.h.b16 %v2381
    %v2393 = vunpack.c.l.b16 %v2382
    %v2394 = vunpack.c.h.b16 %v2382
    %v2395 = vunpack.c.l.b16 %v2383
    %v2396 = vunpack.c.h.b16 %v2383
    %v2397 = vunpack.c.l.b16 %v2384
    %v2398 = vunpack.c.h.b16 %v2384
    %v2399 = vunpack.c.l.b16 %v2385
    %v2400 = vpack.c.b16 %v2391, %v2391
    %v2401 = vpack.c.b16 %v2392, %v2392
    %v2402 = vpack.c.b16 %v2393, %v2393
    %v2403 = vpack.c.b16 %v2394, %v2394
    %v2404 = vpack.c.b16 %v2395, %v2395
    %v2405 = vpack.c.b16 %v2396, %v2396
    %v2406 = vpack.c.b16 %v2397, %v2397
    %v2407 = vpack.c.b16 %v2398, %v2398
    %v2408 = vpack.c.b16 %v2399, %v2399
    %2418 = vst [vmem:[#allocation4 + $0x24] sm:$0xf] %v2400
    %2419 = vst [vmem:[#allocation4 + $0x58] sm:$0xf] %v2401
    %2420 = vst [vmem:[#allocation4 + $0x8c] sm:$0xf] %v2402
    %2421 = vst [vmem:[#allocation4 + $0xc0] sm:$0xf] %v2403
    %2422 = vst [vmem:[#allocation4 + $0xf4] sm:$0xf] %v2404
    %2423 = vst [vmem:[#allocation4 + $0x128] sm:$0xf] %v2405
    %2424 = vst [vmem:[#allocation4 + $0x15c] sm:$0xf] %v2406
    %2425 = vst [vmem:[#allocation4 + $0x190] sm:$0xf] %v2407
    %2426 = vst [vmem:[#allocation4 + $0x1c4] sm:$0xf] %v2408
    %v2427 = vpack.c.bf16 %v1941, %v1940
    %v2428 = vpack.c.bf16 %v1943, %v1942
    %v2429 = vpack.c.bf16 %v1945, %v1944
    %v2430 = vpack.c.bf16 %v1947, %v1946
    %v2431 = vpack.c.bf16 %v1948, %v1948
    %v2437 = vunpack.c.l.b16 %v2427
    %v2438 = vunpack.c.h.b16 %v2427
    %v2439 = vunpack.c.l.b16 %v2428
    %v2440 = vunpack.c.h.b16 %v2428
    %v2441 = vunpack.c.l.b16 %v2429
    %v2442 = vunpack.c.h.b16 %v2429
    %v2443 = vunpack.c.l.b16 %v2430
    %v2444 = vunpack.c.h.b16 %v2430
    %v2445 = vunpack.c.l.b16 %v2431
    %v2446 = vpack.c.b16 %v2437, %v2437
    %v2447 = vpack.c.b16 %v2438, %v2438
    %v2448 = vpack.c.b16 %v2439, %v2439
    %v2449 = vpack.c.b16 %v2440, %v2440
    %v2450 = vpack.c.b16 %v2441, %v2441
    %v2451 = vpack.c.b16 %v2442, %v2442
    %v2452 = vpack.c.b16 %v2443, %v2443
    %v2453 = vpack.c.b16 %v2444, %v2444
    %v2454 = vpack.c.b16 %v2445, %v2445
    %2464 = vst [vmem:[#allocation4 + $0x28] sm:$0xf] %v2446
    %2465 = vst [vmem:[#allocation4 + $0x5c] sm:$0xf] %v2447
    %2466 = vst [vmem:[#allocation4 + $0x90] sm:$0xf] %v2448
    %2467 = vst [vmem:[#allocation4 + $0xc4] sm:$0xf] %v2449
    %2468 = vst [vmem:[#allocation4 + $0xf8] sm:$0xf] %v2450
    %2469 = vst [vmem:[#allocation4 + $0x12c] sm:$0xf] %v2451
    %2470 = vst [vmem:[#allocation4 + $0x160] sm:$0xf] %v2452
    %2471 = vst [vmem:[#allocation4 + $0x194] sm:$0xf] %v2453
    %2472 = vst [vmem:[#allocation4 + $0x1c8] sm:$0xf] %v2454
    %v2473 = vpack.c.bf16 %v1950, %v1949
    %v2474 = vpack.c.bf16 %v1952, %v1951
    %v2475 = vpack.c.bf16 %v1954, %v1953
    %v2476 = vpack.c.bf16 %v1956, %v1955
    %v2477 = vpack.c.bf16 %v1957, %v1957
    %v2483 = vunpack.c.l.b16 %v2473
    %v2484 = vunpack.c.h.b16 %v2473
    %v2485 = vunpack.c.l.b16 %v2474
    %v2486 = vunpack.c.h.b16 %v2474
    %v2487 = vunpack.c.l.b16 %v2475
    %v2488 = vunpack.c.h.b16 %v2475
    %v2489 = vunpack.c.l.b16 %v2476
    %v2490 = vunpack.c.h.b16 %v2476
    %v2491 = vunpack.c.l.b16 %v2477
    %v2492 = vpack.c.b16 %v2483, %v2483
    %v2493 = vpack.c.b16 %v2484, %v2484
    %v2494 = vpack.c.b16 %v2485, %v2485
    %v2495 = vpack.c.b16 %v2486, %v2486
    %v2496 = vpack.c.b16 %v2487, %v2487
    %v2497 = vpack.c.b16 %v2488, %v2488
    %v2498 = vpack.c.b16 %v2489, %v2489
    %v2499 = vpack.c.b16 %v2490, %v2490
    %v2500 = vpack.c.b16 %v2491, %v2491
    %2510 = vst [vmem:[#allocation4 + $0x2c] sm:$0xf] %v2492
    %2511 = vst [vmem:[#allocation4 + $0x60] sm:$0xf] %v2493
    %2512 = vst [vmem:[#allocation4 + $0x94] sm:$0xf] %v2494
    %2513 = vst [vmem:[#allocation4 + $0xc8] sm:$0xf] %v2495
    %2514 = vst [vmem:[#allocation4 + $0xfc] sm:$0xf] %v2496
    %2515 = vst [vmem:[#allocation4 + $0x130] sm:$0xf] %v2497
    %2516 = vst [vmem:[#allocation4 + $0x164] sm:$0xf] %v2498
    %2517 = vst [vmem:[#allocation4 + $0x198] sm:$0xf] %v2499
    %2518 = vst [vmem:[#allocation4 + $0x1cc] sm:$0xf] %v2500
    %v2519 = vpack.c.bf16 %v1959, %v1958
    %v2520 = vpack.c.bf16 %v1961, %v1960
    %v2521 = vpack.c.bf16 %v1963, %v1962
    %v2522 = vpack.c.bf16 %v1965, %v1964
    %v2523 = vpack.c.bf16 %v1966, %v1966
    %v2529 = vunpack.c.l.b16 %v2519
    %v2530 = vunpack.c.h.b16 %v2519
    %v2531 = vunpack.c.l.b16 %v2520
    %v2532 = vunpack.c.h.b16 %v2520
    %v2533 = vunpack.c.l.b16 %v2521
    %v2534 = vunpack.c.h.b16 %v2521
    %v2535 = vunpack.c.l.b16 %v2522
    %v2536 = vunpack.c.h.b16 %v2522
    %v2537 = vunpack.c.l.b16 %v2523
    %v2538 = vpack.c.b16 %v2529, %v2529
    %v2539 = vpack.c.b16 %v2530, %v2530
    %v2540 = vpack.c.b16 %v2531, %v2531
    %v2541 = vpack.c.b16 %v2532, %v2532
    %v2542 = vpack.c.b16 %v2533, %v2533
    %v2543 = vpack.c.b16 %v2534, %v2534
    %v2544 = vpack.c.b16 %v2535, %v2535
    %v2545 = vpack.c.b16 %v2536, %v2536
    %v2546 = vpack.c.b16 %v2537, %v2537
    %2556 = vst [vmem:[#allocation4 + $0x30] sm:$0xf] %v2538
    %2557 = vst [vmem:[#allocation4 + $0x64] sm:$0xf] %v2539
    %2558 = vst [vmem:[#allocation4 + $0x98] sm:$0xf] %v2540
    %2559 = vst [vmem:[#allocation4 + $0xcc] sm:$0xf] %v2541
    %2560 = vst [vmem:[#allocation4 + $0x100] sm:$0xf] %v2542
    %2561 = vst [vmem:[#allocation4 + $0x134] sm:$0xf] %v2543
    %2562 = vst [vmem:[#allocation4 + $0x168] sm:$0xf] %v2544
    %2563 = vst [vmem:[#allocation4 + $0x19c] sm:$0xf] %v2545
    %2564 = vst [vmem:[#allocation4 + $0x1d0] sm:$0xf] %v2546
    %s2565 = smul.u32 4, 208
    %s2566 = smul.u32 %s2565, 1
    %s2567 = sshll.u32 %s2566, 4
    %2568 = dma.done [#allocation6], %s2567
    %v2569 = vld [vmem:[#allocation4] sm:$0xff]
    %v2570 = vld [vmem:[#allocation4 + $0x8] sm:$0xff]
    %v2571 = vld [vmem:[#allocation4 + $0x10] sm:$0xff]
    %v2572 = vld [vmem:[#allocation4 + $0x18] sm:$0xff]
    %v2573 = vld [vmem:[#allocation4 + $0x20] sm:$0xff]
    %v2574 = vld [vmem:[#allocation4 + $0x28] sm:$0xff]
    %v2575 = vld [vmem:[#allocation4 + $0x30] sm:$0xf]
    %v2576 = vld [vmem:[#allocation4 + $0x34] sm:$0xff]
    %v2577 = vld [vmem:[#allocation4 + $0x3c] sm:$0xff]
    %v2578 = vld [vmem:[#allocation4 + $0x44] sm:$0xff]
    %v2579 = vld [vmem:[#allocation4 + $0x4c] sm:$0xff]
    %v2580 = vld [vmem:[#allocation4 + $0x54] sm:$0xff]
    %v2581 = vld [vmem:[#allocation4 + $0x5c] sm:$0xff]
    %v2582 = vld [vmem:[#allocation4 + $0x64] sm:$0xf]
    %v2583 = vld [vmem:[#allocation4 + $0x68] sm:$0xff]
    %v2584 = vld [vmem:[#allocation4 + $0x70] sm:$0xff]
    %v2585 = vld [vmem:[#allocation4 + $0x78] sm:$0xff]
    %v2586 = vld [vmem:[#allocation4 + $0x80] sm:$0xff]
    %v2587 = vld [vmem:[#allocation4 + $0x88] sm:$0xff]
    %v2588 = vld [vmem:[#allocation4 + $0x90] sm:$0xff]
    %v2589 = vld [vmem:[#allocation4 + $0x98] sm:$0xf]
    %v2590 = vld [vmem:[#allocation4 + $0x9c] sm:$0xff]
    %v2591 = vld [vmem:[#allocation4 + $0xa4] sm:$0xff]
    %v2592 = vld [vmem:[#allocation4 + $0xac] sm:$0xff]
    %v2593 = vld [vmem:[#allocation4 + $0xb4] sm:$0xff]
    %v2594 = vld [vmem:[#allocation4 + $0xbc] sm:$0xff]
    %v2595 = vld [vmem:[#allocation4 + $0xc4] sm:$0xff]
    %v2596 = vld [vmem:[#allocation4 + $0xcc] sm:$0xf]
    %v2597 = vld [vmem:[#allocation4 + $0xd0] sm:$0xff]
    %v2598 = vld [vmem:[#allocation4 + $0xd8] sm:$0xff]
    %v2599 = vld [vmem:[#allocation4 + $0xe0] sm:$0xff]
    %v2600 = vld [vmem:[#allocation4 + $0xe8] sm:$0xff]
    %v2601 = vld [vmem:[#allocation4 + $0xf0] sm:$0xff]
    %v2602 = vld [vmem:[#allocation4 + $0xf8] sm:$0xff]
    %v2603 = vld [vmem:[#allocation4 + $0x100] sm:$0xf]
    %v2604 = vld [vmem:[#allocation4 + $0x104] sm:$0xff]
    %v2605 = vld [vmem:[#allocation4 + $0x10c] sm:$0xff]
    %v2606 = vld [vmem:[#allocation4 + $0x114] sm:$0xff]
    %v2607 = vld [vmem:[#allocation4 + $0x11c] sm:$0xff]
    %v2608 = vld [vmem:[#allocation4 + $0x124] sm:$0xff]
    %v2609 = vld [vmem:[#allocation4 + $0x12c] sm:$0xff]
    %v2610 = vld [vmem:[#allocation4 + $0x134] sm:$0xf]
    %v2611 = vld [vmem:[#allocation4 + $0x138] sm:$0xff]
    %v2612 = vld [vmem:[#allocation4 + $0x140] sm:$0xff]
    %v2613 = vld [vmem:[#allocation4 + $0x148] sm:$0xff]
    %v2614 = vld [vmem:[#allocation4 + $0x150] sm:$0xff]
    %v2615 = vld [vmem:[#allocation4 + $0x158] sm:$0xff]
    %v2616 = vld [vmem:[#allocation4 + $0x160] sm:$0xff]
    %v2617 = vld [vmem:[#allocation4 + $0x168] sm:$0xf]
    %v2618 = vld [vmem:[#allocation4 + $0x16c] sm:$0xff]
    %v2619 = vld [vmem:[#allocation4 + $0x174] sm:$0xff]
    %v2620 = vld [vmem:[#allocation4 + $0x17c] sm:$0xff]
    %v2621 = vld [vmem:[#allocation4 + $0x184] sm:$0xff]
    %v2622 = vld [vmem:[#allocation4 + $0x18c] sm:$0xff]
    %v2623 = vld [vmem:[#allocation4 + $0x194] sm:$0xff]
    %v2624 = vld [vmem:[#allocation4 + $0x19c] sm:$0xf]
    %v2625 = vld [vmem:[#allocation4 + $0x1a0] sm:$0xff]
    %v2626 = vld [vmem:[#allocation4 + $0x1a8] sm:$0xff]
    %v2627 = vld [vmem:[#allocation4 + $0x1b0] sm:$0xff]
    %v2628 = vld [vmem:[#allocation4 + $0x1b8] sm:$0xff]
    %v2629 = vld [vmem:[#allocation4 + $0x1c0] sm:$0xff]
    %v2630 = vld [vmem:[#allocation4 + $0x1c8] sm:$0xff]
    %v2631 = vld [vmem:[#allocation4 + $0x1d0] sm:$0xf]
    %v2632 = vld [vmem:[#allocation2] sm:$0xf]
    %v2633 = vld [vmem:[#allocation2 + $0x4] sm:$0xf]
    %v2634 = vld [vmem:[#allocation2 + $0x8] sm:$0xf]
    %v2635 = vld [vmem:[#allocation2 + $0xc] sm:$0xf]
    %v2636 = vld [vmem:[#allocation2 + $0x10] sm:$0xf]
    %v2637 = vld [vmem:[#allocation2 + $0x14] sm:$0xf]
    %v2638 = vld [vmem:[#allocation2 + $0x18] sm:$0xf]
    %v2639 = vld [vmem:[#allocation2 + $0x1c] sm:$0xf]
    %v2640 = vld [vmem:[#allocation2 + $0x20] sm:$0xf]
    %v2641 = vld [vmem:[#allocation2 + $0x24] sm:$0xf]
    %v2642 = vld [vmem:[#allocation2 + $0x28] sm:$0xf]
    %v2643 = vld [vmem:[#allocation2 + $0x2c] sm:$0xf]
    %v2644 = vld [vmem:[#allocation2 + $0x30] sm:$0xf]
    %v2645 = vld [vmem:[#allocation2 + $0x34] sm:$0xf]
    %v2646 = vld [vmem:[#allocation2 + $0x38] sm:$0xf]
    %v2647 = vld [vmem:[#allocation2 + $0x3c] sm:$0xf]
    %v2648 = vld [vmem:[#allocation2 + $0x40] sm:$0xf]
    %v2649 = vld [vmem:[#allocation2 + $0x44] sm:$0xf]
    %v2650 = vld [vmem:[#allocation2 + $0x48] sm:$0xf]
    %v2651 = vld [vmem:[#allocation2 + $0x4c] sm:$0xf]
    %v2652 = vld [vmem:[#allocation2 + $0x50] sm:$0xf]
    %v2653 = vld [vmem:[#allocation2 + $0x54] sm:$0xf]
    %v2654 = vld [vmem:[#allocation2 + $0x58] sm:$0xf]
    %v2655 = vld [vmem:[#allocation2 + $0x5c] sm:$0xf]
    %v2656 = vld [vmem:[#allocation2 + $0x60] sm:$0xf]
    %v2657 = vld [vmem:[#allocation2 + $0x64] sm:$0xf]
    %v2658 = vld [vmem:[#allocation2 + $0x68] sm:$0xf]
    %v2659 = vld [vmem:[#allocation2 + $0x6c] sm:$0xf]
    %v2660 = vld [vmem:[#allocation2 + $0x70] sm:$0xf]
    %v2661 = vld [vmem:[#allocation2 + $0x74] sm:$0xf]
    %v2662 = vld [vmem:[#allocation2 + $0x78] sm:$0xf]
    %v2663 = vld [vmem:[#allocation2 + $0x7c] sm:$0xf]
    %v2664 = vld [vmem:[#allocation2 + $0x80] sm:$0xf]
    %v2665 = vld [vmem:[#allocation2 + $0x84] sm:$0xf]
    %v2666 = vld [vmem:[#allocation2 + $0x88] sm:$0xf]
    %v2667 = vld [vmem:[#allocation2 + $0x8c] sm:$0xf]
    %v2668 = vld [vmem:[#allocation2 + $0x90] sm:$0xf]
    %v2669 = vld [vmem:[#allocation2 + $0x94] sm:$0xf]
    %v2670 = vld [vmem:[#allocation2 + $0x98] sm:$0xf]
    %v2671 = vld [vmem:[#allocation2 + $0x9c] sm:$0xf]
    %v2672 = vld [vmem:[#allocation2 + $0xa0] sm:$0xf]
    %v2673 = vld [vmem:[#allocation2 + $0xa4] sm:$0xf]
    %v2674 = vld [vmem:[#allocation2 + $0xa8] sm:$0xf]
    %v2675 = vld [vmem:[#allocation2 + $0xac] sm:$0xf]
    %v2676 = vld [vmem:[#allocation2 + $0xb0] sm:$0xf]
    %v2677 = vld [vmem:[#allocation2 + $0xb4] sm:$0xf]
    %v2678 = vld [vmem:[#allocation2 + $0xb8] sm:$0xf]
    %v2679 = vld [vmem:[#allocation2 + $0xbc] sm:$0xf]
    %v2680 = vld [vmem:[#allocation2 + $0xc0] sm:$0xf]
    %v2681 = vld [vmem:[#allocation2 + $0xc4] sm:$0xf]
    %v2682 = vld [vmem:[#allocation2 + $0xc8] sm:$0xf]
    %v2683 = vld [vmem:[#allocation2 + $0xcc] sm:$0xf]
    %v2684 = vld [vmem:[#allocation2 + $0xd0] sm:$0xf]
    %v2685 = vld [vmem:[#allocation2 + $0xd4] sm:$0xf]
    %v2686 = vld [vmem:[#allocation2 + $0xd8] sm:$0xf]
    %v2687 = vld [vmem:[#allocation2 + $0xdc] sm:$0xf]
    %v2688 = vld [vmem:[#allocation2 + $0xe0] sm:$0xf]
    %v2689 = vld [vmem:[#allocation2 + $0xe4] sm:$0xf]
    %v2690 = vld [vmem:[#allocation2 + $0xe8] sm:$0xf]
    %v2691 = vld [vmem:[#allocation2 + $0xec] sm:$0xf]
    %v2692 = vld [vmem:[#allocation2 + $0xf0] sm:$0xf]
    %v2693 = vld [vmem:[#allocation2 + $0xf4] sm:$0xf]
    %v2694 = vld [vmem:[#allocation2 + $0xf8] sm:$0xf]
    %v2695 = vld [vmem:[#allocation2 + $0xfc] sm:$0xf]
    %v2696 = vld [vmem:[#allocation2 + $0x100] sm:$0xf]
    %v2697 = vld [vmem:[#allocation2 + $0x104] sm:$0xf]
    %v2698 = vld [vmem:[#allocation2 + $0x108] sm:$0xf]
    %v2699 = vld [vmem:[#allocation2 + $0x10c] sm:$0xf]
    %v2700 = vld [vmem:[#allocation2 + $0x110] sm:$0xf]
    %v2701 = vld [vmem:[#allocation2 + $0x114] sm:$0xf]
    %v2702 = vld [vmem:[#allocation2 + $0x118] sm:$0xf]
    %v2703 = vld [vmem:[#allocation2 + $0x11c] sm:$0xf]
    %v2704 = vld [vmem:[#allocation2 + $0x120] sm:$0xf]
    %v2705 = vld [vmem:[#allocation2 + $0x124] sm:$0xf]
    %v2706 = vld [vmem:[#allocation2 + $0x128] sm:$0xf]
    %v2707 = vld [vmem:[#allocation2 + $0x12c] sm:$0xf]
    %v2708 = vld [vmem:[#allocation2 + $0x130] sm:$0xf]
    %v2709 = vld [vmem:[#allocation2 + $0x134] sm:$0xf]
    %v2710 = vld [vmem:[#allocation2 + $0x138] sm:$0xf]
    %v2711 = vld [vmem:[#allocation2 + $0x13c] sm:$0xf]
    %v2712 = vld [vmem:[#allocation2 + $0x140] sm:$0xf]
    %v2713 = vld [vmem:[#allocation2 + $0x144] sm:$0xf]
    %v2714 = vld [vmem:[#allocation2 + $0x148] sm:$0xf]
    %v2715 = vld [vmem:[#allocation2 + $0x14c] sm:$0xf]
    %v2716 = vld [vmem:[#allocation2 + $0x150] sm:$0xf]
    %v2717 = vld [vmem:[#allocation2 + $0x154] sm:$0xf]
    %v2718 = vld [vmem:[#allocation2 + $0x158] sm:$0xf]
    %v2719 = vld [vmem:[#allocation2 + $0x15c] sm:$0xf]
    %v2720 = vld [vmem:[#allocation2 + $0x160] sm:$0xf]
    %v2721 = vld [vmem:[#allocation2 + $0x164] sm:$0xf]
    %v2722 = vld [vmem:[#allocation2 + $0x168] sm:$0xf]
    %v2723 = vld [vmem:[#allocation2 + $0x16c] sm:$0xf]
    %v2724 = vld [vmem:[#allocation2 + $0x170] sm:$0xf]
    %v2725 = vld [vmem:[#allocation2 + $0x174] sm:$0xf]
    %v2726 = vld [vmem:[#allocation2 + $0x178] sm:$0xf]
    %v2727 = vld [vmem:[#allocation2 + $0x17c] sm:$0xf]
    %v2728 = vld [vmem:[#allocation2 + $0x180] sm:$0xf]
    %v2729 = vld [vmem:[#allocation2 + $0x184] sm:$0xf]
    %v2730 = vld [vmem:[#allocation2 + $0x188] sm:$0xf]
    %v2731 = vld [vmem:[#allocation2 + $0x18c] sm:$0xf]
    %v2732 = vld [vmem:[#allocation2 + $0x190] sm:$0xf]
    %v2733 = vld [vmem:[#allocation2 + $0x194] sm:$0xf]
    %v2734 = vld [vmem:[#allocation2 + $0x198] sm:$0xf]
    %v2735 = vld [vmem:[#allocation2 + $0x19c] sm:$0xf]
    %v2736 = vld [vmem:[#allocation2 + $0x1a0] sm:$0xf]
    %v2737 = vld [vmem:[#allocation2 + $0x1a4] sm:$0xf]
    %v2738 = vld [vmem:[#allocation2 + $0x1a8] sm:$0xf]
    %v2739 = vld [vmem:[#allocation2 + $0x1ac] sm:$0xf]
    %v2740 = vld [vmem:[#allocation2 + $0x1b0] sm:$0xf]
    %v2741 = vld [vmem:[#allocation2 + $0x1b4] sm:$0xf]
    %v2742 = vld [vmem:[#allocation2 + $0x1b8] sm:$0xf]
    %v2743 = vld [vmem:[#allocation2 + $0x1bc] sm:$0xf]
    %v2744 = vld [vmem:[#allocation2 + $0x1c0] sm:$0xf]
    %v2745 = vld [vmem:[#allocation2 + $0x1c4] sm:$0xf]
    %v2746 = vld [vmem:[#allocation2 + $0x1c8] sm:$0xf]
    %v2747 = vld [vmem:[#allocation2 + $0x1cc] sm:$0xf]
    %v2748 = vld [vmem:[#allocation2 + $0x1d0] sm:$0xf]
    %v2749 = vld [vmem:[#allocation2 + $0x1d4] sm:$0xf]
    %v2750 = vld [vmem:[#allocation2 + $0x1d8] sm:$0xf]
    %v2751 = vld [vmem:[#allocation2 + $0x1dc] sm:$0xf]
    %v2752 = vld [vmem:[#allocation2 + $0x1e0] sm:$0xf]
    %v2753 = vld [vmem:[#allocation2 + $0x1e4] sm:$0xf]
    %v2754 = vld [vmem:[#allocation2 + $0x1e8] sm:$0xf]
    %v2755 = vld [vmem:[#allocation2 + $0x1ec] sm:$0xf]
    %v2756 = vld [vmem:[#allocation2 + $0x1f0] sm:$0xf]
    %v2757 = vld [vmem:[#allocation2 + $0x1f4] sm:$0xf]
    %v2758 = vld [vmem:[#allocation2 + $0x1f8] sm:$0xf]
    %v2759 = vld [vmem:[#allocation2 + $0x1fc] sm:$0xf]
    %v2760 = vld [vmem:[#allocation2 + $0x200] sm:$0xf]
    %v2761 = vld [vmem:[#allocation2 + $0x204] sm:$0xf]
    %v2762 = vld [vmem:[#allocation2 + $0x208] sm:$0xf]
    %v2763 = vld [vmem:[#allocation2 + $0x20c] sm:$0xf]
    %v2764 = vld [vmem:[#allocation2 + $0x210] sm:$0xf]
    %v2765 = vld [vmem:[#allocation2 + $0x214] sm:$0xf]
    %v2766 = vld [vmem:[#allocation2 + $0x218] sm:$0xf]
    %v2767 = vld [vmem:[#allocation2 + $0x21c] sm:$0xf]
    %v2768 = vld [vmem:[#allocation2 + $0x220] sm:$0xf]
    %v2769 = vld [vmem:[#allocation2 + $0x224] sm:$0xf]
    %v2770 = vld [vmem:[#allocation2 + $0x228] sm:$0xf]
    %v2771 = vld [vmem:[#allocation2 + $0x22c] sm:$0xf]
    %v2772 = vld [vmem:[#allocation2 + $0x230] sm:$0xf]
    %v2773 = vld [vmem:[#allocation2 + $0x234] sm:$0xf]
    %v2774 = vld [vmem:[#allocation2 + $0x238] sm:$0xf]
    %v2775 = vld [vmem:[#allocation2 + $0x23c] sm:$0xf]
    %v2776 = vld [vmem:[#allocation2 + $0x240] sm:$0xf]
    %v2777 = vld [vmem:[#allocation2 + $0x244] sm:$0xf]
    %v2778 = vld [vmem:[#allocation2 + $0x248] sm:$0xf]
    %v2779 = vld [vmem:[#allocation2 + $0x24c] sm:$0xf]
    %v2780 = vld [vmem:[#allocation2 + $0x250] sm:$0xf]
    %v2781 = vld [vmem:[#allocation2 + $0x254] sm:$0xf]
    %v2782 = vld [vmem:[#allocation2 + $0x258] sm:$0xf]
    %v2783 = vld [vmem:[#allocation2 + $0x25c] sm:$0xf]
    %v2784 = vld [vmem:[#allocation2 + $0x260] sm:$0xf]
    %v2785 = vld [vmem:[#allocation2 + $0x264] sm:$0xf]
    %v2786 = vld [vmem:[#allocation2 + $0x268] sm:$0xf]
    %v2787 = vld [vmem:[#allocation2 + $0x26c] sm:$0xf]
    %v2788 = vld [vmem:[#allocation2 + $0x270] sm:$0xf]
    %v2789 = vld [vmem:[#allocation2 + $0x274] sm:$0xf]
    %v2790 = vld [vmem:[#allocation2 + $0x278] sm:$0xf]
    %v2791 = vld [vmem:[#allocation2 + $0x27c] sm:$0xf]
    %v2792 = vld [vmem:[#allocation2 + $0x280] sm:$0xf]
    %v2793 = vld [vmem:[#allocation2 + $0x284] sm:$0xf]
    %v2794 = vld [vmem:[#allocation2 + $0x288] sm:$0xf]
    %v2795 = vld [vmem:[#allocation2 + $0x28c] sm:$0xf]
    %v2796 = vld [vmem:[#allocation2 + $0x290] sm:$0xf]
    %v2797 = vld [vmem:[#allocation2 + $0x294] sm:$0xf]
    %v2798 = vld [vmem:[#allocation2 + $0x298] sm:$0xf]
    %v2799 = vld [vmem:[#allocation2 + $0x29c] sm:$0xf]
    %v2800 = vld [vmem:[#allocation2 + $0x2a0] sm:$0xf]
    %v2801 = vld [vmem:[#allocation2 + $0x2a4] sm:$0xf]
    %v2802 = vld [vmem:[#allocation2 + $0x2a8] sm:$0xf]
    %v2803 = vld [vmem:[#allocation2 + $0x2ac] sm:$0xf]
    %v2804 = vld [vmem:[#allocation2 + $0x2b0] sm:$0xf]
    %v2805 = vld [vmem:[#allocation2 + $0x2b4] sm:$0xf]
    %v2806 = vld [vmem:[#allocation2 + $0x2b8] sm:$0xf]
    %v2807 = vld [vmem:[#allocation2 + $0x2bc] sm:$0xf]
    %v2808 = vld [vmem:[#allocation2 + $0x2c0] sm:$0xf]
    %v2809 = vld [vmem:[#allocation2 + $0x2c4] sm:$0xf]
    %v2810 = vld [vmem:[#allocation2 + $0x2c8] sm:$0xf]
    %v2811 = vld [vmem:[#allocation2 + $0x2cc] sm:$0xf]
    %v2812 = vld [vmem:[#allocation2 + $0x2d0] sm:$0xf]
    %v2813 = vld [vmem:[#allocation2 + $0x2d4] sm:$0xf]
    %v2814 = vld [vmem:[#allocation2 + $0x2d8] sm:$0xf]
    %v2815 = vld [vmem:[#allocation2 + $0x2dc] sm:$0xf]
    %v2816 = vld [vmem:[#allocation2 + $0x2e0] sm:$0xf]
    %v2817 = vld [vmem:[#allocation2 + $0x2e4] sm:$0xf]
    %v2818 = vld [vmem:[#allocation2 + $0x2e8] sm:$0xf]
    %v2819 = vld [vmem:[#allocation2 + $0x2ec] sm:$0xf]
    %v2820 = vld [vmem:[#allocation2 + $0x2f0] sm:$0xf]
    %v2821 = vld [vmem:[#allocation2 + $0x2f4] sm:$0xf]
    %v2822 = vld [vmem:[#allocation2 + $0x2f8] sm:$0xf]
    %v2823 = vld [vmem:[#allocation2 + $0x2fc] sm:$0xf]
    %v2824 = vld [vmem:[#allocation2 + $0x300] sm:$0xf]
    %v2825 = vld [vmem:[#allocation2 + $0x304] sm:$0xf]
    %v2826 = vld [vmem:[#allocation2 + $0x308] sm:$0xf]
    %v2827 = vld [vmem:[#allocation2 + $0x30c] sm:$0xf]
    %v2828 = vld [vmem:[#allocation2 + $0x310] sm:$0xf]
    %v2829 = vld [vmem:[#allocation2 + $0x314] sm:$0xf]
    %v2830 = vld [vmem:[#allocation2 + $0x318] sm:$0xf]
    %v2831 = vld [vmem:[#allocation2 + $0x31c] sm:$0xf]
    %v2832 = vld [vmem:[#allocation2 + $0x320] sm:$0xf]
    %v2833 = vld [vmem:[#allocation2 + $0x324] sm:$0xf]
    %v2834 = vld [vmem:[#allocation2 + $0x328] sm:$0xf]
    %v2835 = vld [vmem:[#allocation2 + $0x32c] sm:$0xf]
    %v2836 = vld [vmem:[#allocation2 + $0x330] sm:$0xf]
    %v2837 = vld [vmem:[#allocation2 + $0x334] sm:$0xf]
    %v2838 = vld [vmem:[#allocation2 + $0x338] sm:$0xf]
    %v2839 = vld [vmem:[#allocation2 + $0x33c] sm:$0xf]
    %v2840 = vld [vmem:[%s6] sm:$0x1]
    %v2842 = vlaneseq
    %v2843 = vshrl.u32 %v2842, 7
    %v2844 = vsub.s32 0, %v2843
    %v2845 = vrot.slane %v2840, %v2844
    %v2910 = vunpack.c.l.b16 %v2569
    %v2911 = vunpack.c.h.b16 %v2569
    %v2912 = vunpack.c.l.b16 %v2570
    %v2913 = vunpack.c.h.b16 %v2570
    %v2914 = vunpack.c.l.b16 %v2571
    %v2915 = vunpack.c.h.b16 %v2571
    %v2916 = vunpack.c.l.b16 %v2572
    %v2917 = vunpack.c.h.b16 %v2572
    %v2918 = vunpack.c.l.b16 %v2573
    %v2919 = vunpack.c.h.b16 %v2573
    %v2920 = vunpack.c.l.b16 %v2574
    %v2921 = vunpack.c.h.b16 %v2574
    %v2922 = vunpack.c.l.b16 %v2575
    %v2923 = vunpack.c.l.b16 %v2576
    %v2924 = vunpack.c.h.b16 %v2576
    %v2925 = vunpack.c.l.b16 %v2577
    %v2926 = vunpack.c.h.b16 %v2577
    %v2927 = vunpack.c.l.b16 %v2578
    %v2928 = vunpack.c.h.b16 %v2578
    %v2929 = vunpack.c.l.b16 %v2579
    %v2930 = vunpack.c.h.b16 %v2579
    %v2931 = vunpack.c.l.b16 %v2580
    %v2932 = vunpack.c.h.b16 %v2580
    %v2933 = vunpack.c.l.b16 %v2581
    %v2934 = vunpack.c.h.b16 %v2581
    %v2935 = vunpack.c.l.b16 %v2582
    %v2936 = vunpack.c.l.b16 %v2583
    %v2937 = vunpack.c.h.b16 %v2583
    %v2938 = vunpack.c.l.b16 %v2584
    %v2939 = vunpack.c.h.b16 %v2584
    %v2940 = vunpack.c.l.b16 %v2585
    %v2941 = vunpack.c.h.b16 %v2585
    %v2942 = vunpack.c.l.b16 %v2586
    %v2943 = vunpack.c.h.b16 %v2586
    %v2944 = vunpack.c.l.b16 %v2587
    %v2945 = vunpack.c.h.b16 %v2587
    %v2946 = vunpack.c.l.b16 %v2588
    %v2947 = vunpack.c.h.b16 %v2588
    %v2948 = vunpack.c.l.b16 %v2589
    %v2949 = vunpack.c.l.b16 %v2590
    %v2950 = vunpack.c.h.b16 %v2590
    %v2951 = vunpack.c.l.b16 %v2591
    %v2952 = vunpack.c.h.b16 %v2591
    %v2953 = vunpack.c.l.b16 %v2592
    %v2954 = vunpack.c.h.b16 %v2592
    %v2955 = vunpack.c.l.b16 %v2593
    %v2956 = vunpack.c.h.b16 %v2593
    %v2957 = vunpack.c.l.b16 %v2594
    %v2958 = vunpack.c.h.b16 %v2594
    %v2959 = vunpack.c.l.b16 %v2595
    %v2960 = vunpack.c.h.b16 %v2595
    %v2961 = vunpack.c.l.b16 %v2596
    %v2962 = vunpack.c.l.b16 %v2597
    %v2963 = vunpack.c.h.b16 %v2597
    %v2964 = vunpack.c.l.b16 %v2598
    %v2965 = vunpack.c.h.b16 %v2598
    %v2966 = vunpack.c.l.b16 %v2599
    %v2967 = vunpack.c.h.b16 %v2599
    %v2968 = vunpack.c.l.b16 %v2600
    %v2969 = vunpack.c.h.b16 %v2600
    %v2970 = vunpack.c.l.b16 %v2601
    %v2971 = vunpack.c.h.b16 %v2601
    %v2972 = vunpack.c.l.b16 %v2602
    %v2973 = vunpack.c.h.b16 %v2602
    %v2974 = vunpack.c.l.b16 %v2603
    %v2975 = vunpack.c.l.b16 %v2604
    %v2976 = vunpack.c.h.b16 %v2604
    %v2977 = vunpack.c.l.b16 %v2605
    %v2978 = vunpack.c.h.b16 %v2605
    %v2979 = vunpack.c.l.b16 %v2606
    %v2980 = vunpack.c.h.b16 %v2606
    %v2981 = vunpack.c.l.b16 %v2607
    %v2982 = vunpack.c.h.b16 %v2607
    %v2983 = vunpack.c.l.b16 %v2608
    %v2984 = vunpack.c.h.b16 %v2608
    %v2985 = vunpack.c.l.b16 %v2609
    %v2986 = vunpack.c.h.b16 %v2609
    %v2987 = vunpack.c.l.b16 %v2610
    %v2988 = vunpack.c.l.b16 %v2611
    %v2989 = vunpack.c.h.b16 %v2611
    %v2990 = vunpack.c.l.b16 %v2612
    %v2991 = vunpack.c.h.b16 %v2612
    %v2992 = vunpack.c.l.b16 %v2613
    %v2993 = vunpack.c.h.b16 %v2613
    %v2994 = vunpack.c.l.b16 %v2614
    %v2995 = vunpack.c.h.b16 %v2614
    %v2996 = vunpack.c.l.b16 %v2615
    %v2997 = vunpack.c.h.b16 %v2615
    %v2998 = vunpack.c.l.b16 %v2616
    %v2999 = vunpack.c.h.b16 %v2616
    %v3000 = vunpack.c.l.b16 %v2617
    %v3001 = vunpack.c.l.b16 %v2618
    %v3002 = vunpack.c.h.b16 %v2618
    %v3003 = vunpack.c.l.b16 %v2619
    %v3004 = vunpack.c.h.b16 %v2619
    %v3005 = vunpack.c.l.b16 %v2620
    %v3006 = vunpack.c.h.b16 %v2620
    %v3007 = vunpack.c.l.b16 %v2621
    %v3008 = vunpack.c.h.b16 %v2621
    %v3009 = vunpack.c.l.b16 %v2622
    %v3010 = vunpack.c.h.b16 %v2622
    %v3011 = vunpack.c.l.b16 %v2623
    %v3012 = vunpack.c.h.b16 %v2623
    %v3013 = vunpack.c.l.b16 %v2624
    %v3014 = vunpack.c.l.b16 %v2625
    %v3015 = vunpack.c.h.b16 %v2625
    %v3016 = vunpack.c.l.b16 %v2626
    %v3017 = vunpack.c.h.b16 %v2626
    %v3018 = vunpack.c.l.b16 %v2627
    %v3019 = vunpack.c.h.b16 %v2627
    %v3020 = vunpack.c.l.b16 %v2628
    %v3021 = vunpack.c.h.b16 %v2628
    %v3022 = vunpack.c.l.b16 %v2629
    %v3023 = vunpack.c.h.b16 %v2629
    %v3024 = vunpack.c.l.b16 %v2630
    %v3025 = vunpack.c.h.b16 %v2630
    %v3026 = vunpack.c.l.b16 %v2631
    %v3027 = vpack.c.b16 %v2923, %v2910
    %v3028 = vpack.c.b16 %v2924, %v2911
    %v3029 = vpack.c.b16 %v2925, %v2912
    %v3030 = vpack.c.b16 %v2926, %v2913
    %v3031 = vpack.c.b16 %v2927, %v2914
    %v3032 = vpack.c.b16 %v2928, %v2915
    %v3033 = vpack.c.b16 %v2929, %v2916
    %v3034 = vpack.c.b16 %v2930, %v2917
    %v3035 = vpack.c.b16 %v2931, %v2918
    %v3036 = vpack.c.b16 %v2932, %v2919
    %v3037 = vpack.c.b16 %v2933, %v2920
    %v3038 = vpack.c.b16 %v2934, %v2921
    %v3039 = vpack.c.b16 %v2935, %v2922
    %v3040 = vpack.c.b16 %v2949, %v2936
    %v3041 = vpack.c.b16 %v2950, %v2937
    %v3042 = vpack.c.b16 %v2951, %v2938
    %v3043 = vpack.c.b16 %v2952, %v2939
    %v3044 = vpack.c.b16 %v2953, %v2940
    %v3045 = vpack.c.b16 %v2954, %v2941
    %v3046 = vpack.c.b16 %v2955, %v2942
    %v3047 = vpack.c.b16 %v2956, %v2943
    %v3048 = vpack.c.b16 %v2957, %v2944
    %v3049 = vpack.c.b16 %v2958, %v2945
    %v3050 = vpack.c.b16 %v2959, %v2946
    %v3051 = vpack.c.b16 %v2960, %v2947
    %v3052 = vpack.c.b16 %v2961, %v2948
    %v3053 = vpack.c.b16 %v2975, %v2962
    %v3054 = vpack.c.b16 %v2976, %v2963
    %v3055 = vpack.c.b16 %v2977, %v2964
    %v3056 = vpack.c.b16 %v2978, %v2965
    %v3057 = vpack.c.b16 %v2979, %v2966
    %v3058 = vpack.c.b16 %v2980, %v2967
    %v3059 = vpack.c.b16 %v2981, %v2968
    %v3060 = vpack.c.b16 %v2982, %v2969
    %v3061 = vpack.c.b16 %v2983, %v2970
    %v3062 = vpack.c.b16 %v2984, %v2971
    %v3063 = vpack.c.b16 %v2985, %v2972
    %v3064 = vpack.c.b16 %v2986, %v2973
    %v3065 = vpack.c.b16 %v2987, %v2974
    %v3066 = vpack.c.b16 %v3001, %v2988
    %v3067 = vpack.c.b16 %v3002, %v2989
    %v3068 = vpack.c.b16 %v3003, %v2990
    %v3069 = vpack.c.b16 %v3004, %v2991
    %v3070 = vpack.c.b16 %v3005, %v2992
    %v3071 = vpack.c.b16 %v3006, %v2993
    %v3072 = vpack.c.b16 %v3007, %v2994
    %v3073 = vpack.c.b16 %v3008, %v2995
    %v3074 = vpack.c.b16 %v3009, %v2996
    %v3075 = vpack.c.b16 %v3010, %v2997
    %v3076 = vpack.c.b16 %v3011, %v2998
    %v3077 = vpack.c.b16 %v3012, %v2999
    %v3078 = vpack.c.b16 %v3013, %v3000
    %v3079 = vpack.c.b16 %v3014, %v3014
    %v3080 = vpack.c.b16 %v3015, %v3015
    %v3081 = vpack.c.b16 %v3016, %v3016
    %v3082 = vpack.c.b16 %v3017, %v3017
    %v3083 = vpack.c.b16 %v3018, %v3018
    %v3084 = vpack.c.b16 %v3019, %v3019
    %v3085 = vpack.c.b16 %v3020, %v3020
    %v3086 = vpack.c.b16 %v3021, %v3021
    %v3087 = vpack.c.b16 %v3022, %v3022
    %v3088 = vpack.c.b16 %v3023, %v3023
    %v3089 = vpack.c.b16 %v3024, %v3024
    %v3090 = vpack.c.b16 %v3025, %v3025
    %v3091 = vpack.c.b16 %v3026, %v3026
    %v3365 = vunpack.c.l.b16 %v2632
    %v3366 = vunpack.c.l.b16 %v2633
    %v3367 = vunpack.c.l.b16 %v2634
    %v3368 = vunpack.c.l.b16 %v2635
    %v3369 = vunpack.c.l.b16 %v2636
    %v3370 = vunpack.c.l.b16 %v2637
    %v3371 = vunpack.c.l.b16 %v2638
    %v3372 = vunpack.c.l.b16 %v2639
    %v3373 = vunpack.c.l.b16 %v2640
    %v3374 = vunpack.c.l.b16 %v2641
    %v3375 = vunpack.c.l.b16 %v2642
    %v3376 = vunpack.c.l.b16 %v2643
    %v3377 = vunpack.c.l.b16 %v2644
    %v3378 = vunpack.c.l.b16 %v2645
    %v3379 = vunpack.c.l.b16 %v2646
    %v3380 = vunpack.c.l.b16 %v2647
    %v3381 = vunpack.c.l.b16 %v2648
    %v3382 = vunpack.c.l.b16 %v2649
    %v3383 = vunpack.c.l.b16 %v2650
    %v3384 = vunpack.c.l.b16 %v2651
    %v3385 = vunpack.c.l.b16 %v2652
    %v3386 = vunpack.c.l.b16 %v2653
    %v3387 = vunpack.c.l.b16 %v2654
    %v3388 = vunpack.c.l.b16 %v2655
    %v3389 = vunpack.c.l.b16 %v2656
    %v3390 = vunpack.c.l.b16 %v2657
    %v3391 = vunpack.c.l.b16 %v2658
    %v3392 = vunpack.c.l.b16 %v2659
    %v3393 = vunpack.c.l.b16 %v2660
    %v3394 = vunpack.c.l.b16 %v2661
    %v3395 = vunpack.c.l.b16 %v2662
    %v3396 = vunpack.c.l.b16 %v2663
    %v3397 = vunpack.c.l.b16 %v2664
    %v3398 = vunpack.c.l.b16 %v2665
    %v3399 = vunpack.c.l.b16 %v2666
    %v3400 = vunpack.c.l.b16 %v2667
    %v3401 = vunpack.c.l.b16 %v2668
    %v3402 = vunpack.c.l.b16 %v2669
    %v3403 = vunpack.c.l.b16 %v2670
    %v3404 = vunpack.c.l.b16 %v2671
    %v3405 = vunpack.c.l.b16 %v2672
    %v3406 = vunpack.c.l.b16 %v2673
    %v3407 = vunpack.c.l.b16 %v2674
    %v3408 = vunpack.c.l.b16 %v2675
    %v3409 = vunpack.c.l.b16 %v2676
    %v3410 = vunpack.c.l.b16 %v2677
    %v3411 = vunpack.c.l.b16 %v2678
    %v3412 = vunpack.c.l.b16 %v2679
    %v3413 = vunpack.c.l.b16 %v2680
    %v3414 = vunpack.c.l.b16 %v2681
    %v3415 = vunpack.c.l.b16 %v2682
    %v3416 = vunpack.c.l.b16 %v2683
    %v3417 = vunpack.c.l.b16 %v2684
    %v3418 = vunpack.c.l.b16 %v2685
    %v3419 = vunpack.c.l.b16 %v2686
    %v3420 = vunpack.c.l.b16 %v2687
    %v3421 = vunpack.c.l.b16 %v2688
    %v3422 = vunpack.c.l.b16 %v2689
    %v3423 = vunpack.c.l.b16 %v2690
    %v3424 = vunpack.c.l.b16 %v2691
    %v3425 = vunpack.c.l.b16 %v2692
    %v3426 = vunpack.c.l.b16 %v2693
    %v3427 = vunpack.c.l.b16 %v2694
    %v3428 = vunpack.c.l.b16 %v2695
    %v3429 = vunpack.c.l.b16 %v2696
    %v3430 = vunpack.c.l.b16 %v2697
    %v3431 = vunpack.c.l.b16 %v2698
    %v3432 = vunpack.c.l.b16 %v2699
    %v3433 = vunpack.c.l.b16 %v2700
    %v3434 = vunpack.c.l.b16 %v2701
    %v3435 = vunpack.c.l.b16 %v2702
    %v3436 = vunpack.c.l.b16 %v2703
    %v3437 = vunpack.c.l.b16 %v2704
    %v3438 = vunpack.c.l.b16 %v2705
    %v3439 = vunpack.c.l.b16 %v2706
    %v3440 = vunpack.c.l.b16 %v2707
    %v3441 = vunpack.c.l.b16 %v2708
    %v3442 = vunpack.c.l.b16 %v2709
    %v3443 = vunpack.c.l.b16 %v2710
    %v3444 = vunpack.c.l.b16 %v2711
    %v3445 = vunpack.c.l.b16 %v2712
    %v3446 = vunpack.c.l.b16 %v2713
    %v3447 = vunpack.c.l.b16 %v2714
    %v3448 = vunpack.c.l.b16 %v2715
    %v3449 = vunpack.c.l.b16 %v2716
    %v3450 = vunpack.c.l.b16 %v2717
    %v3451 = vunpack.c.l.b16 %v2718
    %v3452 = vunpack.c.l.b16 %v2719
    %v3453 = vunpack.c.l.b16 %v2720
    %v3454 = vunpack.c.l.b16 %v2721
    %v3455 = vunpack.c.l.b16 %v2722
    %v3456 = vunpack.c.l.b16 %v2723
    %v3457 = vunpack.c.l.b16 %v2724
    %v3458 = vunpack.c.l.b16 %v2725
    %v3459 = vunpack.c.l.b16 %v2726
    %v3460 = vunpack.c.l.b16 %v2727
    %v3461 = vunpack.c.l.b16 %v2728
    %v3462 = vunpack.c.l.b16 %v2729
    %v3463 = vunpack.c.l.b16 %v2730
    %v3464 = vunpack.c.l.b16 %v2731
    %v3465 = vunpack.c.l.b16 %v2732
    %v3466 = vunpack.c.l.b16 %v2733
    %v3467 = vunpack.c.l.b16 %v2734
    %v3468 = vunpack.c.l.b16 %v2735
    %v3469 = vunpack.c.l.b16 %v2736
    %v3470 = vunpack.c.l.b16 %v2737
    %v3471 = vunpack.c.l.b16 %v2738
    %v3472 = vunpack.c.l.b16 %v2739
    %v3473 = vunpack.c.l.b16 %v2740
    %v3474 = vunpack.c.l.b16 %v2741
    %v3475 = vunpack.c.l.b16 %v2742
    %v3476 = vunpack.c.l.b16 %v2743
    %v3477 = vunpack.c.l.b16 %v2744
    %v3478 = vunpack.c.l.b16 %v2745
    %v3479 = vunpack.c.l.b16 %v2746
    %v3480 = vunpack.c.l.b16 %v2747
    %v3481 = vunpack.c.l.b16 %v2748
    %v3482 = vunpack.c.l.b16 %v2749
    %v3483 = vunpack.c.l.b16 %v2750
    %v3484 = vunpack.c.l.b16 %v2751
    %v3485 = vunpack.c.l.b16 %v2752
    %v3486 = vunpack.c.l.b16 %v2753
    %v3487 = vunpack.c.l.b16 %v2754
    %v3488 = vunpack.c.l.b16 %v2755
    %v3489 = vunpack.c.l.b16 %v2756
    %v3490 = vunpack.c.l.b16 %v2757
    %v3491 = vunpack.c.l.b16 %v2758
    %v3492 = vunpack.c.l.b16 %v2759
    %v3493 = vunpack.c.l.b16 %v2760
    %v3494 = vunpack.c.l.b16 %v2761
    %v3495 = vunpack.c.l.b16 %v2762
    %v3496 = vunpack.c.l.b16 %v2763
    %v3497 = vunpack.c.l.b16 %v2764
    %v3498 = vunpack.c.l.b16 %v2765
    %v3499 = vunpack.c.l.b16 %v2766
    %v3500 = vunpack.c.l.b16 %v2767
    %v3501 = vunpack.c.l.b16 %v2768
    %v3502 = vunpack.c.l.b16 %v2769
    %v3503 = vunpack.c.l.b16 %v2770
    %v3504 = vunpack.c.l.b16 %v2771
    %v3505 = vunpack.c.l.b16 %v2772
    %v3506 = vunpack.c.l.b16 %v2773
    %v3507 = vunpack.c.l.b16 %v2774
    %v3508 = vunpack.c.l.b16 %v2775
    %v3509 = vunpack.c.l.b16 %v2776
    %v3510 = vunpack.c.l.b16 %v2777
    %v3511 = vunpack.c.l.b16 %v2778
    %v3512 = vunpack.c.l.b16 %v2779
    %v3513 = vunpack.c.l.b16 %v2780
    %v3514 = vunpack.c.l.b16 %v2781
    %v3515 = vunpack.c.l.b16 %v2782
    %v3516 = vunpack.c.l.b16 %v2783
    %v3517 = vunpack.c.l.b16 %v2784
    %v3518 = vunpack.c.l.b16 %v2785
    %v3519 = vunpack.c.l.b16 %v2786
    %v3520 = vunpack.c.l.b16 %v2787
    %v3521 = vunpack.c.l.b16 %v2788
    %v3522 = vunpack.c.l.b16 %v2789
    %v3523 = vunpack.c.l.b16 %v2790
    %v3524 = vunpack.c.l.b16 %v2791
    %v3525 = vunpack.c.l.b16 %v2792
    %v3526 = vunpack.c.l.b16 %v2793
    %v3527 = vunpack.c.l.b16 %v2794
    %v3528 = vunpack.c.l.b16 %v2795
    %v3529 = vunpack.c.l.b16 %v2796
    %v3530 = vunpack.c.l.b16 %v2797
    %v3531 = vunpack.c.l.b16 %v2798
    %v3532 = vunpack.c.l.b16 %v2799
    %v3533 = vunpack.c.l.b16 %v2800
    %v3534 = vunpack.c.l.b16 %v2801
    %v3535 = vunpack.c.l.b16 %v2802
    %v3536 = vunpack.c.l.b16 %v2803
    %v3537 = vunpack.c.l.b16 %v2804
    %v3538 = vunpack.c.l.b16 %v2805
    %v3539 = vunpack.c.l.b16 %v2806
    %v3540 = vunpack.c.l.b16 %v2807
    %v3541 = vunpack.c.l.b16 %v2808
    %v3542 = vunpack.c.l.b16 %v2809
    %v3543 = vunpack.c.l.b16 %v2810
    %v3544 = vunpack.c.l.b16 %v2811
    %v3545 = vunpack.c.l.b16 %v2812
    %v3546 = vunpack.c.l.b16 %v2813
    %v3547 = vunpack.c.l.b16 %v2814
    %v3548 = vunpack.c.l.b16 %v2815
    %v3549 = vunpack.c.l.b16 %v2816
    %v3550 = vunpack.c.l.b16 %v2817
    %v3551 = vunpack.c.l.b16 %v2818
    %v3552 = vunpack.c.l.b16 %v2819
    %v3553 = vunpack.c.l.b16 %v2820
    %v3554 = vunpack.c.l.b16 %v2821
    %v3555 = vunpack.c.l.b16 %v2822
    %v3556 = vunpack.c.l.b16 %v2823
    %v3557 = vunpack.c.l.b16 %v2824
    %v3558 = vunpack.c.l.b16 %v2825
    %v3559 = vunpack.c.l.b16 %v2826
    %v3560 = vunpack.c.l.b16 %v2827
    %v3561 = vunpack.c.l.b16 %v2828
    %v3562 = vunpack.c.l.b16 %v2829
    %v3563 = vunpack.c.l.b16 %v2830
    %v3564 = vunpack.c.l.b16 %v2831
    %v3565 = vunpack.c.l.b16 %v2832
    %v3566 = vunpack.c.l.b16 %v2833
    %v3567 = vunpack.c.l.b16 %v2834
    %v3568 = vunpack.c.l.b16 %v2835
    %v3569 = vunpack.c.l.b16 %v2836
    %v3570 = vunpack.c.l.b16 %v2837
    %v3571 = vunpack.c.l.b16 %v2838
    %v3572 = vunpack.c.l.b16 %v2839
    %v3573 = vpack.c.b16 %v3366, %v3365
    %v3574 = vpack.c.b16 %v3368, %v3367
    %v3575 = vpack.c.b16 %v3370, %v3369
    %v3576 = vpack.c.b16 %v3372, %v3371
    %v3577 = vpack.c.b16 %v3374, %v3373
    %v3578 = vpack.c.b16 %v3376, %v3375
    %v3579 = vpack.c.b16 %v3378, %v3377
    %v3580 = vpack.c.b16 %v3380, %v3379
    %v3581 = vpack.c.b16 %v3382, %v3381
    %v3582 = vpack.c.b16 %v3384, %v3383
    %v3583 = vpack.c.b16 %v3386, %v3385
    %v3584 = vpack.c.b16 %v3388, %v3387
    %v3585 = vpack.c.b16 %v3390, %v3389
    %v3586 = vpack.c.b16 %v3392, %v3391
    %v3587 = vpack.c.b16 %v3394, %v3393
    %v3588 = vpack.c.b16 %v3396, %v3395
    %v3589 = vpack.c.b16 %v3398, %v3397
    %v3590 = vpack.c.b16 %v3400, %v3399
    %v3591 = vpack.c.b16 %v3402, %v3401
    %v3592 = vpack.c.b16 %v3404, %v3403
    %v3593 = vpack.c.b16 %v3406, %v3405
    %v3594 = vpack.c.b16 %v3408, %v3407
    %v3595 = vpack.c.b16 %v3410, %v3409
    %v3596 = vpack.c.b16 %v3412, %v3411
    %v3597 = vpack.c.b16 %v3414, %v3413
    %v3598 = vpack.c.b16 %v3416, %v3415
    %v3599 = vpack.c.b16 %v3418, %v3417
    %v3600 = vpack.c.b16 %v3420, %v3419
    %v3601 = vpack.c.b16 %v3422, %v3421
    %v3602 = vpack.c.b16 %v3424, %v3423
    %v3603 = vpack.c.b16 %v3426, %v3425
    %v3604 = vpack.c.b16 %v3428, %v3427
    %v3605 = vpack.c.b16 %v3430, %v3429
    %v3606 = vpack.c.b16 %v3432, %v3431
    %v3607 = vpack.c.b16 %v3434, %v3433
    %v3608 = vpack.c.b16 %v3436, %v3435
    %v3609 = vpack.c.b16 %v3438, %v3437
    %v3610 = vpack.c.b16 %v3440, %v3439
    %v3611 = vpack.c.b16 %v3442, %v3441
    %v3612 = vpack.c.b16 %v3444, %v3443
    %v3613 = vpack.c.b16 %v3446, %v3445
    %v3614 = vpack.c.b16 %v3448, %v3447
    %v3615 = vpack.c.b16 %v3450, %v3449
    %v3616 = vpack.c.b16 %v3452, %v3451
    %v3617 = vpack.c.b16 %v3454, %v3453
    %v3618 = vpack.c.b16 %v3456, %v3455
    %v3619 = vpack.c.b16 %v3458, %v3457
    %v3620 = vpack.c.b16 %v3460, %v3459
    %v3621 = vpack.c.b16 %v3462, %v3461
    %v3622 = vpack.c.b16 %v3464, %v3463
    %v3623 = vpack.c.b16 %v3466, %v3465
    %v3624 = vpack.c.b16 %v3468, %v3467
    %v3625 = vpack.c.b16 %v3470, %v3469
    %v3626 = vpack.c.b16 %v3472, %v3471
    %v3627 = vpack.c.b16 %v3474, %v3473
    %v3628 = vpack.c.b16 %v3476, %v3475
    %v3629 = vpack.c.b16 %v3478, %v3477
    %v3630 = vpack.c.b16 %v3480, %v3479
    %v3631 = vpack.c.b16 %v3482, %v3481
    %v3632 = vpack.c.b16 %v3484, %v3483
    %v3633 = vpack.c.b16 %v3486, %v3485
    %v3634 = vpack.c.b16 %v3488, %v3487
    %v3635 = vpack.c.b16 %v3490, %v3489
    %v3636 = vpack.c.b16 %v3492, %v3491
    %v3637 = vpack.c.b16 %v3494, %v3493
    %v3638 = vpack.c.b16 %v3496, %v3495
    %v3639 = vpack.c.b16 %v3498, %v3497
    %v3640 = vpack.c.b16 %v3500, %v3499
    %v3641 = vpack.c.b16 %v3502, %v3501
    %v3642 = vpack.c.b16 %v3504, %v3503
    %v3643 = vpack.c.b16 %v3506, %v3505
    %v3644 = vpack.c.b16 %v3508, %v3507
    %v3645 = vpack.c.b16 %v3510, %v3509
    %v3646 = vpack.c.b16 %v3512, %v3511
    %v3647 = vpack.c.b16 %v3514, %v3513
    %v3648 = vpack.c.b16 %v3516, %v3515
    %v3649 = vpack.c.b16 %v3518, %v3517
    %v3650 = vpack.c.b16 %v3520, %v3519
    %v3651 = vpack.c.b16 %v3522, %v3521
    %v3652 = vpack.c.b16 %v3524, %v3523
    %v3653 = vpack.c.b16 %v3526, %v3525
    %v3654 = vpack.c.b16 %v3528, %v3527
    %v3655 = vpack.c.b16 %v3530, %v3529
    %v3656 = vpack.c.b16 %v3532, %v3531
    %v3657 = vpack.c.b16 %v3534, %v3533
    %v3658 = vpack.c.b16 %v3536, %v3535
    %v3659 = vpack.c.b16 %v3538, %v3537
    %v3660 = vpack.c.b16 %v3540, %v3539
    %v3661 = vpack.c.b16 %v3542, %v3541
    %v3662 = vpack.c.b16 %v3544, %v3543
    %v3663 = vpack.c.b16 %v3546, %v3545
    %v3664 = vpack.c.b16 %v3548, %v3547
    %v3665 = vpack.c.b16 %v3550, %v3549
    %v3666 = vpack.c.b16 %v3552, %v3551
    %v3667 = vpack.c.b16 %v3554, %v3553
    %v3668 = vpack.c.b16 %v3556, %v3555
    %v3669 = vpack.c.b16 %v3558, %v3557
    %v3670 = vpack.c.b16 %v3560, %v3559
    %v3671 = vpack.c.b16 %v3562, %v3561
    %v3672 = vpack.c.b16 %v3564, %v3563
    %v3673 = vpack.c.b16 %v3566, %v3565
    %v3674 = vpack.c.b16 %v3568, %v3567
    %v3675 = vpack.c.b16 %v3570, %v3569
    %v3676 = vpack.c.b16 %v3572, %v3571
    %3781 = vmatprep.subr.bf16.mxu0 0
    %3782 = vmatpush1.bf16.msra.mxu0 %v3580
    %3783 = vmatprep.subr.bf16.mxu0 0
    %3784 = vmatpush1.bf16.msra.mxu0 %v3579
    %3785 = vmatprep.subr.bf16.mxu0 0
    %3786 = vmatpush1.bf16.msra.mxu0 %v3578
    %3787 = vmatprep.subr.bf16.mxu0 0
    %3788 = vmatpush1.bf16.msra.mxu0 %v3577
    %3789 = vmatprep.subr.bf16.mxu0 0
    %3790 = vmatpush1.bf16.msra.mxu0 %v3576
    %3791 = vmatprep.subr.bf16.mxu0 0
    %3792 = vmatpush1.bf16.msra.mxu0 %v3575
    %3793 = vmatprep.subr.bf16.mxu0 0
    %3794 = vmatpush1.bf16.msra.mxu0 %v3574
    %3795 = vmatprep.subr.bf16.mxu0 0
    %3796 = vmatpush1.bf16.msra.mxu0 %v3573
    %3797 = vmatprep.subr.bf16.mxu0 0
    %3798 = vmatpush2.bf16.msra.mxu0 %v3588
    %3799 = vmatprep.subr.bf16.mxu0 0
    %3800 = vmatpush2.bf16.msra.mxu0 %v3587
    %3801 = vmatprep.subr.bf16.mxu0 0
    %3802 = vmatpush2.bf16.msra.mxu0 %v3586
    %3803 = vmatprep.subr.bf16.mxu0 0
    %3804 = vmatpush2.bf16.msra.mxu0 %v3585
    %3805 = vmatprep.subr.bf16.mxu0 0
    %3806 = vmatpush2.bf16.msra.mxu0 %v3584
    %3807 = vmatprep.subr.bf16.mxu0 0
    %3808 = vmatpush2.bf16.msra.mxu0 %v3583
    %3809 = vmatprep.subr.bf16.mxu0 0
    %3810 = vmatpush2.bf16.msra.mxu0 %v3582
    %3811 = vmatprep.subr.bf16.mxu0 0
    %3812 = vmatpush2.bf16.msra.mxu0 %v3581
    %3813 = vmatprep.mubr.bf16.mxu0 %v3028
    %3814 = vmatmul.mubr.bf16.gmra.mxu0 %v3027
    %v3815 = vpop.f32.mrf.mxu0
    %v3816 = vadd.f32 %v2845, %v3815
    %v3817 = vpop.f32.mrf.mxu0
    %v3818 = vpop.f32.mrf.mxu0
    %v3819 = vadd.f32 %v2845, %v3818
    %v3820 = vpop.f32.mrf.mxu0
    %3821 = vmatprep.mubr.bf16.mxu0 %v3041
    %3822 = vmatmul.mubr.bf16.gmra.mxu0 %v3040
    %v3823 = vpop.f32.mrf.mxu0
    %v3824 = vadd.f32 %v2845, %v3823
    %v3825 = vpop.f32.mrf.mxu0
    %v3826 = vpop.f32.mrf.mxu0
    %v3827 = vadd.f32 %v2845, %v3826
    %v3828 = vpop.f32.mrf.mxu0
    %3829 = vmatprep.mubr.bf16.mxu0 %v3054
    %3830 = vmatmul.mubr.bf16.gmra.mxu0 %v3053
    %v3831 = vpop.f32.mrf.mxu0
    %v3832 = vadd.f32 %v2845, %v3831
    %v3833 = vpop.f32.mrf.mxu0
    %v3834 = vpop.f32.mrf.mxu0
    %v3835 = vadd.f32 %v2845, %v3834
    %v3836 = vpop.f32.mrf.mxu0
    %3837 = vmatprep.mubr.bf16.mxu0 %v3067
    %3838 = vmatmul.mubr.bf16.gmra.mxu0 %v3066
    %v3839 = vpop.f32.mrf.mxu0
    %v3840 = vadd.f32 %v2845, %v3839
    %v3841 = vpop.f32.mrf.mxu0
    %v3842 = vpop.f32.mrf.mxu0
    %v3843 = vadd.f32 %v2845, %v3842
    %v3844 = vpop.f32.mrf.mxu0
    %3845 = vmatprep.mubr.bf16.mxu0 %v3080
    %3846 = vmatmul.mubr.bf16.gmra.mxu0 %v3079
    %v3847 = vpop.f32.mrf.mxu0
    %v3848 = vadd.f32 %v2845, %v3847
    %v3849 = vpop.f32.mrf.mxu0
    %v3850 = vpop.f32.mrf.mxu0
    %v3851 = vpop.f32.mrf.mxu0
    %3852 = vdwg.mxu0
    %3853 = vmatprep.subr.bf16.mxu0 0
    %3854 = vmatpush1.bf16.msra.mxu0 %v3596
    %3855 = vmatprep.subr.bf16.mxu0 0
    %3856 = vmatpush1.bf16.msra.mxu0 %v3595
    %3857 = vmatprep.subr.bf16.mxu0 0
    %3858 = vmatpush1.bf16.msra.mxu0 %v3594
    %3859 = vmatprep.subr.bf16.mxu0 0
    %3860 = vmatpush1.bf16.msra.mxu0 %v3593
    %3861 = vmatprep.subr.bf16.mxu0 0
    %3862 = vmatpush1.bf16.msra.mxu0 %v3592
    %3863 = vmatprep.subr.bf16.mxu0 0
    %3864 = vmatpush1.bf16.msra.mxu0 %v3591
    %3865 = vmatprep.subr.bf16.mxu0 0
    %3866 = vmatpush1.bf16.msra.mxu0 %v3590
    %3867 = vmatprep.subr.bf16.mxu0 0
    %3868 = vmatpush1.bf16.msra.mxu0 %v3589
    %3869 = vmatprep.subr.bf16.mxu0 0
    %3870 = vmatpush2.bf16.msra.mxu0 %v3604
    %3871 = vmatprep.subr.bf16.mxu0 0
    %3872 = vmatpush2.bf16.msra.mxu0 %v3603
    %3873 = vmatprep.subr.bf16.mxu0 0
    %3874 = vmatpush2.bf16.msra.mxu0 %v3602
    %3875 = vmatprep.subr.bf16.mxu0 0
    %3876 = vmatpush2.bf16.msra.mxu0 %v3601
    %3877 = vmatprep.subr.bf16.mxu0 0
    %3878 = vmatpush2.bf16.msra.mxu0 %v3600
    %3879 = vmatprep.subr.bf16.mxu0 0
    %3880 = vmatpush2.bf16.msra.mxu0 %v3599
    %3881 = vmatprep.subr.bf16.mxu0 0
    %3882 = vmatpush2.bf16.msra.mxu0 %v3598
    %3883 = vmatprep.subr.bf16.mxu0 0
    %3884 = vmatpush2.bf16.msra.mxu0 %v3597
    %3885 = vmatprep.mubr.bf16.mxu0 %v3030
    %3886 = vmatmul.mubr.bf16.gmra.mxu0 %v3029
    %v3887 = vpop.f32.mrf.mxu0
    %v3888 = vadd.f32 %v3816, %v3887
    %v3889 = vpop.f32.mrf.mxu0
    %v3890 = vpop.f32.mrf.mxu0
    %v3891 = vadd.f32 %v3819, %v3890
    %v3892 = vpop.f32.mrf.mxu0
    %3893 = vmatprep.mubr.bf16.mxu0 %v3043
    %3894 = vmatmul.mubr.bf16.gmra.mxu0 %v3042
    %v3895 = vpop.f32.mrf.mxu0
    %v3896 = vadd.f32 %v3824, %v3895
    %v3897 = vpop.f32.mrf.mxu0
    %v3898 = vpop.f32.mrf.mxu0
    %v3899 = vadd.f32 %v3827, %v3898
    %v3900 = vpop.f32.mrf.mxu0
    %3901 = vmatprep.mubr.bf16.mxu0 %v3056
    %3902 = vmatmul.mubr.bf16.gmra.mxu0 %v3055
    %v3903 = vpop.f32.mrf.mxu0
    %v3904 = vadd.f32 %v3832, %v3903
    %v3905 = vpop.f32.mrf.mxu0
    %v3906 = vpop.f32.mrf.mxu0
    %v3907 = vadd.f32 %v3835, %v3906
    %v3908 = vpop.f32.mrf.mxu0
    %3909 = vmatprep.mubr.bf16.mxu0 %v3069
    %3910 = vmatmul.mubr.bf16.gmra.mxu0 %v3068
    %v3911 = vpop.f32.mrf.mxu0
    %v3912 = vadd.f32 %v3840, %v3911
    %v3913 = vpop.f32.mrf.mxu0
    %v3914 = vpop.f32.mrf.mxu0
    %v3915 = vadd.f32 %v3843, %v3914
    %v3916 = vpop.f32.mrf.mxu0
    %3917 = vmatprep.mubr.bf16.mxu0 %v3082
    %3918 = vmatmul.mubr.bf16.gmra.mxu0 %v3081
    %v3919 = vpop.f32.mrf.mxu0
    %v3920 = vadd.f32 %v3848, %v3919
    %v3921 = vpop.f32.mrf.mxu0
    %v3922 = vpop.f32.mrf.mxu0
    %v3923 = vpop.f32.mrf.mxu0
    %3924 = vdwg.mxu0
    %3925 = vmatprep.subr.bf16.mxu0 0
    %3926 = vmatpush1.bf16.msra.mxu0 %v3612
    %3927 = vmatprep.subr.bf16.mxu0 0
    %3928 = vmatpush1.bf16.msra.mxu0 %v3611
    %3929 = vmatprep.subr.bf16.mxu0 0
    %3930 = vmatpush1.bf16.msra.mxu0 %v3610
    %3931 = vmatprep.subr.bf16.mxu0 0
    %3932 = vmatpush1.bf16.msra.mxu0 %v3609
    %3933 = vmatprep.subr.bf16.mxu0 0
    %3934 = vmatpush1.bf16.msra.mxu0 %v3608
    %3935 = vmatprep.subr.bf16.mxu0 0
    %3936 = vmatpush1.bf16.msra.mxu0 %v3607
    %3937 = vmatprep.subr.bf16.mxu0 0
    %3938 = vmatpush1.bf16.msra.mxu0 %v3606
    %3939 = vmatprep.subr.bf16.mxu0 0
    %3940 = vmatpush1.bf16.msra.mxu0 %v3605
    %3941 = vmatprep.subr.bf16.mxu0 0
    %3942 = vmatpush2.bf16.msra.mxu0 %v3620
    %3943 = vmatprep.subr.bf16.mxu0 0
    %3944 = vmatpush2.bf16.msra.mxu0 %v3619
    %3945 = vmatprep.subr.bf16.mxu0 0
    %3946 = vmatpush2.bf16.msra.mxu0 %v3618
    %3947 = vmatprep.subr.bf16.mxu0 0
    %3948 = vmatpush2.bf16.msra.mxu0 %v3617
    %3949 = vmatprep.subr.bf16.mxu0 0
    %3950 = vmatpush2.bf16.msra.mxu0 %v3616
    %3951 = vmatprep.subr.bf16.mxu0 0
    %3952 = vmatpush2.bf16.msra.mxu0 %v3615
    %3953 = vmatprep.subr.bf16.mxu0 0
    %3954 = vmatpush2.bf16.msra.mxu0 %v3614
    %3955 = vmatprep.subr.bf16.mxu0 0
    %3956 = vmatpush2.bf16.msra.mxu0 %v3613
    %3957 = vmatprep.mubr.bf16.mxu0 %v3032
    %3958 = vmatmul.mubr.bf16.gmra.mxu0 %v3031
    %v3959 = vpop.f32.mrf.mxu0
    %v3960 = vadd.f32 %v3888, %v3959
    %v3961 = vpop.f32.mrf.mxu0
    %v3962 = vpop.f32.mrf.mxu0
    %v3963 = vadd.f32 %v3891, %v3962
    %v3964 = vpop.f32.mrf.mxu0
    %3965 = vmatprep.mubr.bf16.mxu0 %v3045
    %3966 = vmatmul.mubr.bf16.gmra.mxu0 %v3044
    %v3967 = vpop.f32.mrf.mxu0
    %v3968 = vadd.f32 %v3896, %v3967
    %v3969 = vpop.f32.mrf.mxu0
    %v3970 = vpop.f32.mrf.mxu0
    %v3971 = vadd.f32 %v3899, %v3970
    %v3972 = vpop.f32.mrf.mxu0
    %3973 = vmatprep.mubr.bf16.mxu0 %v3058
    %3974 = vmatmul.mubr.bf16.gmra.mxu0 %v3057
    %v3975 = vpop.f32.mrf.mxu0
    %v3976 = vadd.f32 %v3904, %v3975
    %v3977 = vpop.f32.mrf.mxu0
    %v3978 = vpop.f32.mrf.mxu0
    %v3979 = vadd.f32 %v3907, %v3978
    %v3980 = vpop.f32.mrf.mxu0
    %3981 = vmatprep.mubr.bf16.mxu0 %v3071
    %3982 = vmatmul.mubr.bf16.gmra.mxu0 %v3070
    %v3983 = vpop.f32.mrf.mxu0
    %v3984 = vadd.f32 %v3912, %v3983
    %v3985 = vpop.f32.mrf.mxu0
    %v3986 = vpop.f32.mrf.mxu0
    %v3987 = vadd.f32 %v3915, %v3986
    %v3988 = vpop.f32.mrf.mxu0
    %3989 = vmatprep.mubr.bf16.mxu0 %v3084
    %3990 = vmatmul.mubr.bf16.gmra.mxu0 %v3083
    %v3991 = vpop.f32.mrf.mxu0
    %v3992 = vadd.f32 %v3920, %v3991
    %v3993 = vpop.f32.mrf.mxu0
    %v3994 = vpop.f32.mrf.mxu0
    %v3995 = vpop.f32.mrf.mxu0
    %3996 = vdwg.mxu0
    %3997 = vmatprep.subr.bf16.mxu0 0
    %3998 = vmatpush1.bf16.msra.mxu0 %v3628
    %3999 = vmatprep.subr.bf16.mxu0 0
    %4000 = vmatpush1.bf16.msra.mxu0 %v3627
    %4001 = vmatprep.subr.bf16.mxu0 0
    %4002 = vmatpush1.bf16.msra.mxu0 %v3626
    %4003 = vmatprep.subr.bf16.mxu0 0
    %4004 = vmatpush1.bf16.msra.mxu0 %v3625
    %4005 = vmatprep.subr.bf16.mxu0 0
    %4006 = vmatpush1.bf16.msra.mxu0 %v3624
    %4007 = vmatprep.subr.bf16.mxu0 0
    %4008 = vmatpush1.bf16.msra.mxu0 %v3623
    %4009 = vmatprep.subr.bf16.mxu0 0
    %4010 = vmatpush1.bf16.msra.mxu0 %v3622
    %4011 = vmatprep.subr.bf16.mxu0 0
    %4012 = vmatpush1.bf16.msra.mxu0 %v3621
    %4013 = vmatprep.subr.bf16.mxu0 0
    %4014 = vmatpush2.bf16.msra.mxu0 %v3636
    %4015 = vmatprep.subr.bf16.mxu0 0
    %4016 = vmatpush2.bf16.msra.mxu0 %v3635
    %4017 = vmatprep.subr.bf16.mxu0 0
    %4018 = vmatpush2.bf16.msra.mxu0 %v3634
    %4019 = vmatprep.subr.bf16.mxu0 0
    %4020 = vmatpush2.bf16.msra.mxu0 %v3633
    %4021 = vmatprep.subr.bf16.mxu0 0
    %4022 = vmatpush2.bf16.msra.mxu0 %v3632
    %4023 = vmatprep.subr.bf16.mxu0 0
    %4024 = vmatpush2.bf16.msra.mxu0 %v3631
    %4025 = vmatprep.subr.bf16.mxu0 0
    %4026 = vmatpush2.bf16.msra.mxu0 %v3630
    %4027 = vmatprep.subr.bf16.mxu0 0
    %4028 = vmatpush2.bf16.msra.mxu0 %v3629
    %4029 = vmatprep.mubr.bf16.mxu0 %v3034
    %4030 = vmatmul.mubr.bf16.gmra.mxu0 %v3033
    %v4031 = vpop.f32.mrf.mxu0
    %v4032 = vadd.f32 %v3960, %v4031
    %v4033 = vpop.f32.mrf.mxu0
    %v4034 = vpop.f32.mrf.mxu0
    %v4035 = vadd.f32 %v3963, %v4034
    %v4036 = vpop.f32.mrf.mxu0
    %4037 = vmatprep.mubr.bf16.mxu0 %v3047
    %4038 = vmatmul.mubr.bf16.gmra.mxu0 %v3046
    %v4039 = vpop.f32.mrf.mxu0
    %v4040 = vadd.f32 %v3968, %v4039
    %v4041 = vpop.f32.mrf.mxu0
    %v4042 = vpop.f32.mrf.mxu0
    %v4043 = vadd.f32 %v3971, %v4042
    %v4044 = vpop.f32.mrf.mxu0
    %4045 = vmatprep.mubr.bf16.mxu0 %v3060
    %4046 = vmatmul.mubr.bf16.gmra.mxu0 %v3059
    %v4047 = vpop.f32.mrf.mxu0
    %v4048 = vadd.f32 %v3976, %v4047
    %v4049 = vpop.f32.mrf.mxu0
    %v4050 = vpop.f32.mrf.mxu0
    %v4051 = vadd.f32 %v3979, %v4050
    %v4052 = vpop.f32.mrf.mxu0
    %4053 = vmatprep.mubr.bf16.mxu0 %v3073
    %4054 = vmatmul.mubr.bf16.gmra.mxu0 %v3072
    %v4055 = vpop.f32.mrf.mxu0
    %v4056 = vadd.f32 %v3984, %v4055
    %v4057 = vpop.f32.mrf.mxu0
    %v4058 = vpop.f32.mrf.mxu0
    %v4059 = vadd.f32 %v3987, %v4058
    %v4060 = vpop.f32.mrf.mxu0
    %4061 = vmatprep.mubr.bf16.mxu0 %v3086
    %4062 = vmatmul.mubr.bf16.gmra.mxu0 %v3085
    %v4063 = vpop.f32.mrf.mxu0
    %v4064 = vadd.f32 %v3992, %v4063
    %v4065 = vpop.f32.mrf.mxu0
    %v4066 = vpop.f32.mrf.mxu0
    %v4067 = vpop.f32.mrf.mxu0
    %4068 = vdwg.mxu0
    %4069 = vmatprep.subr.bf16.mxu0 0
    %4070 = vmatpush1.bf16.msra.mxu0 %v3644
    %4071 = vmatprep.subr.bf16.mxu0 0
    %4072 = vmatpush1.bf16.msra.mxu0 %v3643
    %4073 = vmatprep.subr.bf16.mxu0 0
    %4074 = vmatpush1.bf16.msra.mxu0 %v3642
    %4075 = vmatprep.subr.bf16.mxu0 0
    %4076 = vmatpush1.bf16.msra.mxu0 %v3641
    %4077 = vmatprep.subr.bf16.mxu0 0
    %4078 = vmatpush1.bf16.msra.mxu0 %v3640
    %4079 = vmatprep.subr.bf16.mxu0 0
    %4080 = vmatpush1.bf16.msra.mxu0 %v3639
    %4081 = vmatprep.subr.bf16.mxu0 0
    %4082 = vmatpush1.bf16.msra.mxu0 %v3638
    %4083 = vmatprep.subr.bf16.mxu0 0
    %4084 = vmatpush1.bf16.msra.mxu0 %v3637
    %4085 = vmatprep.subr.bf16.mxu0 0
    %4086 = vmatpush2.bf16.msra.mxu0 %v3652
    %4087 = vmatprep.subr.bf16.mxu0 0
    %4088 = vmatpush2.bf16.msra.mxu0 %v3651
    %4089 = vmatprep.subr.bf16.mxu0 0
    %4090 = vmatpush2.bf16.msra.mxu0 %v3650
    %4091 = vmatprep.subr.bf16.mxu0 0
    %4092 = vmatpush2.bf16.msra.mxu0 %v3649
    %4093 = vmatprep.subr.bf16.mxu0 0
    %4094 = vmatpush2.bf16.msra.mxu0 %v3648
    %4095 = vmatprep.subr.bf16.mxu0 0
    %4096 = vmatpush2.bf16.msra.mxu0 %v3647
    %4097 = vmatprep.subr.bf16.mxu0 0
    %4098 = vmatpush2.bf16.msra.mxu0 %v3646
    %4099 = vmatprep.subr.bf16.mxu0 0
    %4100 = vmatpush2.bf16.msra.mxu0 %v3645
    %4101 = vmatprep.mubr.bf16.mxu0 %v3036
    %4102 = vmatmul.mubr.bf16.gmra.mxu0 %v3035
    %v4103 = vpop.f32.mrf.mxu0
    %v4104 = vadd.f32 %v4032, %v4103
    %v4105 = vpop.f32.mrf.mxu0
    %v4106 = vpop.f32.mrf.mxu0
    %v4107 = vadd.f32 %v4035, %v4106
    %v4108 = vpop.f32.mrf.mxu0
    %4109 = vmatprep.mubr.bf16.mxu0 %v3049
    %4110 = vmatmul.mubr.bf16.gmra.mxu0 %v3048
    %v4111 = vpop.f32.mrf.mxu0
    %v4112 = vadd.f32 %v4040, %v4111
    %v4113 = vpop.f32.mrf.mxu0
    %v4114 = vpop.f32.mrf.mxu0
    %v4115 = vadd.f32 %v4043, %v4114
    %v4116 = vpop.f32.mrf.mxu0
    %4117 = vmatprep.mubr.bf16.mxu0 %v3062
    %4118 = vmatmul.mubr.bf16.gmra.mxu0 %v3061
    %v4119 = vpop.f32.mrf.mxu0
    %v4120 = vadd.f32 %v4048, %v4119
    %v4121 = vpop.f32.mrf.mxu0
    %v4122 = vpop.f32.mrf.mxu0
    %v4123 = vadd.f32 %v4051, %v4122
    %v4124 = vpop.f32.mrf.mxu0
    %4125 = vmatprep.mubr.bf16.mxu0 %v3075
    %4126 = vmatmul.mubr.bf16.gmra.mxu0 %v3074
    %v4127 = vpop.f32.mrf.mxu0
    %v4128 = vadd.f32 %v4056, %v4127
    %v4129 = vpop.f32.mrf.mxu0
    %v4130 = vpop.f32.mrf.mxu0
    %v4131 = vadd.f32 %v4059, %v4130
    %v4132 = vpop.f32.mrf.mxu0
    %4133 = vmatprep.mubr.bf16.mxu0 %v3088
    %4134 = vmatmul.mubr.bf16.gmra.mxu0 %v3087
    %v4135 = vpop.f32.mrf.mxu0
    %v4136 = vadd.f32 %v4064, %v4135
    %v4137 = vpop.f32.mrf.mxu0
    %v4138 = vpop.f32.mrf.mxu0
    %v4139 = vpop.f32.mrf.mxu0
    %4140 = vdwg.mxu0
    %4141 = vmatprep.subr.bf16.mxu0 0
    %4142 = vmatpush1.bf16.msra.mxu0 %v3660
    %4143 = vmatprep.subr.bf16.mxu0 0
    %4144 = vmatpush1.bf16.msra.mxu0 %v3659
    %4145 = vmatprep.subr.bf16.mxu0 0
    %4146 = vmatpush1.bf16.msra.mxu0 %v3658
    %4147 = vmatprep.subr.bf16.mxu0 0
    %4148 = vmatpush1.bf16.msra.mxu0 %v3657
    %4149 = vmatprep.subr.bf16.mxu0 0
    %4150 = vmatpush1.bf16.msra.mxu0 %v3656
    %4151 = vmatprep.subr.bf16.mxu0 0
    %4152 = vmatpush1.bf16.msra.mxu0 %v3655
    %4153 = vmatprep.subr.bf16.mxu0 0
    %4154 = vmatpush1.bf16.msra.mxu0 %v3654
    %4155 = vmatprep.subr.bf16.mxu0 0
    %4156 = vmatpush1.bf16.msra.mxu0 %v3653
    %4157 = vmatprep.subr.bf16.mxu0 0
    %4158 = vmatpush2.bf16.msra.mxu0 %v3668
    %4159 = vmatprep.subr.bf16.mxu0 0
    %4160 = vmatpush2.bf16.msra.mxu0 %v3667
    %4161 = vmatprep.subr.bf16.mxu0 0
    %4162 = vmatpush2.bf16.msra.mxu0 %v3666
    %4163 = vmatprep.subr.bf16.mxu0 0
    %4164 = vmatpush2.bf16.msra.mxu0 %v3665
    %4165 = vmatprep.subr.bf16.mxu0 0
    %4166 = vmatpush2.bf16.msra.mxu0 %v3664
    %4167 = vmatprep.subr.bf16.mxu0 0
    %4168 = vmatpush2.bf16.msra.mxu0 %v3663
    %4169 = vmatprep.subr.bf16.mxu0 0
    %4170 = vmatpush2.bf16.msra.mxu0 %v3662
    %4171 = vmatprep.subr.bf16.mxu0 0
    %4172 = vmatpush2.bf16.msra.mxu0 %v3661
    %4173 = vmatprep.mubr.bf16.mxu0 %v3038
    %4174 = vmatmul.mubr.bf16.gmra.mxu0 %v3037
    %v4175 = vpop.f32.mrf.mxu0
    %v4176 = vadd.f32 %v4104, %v4175
    %v4177 = vpop.f32.mrf.mxu0
    %v4178 = vpop.f32.mrf.mxu0
    %v4179 = vadd.f32 %v4107, %v4178
    %v4180 = vpop.f32.mrf.mxu0
    %4181 = vmatprep.mubr.bf16.mxu0 %v3051
    %4182 = vmatmul.mubr.bf16.gmra.mxu0 %v3050
    %v4183 = vpop.f32.mrf.mxu0
    %v4184 = vadd.f32 %v4112, %v4183
    %v4185 = vpop.f32.mrf.mxu0
    %v4186 = vpop.f32.mrf.mxu0
    %v4187 = vadd.f32 %v4115, %v4186
    %v4188 = vpop.f32.mrf.mxu0
    %4189 = vmatprep.mubr.bf16.mxu0 %v3064
    %4190 = vmatmul.mubr.bf16.gmra.mxu0 %v3063
    %v4191 = vpop.f32.mrf.mxu0
    %v4192 = vadd.f32 %v4120, %v4191
    %v4193 = vpop.f32.mrf.mxu0
    %v4194 = vpop.f32.mrf.mxu0
    %v4195 = vadd.f32 %v4123, %v4194
    %v4196 = vpop.f32.mrf.mxu0
    %4197 = vmatprep.mubr.bf16.mxu0 %v3077
    %4198 = vmatmul.mubr.bf16.gmra.mxu0 %v3076
    %v4199 = vpop.f32.mrf.mxu0
    %v4200 = vadd.f32 %v4128, %v4199
    %v4201 = vpop.f32.mrf.mxu0
    %v4202 = vpop.f32.mrf.mxu0
    %v4203 = vadd.f32 %v4131, %v4202
    %v4204 = vpop.f32.mrf.mxu0
    %4205 = vmatprep.mubr.bf16.mxu0 %v3090
    %4206 = vmatmul.mubr.bf16.gmra.mxu0 %v3089
    %v4207 = vpop.f32.mrf.mxu0
    %v4208 = vadd.f32 %v4136, %v4207
    %v4209 = vpop.f32.mrf.mxu0
    %v4210 = vpop.f32.mrf.mxu0
    %v4211 = vpop.f32.mrf.mxu0
    %4212 = vdwg.mxu0
    %4213 = vmatprep.subr.bf16.mxu0 0
    %4214 = vmatpush1.bf16.msra.mxu0 %v3676
    %4215 = vmatprep.subr.bf16.mxu0 0
    %4216 = vmatpush1.bf16.msra.mxu0 %v3675
    %4217 = vmatprep.subr.bf16.mxu0 0
    %4218 = vmatpush1.bf16.msra.mxu0 %v3674
    %4219 = vmatprep.subr.bf16.mxu0 0
    %4220 = vmatpush1.bf16.msra.mxu0 %v3673
    %4221 = vmatprep.subr.bf16.mxu0 0
    %4222 = vmatpush1.bf16.msra.mxu0 %v3672
    %4223 = vmatprep.subr.bf16.mxu0 0
    %4224 = vmatpush1.bf16.msra.mxu0 %v3671
    %4225 = vmatprep.subr.bf16.mxu0 0
    %4226 = vmatpush1.bf16.msra.mxu0 %v3670
    %4227 = vmatprep.subr.bf16.mxu0 0
    %4228 = vmatpush1.bf16.msra.mxu0 %v3669
    %4229 = vmatprep.subr.bf16.mxu0 0
    %4230 = vmatpush2.bf16.msra.mxu0 0
    %4231 = vmatprep.subr.bf16.mxu0 0
    %4232 = vmatpush2.bf16.msra.mxu0 0
    %4233 = vmatprep.subr.bf16.mxu0 0
    %4234 = vmatpush2.bf16.msra.mxu0 0
    %4235 = vmatprep.subr.bf16.mxu0 0
    %4236 = vmatpush2.bf16.msra.mxu0 0
    %4237 = vmatprep.subr.bf16.mxu0 0
    %4238 = vmatpush2.bf16.msra.mxu0 0
    %4239 = vmatprep.subr.bf16.mxu0 0
    %4240 = vmatpush2.bf16.msra.mxu0 0
    %4241 = vmatprep.subr.bf16.mxu0 0
    %4242 = vmatpush2.bf16.msra.mxu0 0
    %4243 = vmatprep.subr.bf16.mxu0 0
    %4244 = vmatpush2.bf16.msra.mxu0 0
    %4245 = vmatprep.mubr.bf16.mxu0 0
    %4246 = vmatmul.mubr.bf16.gmra.mxu0 %v3039
    %v4247 = vpop.f32.mrf.mxu0
    %v4248 = vadd.f32 %v4176, %v4247
    %v4249 = vpop.f32.mrf.mxu0
    %v4250 = vpop.f32.mrf.mxu0
    %v4251 = vadd.f32 %v4179, %v4250
    %v4252 = vpop.f32.mrf.mxu0
    %4253 = vmatprep.mubr.bf16.mxu0 0
    %4254 = vmatmul.mubr.bf16.gmra.mxu0 %v3052
    %v4255 = vpop.f32.mrf.mxu0
    %v4256 = vadd.f32 %v4184, %v4255
    %v4257 = vpop.f32.mrf.mxu0
    %v4258 = vpop.f32.mrf.mxu0
    %v4259 = vadd.f32 %v4187, %v4258
    %v4260 = vpop.f32.mrf.mxu0
    %4261 = vmatprep.mubr.bf16.mxu0 0
    %4262 = vmatmul.mubr.bf16.gmra.mxu0 %v3065
    %v4263 = vpop.f32.mrf.mxu0
    %v4264 = vadd.f32 %v4192, %v4263
    %v4265 = vpop.f32.mrf.mxu0
    %v4266 = vpop.f32.mrf.mxu0
    %v4267 = vadd.f32 %v4195, %v4266
    %v4268 = vpop.f32.mrf.mxu0
    %4269 = vmatprep.mubr.bf16.mxu0 0
    %4270 = vmatmul.mubr.bf16.gmra.mxu0 %v3078
    %v4271 = vpop.f32.mrf.mxu0
    %v4272 = vadd.f32 %v4200, %v4271
    %v4273 = vpop.f32.mrf.mxu0
    %v4274 = vpop.f32.mrf.mxu0
    %v4275 = vadd.f32 %v4203, %v4274
    %v4276 = vpop.f32.mrf.mxu0
    %4277 = vmatprep.mubr.bf16.mxu0 0
    %4278 = vmatmul.mubr.bf16.gmra.mxu0 %v3091
    %v4279 = vpop.f32.mrf.mxu0
    %v4280 = vadd.f32 %v4208, %v4279
    %v4281 = vpop.f32.mrf.mxu0
    %v4282 = vpop.f32.mrf.mxu0
    %v4283 = vpop.f32.mrf.mxu0
    %4284 = vdwg.mxu0
    %v4285 = vmax.f32 %v4248, 0.0
    %v4286 = vmax.f32 %v4251, 0.0
    %v4287 = vmax.f32 %v4256, 0.0
    %v4288 = vmax.f32 %v4259, 0.0
    %v4289 = vmax.f32 %v4264, 0.0
    %v4290 = vmax.f32 %v4267, 0.0
    %v4291 = vmax.f32 %v4272, 0.0
    %v4292 = vmax.f32 %v4275, 0.0
    %v4293 = vmax.f32 %v4280, 0.0
    %v4294 = vpack.c.bf16 %v4285, %v4285
    %4295 = vst [vmem:[#allocation5] sm:$0xf] %v4294
    %v4296 = vpack.c.bf16 %v4286, %v4286
    %4297 = vst [vmem:[#allocation5 + $0x4] sm:$0xf] %v4296
    %v4298 = vpack.c.bf16 %v4287, %v4287
    %4299 = vst [vmem:[#allocation5 + $0x8] sm:$0xf] %v4298
    %v4300 = vpack.c.bf16 %v4288, %v4288
    %4301 = vst [vmem:[#allocation5 + $0xc] sm:$0xf] %v4300
    %v4302 = vpack.c.bf16 %v4289, %v4289
    %4303 = vst [vmem:[#allocation5 + $0x10] sm:$0xf] %v4302
    %v4304 = vpack.c.bf16 %v4290, %v4290
    %4305 = vst [vmem:[#allocation5 + $0x14] sm:$0xf] %v4304
    %v4306 = vpack.c.bf16 %v4291, %v4291
    %4307 = vst [vmem:[#allocation5 + $0x18] sm:$0xf] %v4306
    %v4308 = vpack.c.bf16 %v4292, %v4292
    %4309 = vst [vmem:[#allocation5 + $0x1c] sm:$0xf] %v4308
    %v4310 = vpack.c.bf16 %v4293, %v4293
    %4311 = vst [vmem:[#allocation5 + $0x20] sm:$0xf] %v4310
    %v4312 = vld [vmem:[%s1] sm:$0xf]
    %4313 = vst [vmem:[#allocation5 + $0x24] sm:$0xf] %v4312
    %s4314 = smul.u32 4, 160
    %s4315 = smul.u32 %s4314, 1
    %s4316 = sshll.u32 %s4315, 4
    %4317 = dma.done %s305, %s4316
    %v4318 = vld [vmem:[#allocation5] sm:$0xff]
    %v4319 = vld [vmem:[#allocation5 + $0x8] sm:$0xff]
    %v4320 = vld [vmem:[#allocation5 + $0x10] sm:$0xff]
    %v4321 = vld [vmem:[#allocation5 + $0x18] sm:$0xff]
    %v4322 = vld [vmem:[#allocation5 + $0x20] sm:$0xff]
    %v4323 = vld [vmem:[#allocation3] sm:$0xf]
    %v4324 = vld [vmem:[#allocation3 + $0x4] sm:$0xf]
    %v4325 = vld [vmem:[#allocation3 + $0x8] sm:$0xf]
    %v4326 = vld [vmem:[#allocation3 + $0xc] sm:$0xf]
    %v4327 = vld [vmem:[#allocation3 + $0x10] sm:$0xf]
    %v4328 = vld [vmem:[#allocation3 + $0x14] sm:$0xf]
    %v4329 = vld [vmem:[#allocation3 + $0x18] sm:$0xf]
    %v4330 = vld [vmem:[#allocation3 + $0x1c] sm:$0xf]
    %v4331 = vld [vmem:[#allocation3 + $0x20] sm:$0xf]
    %v4332 = vld [vmem:[#allocation3 + $0x24] sm:$0xf]
    %v4333 = vld [vmem:[#allocation3 + $0x28] sm:$0xf]
    %v4334 = vld [vmem:[#allocation3 + $0x2c] sm:$0xf]
    %v4335 = vld [vmem:[#allocation3 + $0x30] sm:$0xf]
    %v4336 = vld [vmem:[#allocation3 + $0x34] sm:$0xf]
    %v4337 = vld [vmem:[#allocation3 + $0x38] sm:$0xf]
    %v4338 = vld [vmem:[#allocation3 + $0x3c] sm:$0xf]
    %v4339 = vld [vmem:[#allocation3 + $0x40] sm:$0xf]
    %v4340 = vld [vmem:[#allocation3 + $0x44] sm:$0xf]
    %v4341 = vld [vmem:[#allocation3 + $0x48] sm:$0xf]
    %v4342 = vld [vmem:[#allocation3 + $0x4c] sm:$0xf]
    %v4343 = vld [vmem:[#allocation3 + $0x50] sm:$0xf]
    %v4344 = vld [vmem:[#allocation3 + $0x54] sm:$0xf]
    %v4345 = vld [vmem:[#allocation3 + $0x58] sm:$0xf]
    %v4346 = vld [vmem:[#allocation3 + $0x5c] sm:$0xf]
    %v4347 = vld [vmem:[#allocation3 + $0x60] sm:$0xf]
    %v4348 = vld [vmem:[#allocation3 + $0x64] sm:$0xf]
    %v4349 = vld [vmem:[#allocation3 + $0x68] sm:$0xf]
    %v4350 = vld [vmem:[#allocation3 + $0x6c] sm:$0xf]
    %v4351 = vld [vmem:[#allocation3 + $0x70] sm:$0xf]
    %v4352 = vld [vmem:[#allocation3 + $0x74] sm:$0xf]
    %v4353 = vld [vmem:[#allocation3 + $0x78] sm:$0xf]
    %v4354 = vld [vmem:[#allocation3 + $0x7c] sm:$0xf]
    %v4355 = vld [vmem:[#allocation3 + $0x80] sm:$0xf]
    %v4356 = vld [vmem:[#allocation3 + $0x84] sm:$0xf]
    %v4357 = vld [vmem:[#allocation3 + $0x88] sm:$0xf]
    %v4358 = vld [vmem:[#allocation3 + $0x8c] sm:$0xf]
    %v4359 = vld [vmem:[#allocation3 + $0x90] sm:$0xf]
    %v4360 = vld [vmem:[#allocation3 + $0x94] sm:$0xf]
    %v4361 = vld [vmem:[#allocation3 + $0x98] sm:$0xf]
    %v4362 = vld [vmem:[#allocation3 + $0x9c] sm:$0xf]
    %v4363 = vld [vmem:[#allocation3 + $0xa0] sm:$0xf]
    %v4364 = vld [vmem:[#allocation3 + $0xa4] sm:$0xf]
    %v4365 = vld [vmem:[#allocation3 + $0xa8] sm:$0xf]
    %v4366 = vld [vmem:[#allocation3 + $0xac] sm:$0xf]
    %v4367 = vld [vmem:[#allocation3 + $0xb0] sm:$0xf]
    %v4368 = vld [vmem:[#allocation3 + $0xb4] sm:$0xf]
    %v4369 = vld [vmem:[#allocation3 + $0xb8] sm:$0xf]
    %v4370 = vld [vmem:[#allocation3 + $0xbc] sm:$0xf]
    %v4371 = vld [vmem:[#allocation3 + $0xc0] sm:$0xf]
    %v4372 = vld [vmem:[#allocation3 + $0xc4] sm:$0xf]
    %v4373 = vld [vmem:[#allocation3 + $0xc8] sm:$0xf]
    %v4374 = vld [vmem:[#allocation3 + $0xcc] sm:$0xf]
    %v4375 = vld [vmem:[#allocation3 + $0xd0] sm:$0xf]
    %v4376 = vld [vmem:[#allocation3 + $0xd4] sm:$0xf]
    %v4377 = vld [vmem:[#allocation3 + $0xd8] sm:$0xf]
    %v4378 = vld [vmem:[#allocation3 + $0xdc] sm:$0xf]
    %v4379 = vld [vmem:[#allocation3 + $0xe0] sm:$0xf]
    %v4380 = vld [vmem:[#allocation3 + $0xe4] sm:$0xf]
    %v4381 = vld [vmem:[#allocation3 + $0xe8] sm:$0xf]
    %v4382 = vld [vmem:[#allocation3 + $0xec] sm:$0xf]
    %v4383 = vld [vmem:[#allocation3 + $0xf0] sm:$0xf]
    %v4384 = vld [vmem:[#allocation3 + $0xf4] sm:$0xf]
    %v4385 = vld [vmem:[#allocation3 + $0xf8] sm:$0xf]
    %v4386 = vld [vmem:[#allocation3 + $0xfc] sm:$0xf]
    %v4387 = vld [vmem:[#allocation3 + $0x100] sm:$0xf]
    %v4388 = vld [vmem:[#allocation3 + $0x104] sm:$0xf]
    %v4389 = vld [vmem:[#allocation3 + $0x108] sm:$0xf]
    %v4390 = vld [vmem:[#allocation3 + $0x10c] sm:$0xf]
    %v4391 = vld [vmem:[#allocation3 + $0x110] sm:$0xf]
    %v4392 = vld [vmem:[#allocation3 + $0x114] sm:$0xf]
    %v4393 = vld [vmem:[#allocation3 + $0x118] sm:$0xf]
    %v4394 = vld [vmem:[#allocation3 + $0x11c] sm:$0xf]
    %v4395 = vld [vmem:[#allocation3 + $0x120] sm:$0xf]
    %v4396 = vld [vmem:[#allocation3 + $0x124] sm:$0xf]
    %v4397 = vld [vmem:[#allocation3 + $0x128] sm:$0xf]
    %v4398 = vld [vmem:[#allocation3 + $0x12c] sm:$0xf]
    %v4399 = vld [vmem:[#allocation3 + $0x130] sm:$0xf]
    %v4400 = vld [vmem:[#allocation3 + $0x134] sm:$0xf]
    %v4401 = vld [vmem:[#allocation3 + $0x138] sm:$0xf]
    %v4402 = vld [vmem:[#allocation3 + $0x13c] sm:$0xf]
    %v4403 = vld [vmem:[#allocation3 + $0x140] sm:$0xf]
    %v4404 = vld [vmem:[#allocation3 + $0x144] sm:$0xf]
    %v4405 = vld [vmem:[#allocation3 + $0x148] sm:$0xf]
    %v4406 = vld [vmem:[#allocation3 + $0x14c] sm:$0xf]
    %v4407 = vld [vmem:[#allocation3 + $0x150] sm:$0xf]
    %v4408 = vld [vmem:[#allocation3 + $0x154] sm:$0xf]
    %v4409 = vld [vmem:[#allocation3 + $0x158] sm:$0xf]
    %v4410 = vld [vmem:[#allocation3 + $0x15c] sm:$0xf]
    %v4411 = vld [vmem:[#allocation3 + $0x160] sm:$0xf]
    %v4412 = vld [vmem:[#allocation3 + $0x164] sm:$0xf]
    %v4413 = vld [vmem:[#allocation3 + $0x168] sm:$0xf]
    %v4414 = vld [vmem:[#allocation3 + $0x16c] sm:$0xf]
    %v4415 = vld [vmem:[#allocation3 + $0x170] sm:$0xf]
    %v4416 = vld [vmem:[#allocation3 + $0x174] sm:$0xf]
    %v4417 = vld [vmem:[#allocation3 + $0x178] sm:$0xf]
    %v4418 = vld [vmem:[#allocation3 + $0x17c] sm:$0xf]
    %v4419 = vld [vmem:[#allocation3 + $0x180] sm:$0xf]
    %v4420 = vld [vmem:[#allocation3 + $0x184] sm:$0xf]
    %v4421 = vld [vmem:[#allocation3 + $0x188] sm:$0xf]
    %v4422 = vld [vmem:[#allocation3 + $0x18c] sm:$0xf]
    %v4423 = vld [vmem:[#allocation3 + $0x190] sm:$0xf]
    %v4424 = vld [vmem:[#allocation3 + $0x194] sm:$0xf]
    %v4425 = vld [vmem:[#allocation3 + $0x198] sm:$0xf]
    %v4426 = vld [vmem:[#allocation3 + $0x19c] sm:$0xf]
    %v4427 = vld [vmem:[#allocation3 + $0x1a0] sm:$0xf]
    %v4428 = vld [vmem:[#allocation3 + $0x1a4] sm:$0xf]
    %v4429 = vld [vmem:[#allocation3 + $0x1a8] sm:$0xf]
    %v4430 = vld [vmem:[#allocation3 + $0x1ac] sm:$0xf]
    %v4431 = vld [vmem:[#allocation3 + $0x1b0] sm:$0xf]
    %v4432 = vld [vmem:[#allocation3 + $0x1b4] sm:$0xf]
    %v4433 = vld [vmem:[#allocation3 + $0x1b8] sm:$0xf]
    %v4434 = vld [vmem:[#allocation3 + $0x1bc] sm:$0xf]
    %v4435 = vld [vmem:[#allocation3 + $0x1c0] sm:$0xf]
    %v4436 = vld [vmem:[#allocation3 + $0x1c4] sm:$0xf]
    %v4437 = vld [vmem:[#allocation3 + $0x1c8] sm:$0xf]
    %v4438 = vld [vmem:[#allocation3 + $0x1cc] sm:$0xf]
    %v4439 = vld [vmem:[#allocation3 + $0x1d0] sm:$0xf]
    %v4440 = vld [vmem:[#allocation3 + $0x1d4] sm:$0xf]
    %v4441 = vld [vmem:[#allocation3 + $0x1d8] sm:$0xf]
    %v4442 = vld [vmem:[#allocation3 + $0x1dc] sm:$0xf]
    %v4443 = vld [vmem:[#allocation3 + $0x1e0] sm:$0xf]
    %v4444 = vld [vmem:[#allocation3 + $0x1e4] sm:$0xf]
    %v4445 = vld [vmem:[#allocation3 + $0x1e8] sm:$0xf]
    %v4446 = vld [vmem:[#allocation3 + $0x1ec] sm:$0xf]
    %v4447 = vld [vmem:[#allocation3 + $0x1f0] sm:$0xf]
    %v4448 = vld [vmem:[#allocation3 + $0x1f4] sm:$0xf]
    %v4449 = vld [vmem:[#allocation3 + $0x1f8] sm:$0xf]
    %v4450 = vld [vmem:[#allocation3 + $0x1fc] sm:$0xf]
    %v4451 = vld [vmem:[#allocation3 + $0x200] sm:$0xf]
    %v4452 = vld [vmem:[#allocation3 + $0x204] sm:$0xf]
    %v4453 = vld [vmem:[#allocation3 + $0x208] sm:$0xf]
    %v4454 = vld [vmem:[#allocation3 + $0x20c] sm:$0xf]
    %v4455 = vld [vmem:[#allocation3 + $0x210] sm:$0xf]
    %v4456 = vld [vmem:[#allocation3 + $0x214] sm:$0xf]
    %v4457 = vld [vmem:[#allocation3 + $0x218] sm:$0xf]
    %v4458 = vld [vmem:[#allocation3 + $0x21c] sm:$0xf]
    %v4459 = vld [vmem:[#allocation3 + $0x220] sm:$0xf]
    %v4460 = vld [vmem:[#allocation3 + $0x224] sm:$0xf]
    %v4461 = vld [vmem:[#allocation3 + $0x228] sm:$0xf]
    %v4462 = vld [vmem:[#allocation3 + $0x22c] sm:$0xf]
    %v4463 = vld [vmem:[#allocation3 + $0x230] sm:$0xf]
    %v4464 = vld [vmem:[#allocation3 + $0x234] sm:$0xf]
    %v4465 = vld [vmem:[#allocation3 + $0x238] sm:$0xf]
    %v4466 = vld [vmem:[#allocation3 + $0x23c] sm:$0xf]
    %v4467 = vld [vmem:[#allocation3 + $0x240] sm:$0xf]
    %v4468 = vld [vmem:[#allocation3 + $0x244] sm:$0xf]
    %v4469 = vld [vmem:[#allocation3 + $0x248] sm:$0xf]
    %v4470 = vld [vmem:[#allocation3 + $0x24c] sm:$0xf]
    %v4471 = vld [vmem:[#allocation3 + $0x250] sm:$0xf]
    %v4472 = vld [vmem:[#allocation3 + $0x254] sm:$0xf]
    %v4473 = vld [vmem:[#allocation3 + $0x258] sm:$0xf]
    %v4474 = vld [vmem:[#allocation3 + $0x25c] sm:$0xf]
    %v4475 = vld [vmem:[#allocation3 + $0x260] sm:$0xf]
    %v4476 = vld [vmem:[#allocation3 + $0x264] sm:$0xf]
    %v4477 = vld [vmem:[#allocation3 + $0x268] sm:$0xf]
    %v4478 = vld [vmem:[#allocation3 + $0x26c] sm:$0xf]
    %v4479 = vld [vmem:[#allocation3 + $0x270] sm:$0xf]
    %v4480 = vld [vmem:[#allocation3 + $0x274] sm:$0xf]
    %v4481 = vld [vmem:[#allocation3 + $0x278] sm:$0xf]
    %v4482 = vld [vmem:[#allocation3 + $0x27c] sm:$0xf]
    %v4483 = vld [vmem:[%s8] sm:$0x1]
    %v4485 = vlaneseq
    %v4486 = vshrl.u32 %v4485, 7
    %v4487 = vsub.s32 0, %v4486
    %v4488 = vrot.slane %v4483, %v4487
    %v4495 = vunpack.c.l.b16 %v4318
    %v4496 = vunpack.c.h.b16 %v4318
    %v4497 = vunpack.c.l.b16 %v4319
    %v4498 = vunpack.c.h.b16 %v4319
    %v4499 = vunpack.c.l.b16 %v4320
    %v4500 = vunpack.c.h.b16 %v4320
    %v4501 = vunpack.c.l.b16 %v4321
    %v4502 = vunpack.c.h.b16 %v4321
    %v4503 = vunpack.c.l.b16 %v4322
    %v4504 = vunpack.c.h.b16 %v4322
    %v4505 = vpack.c.b16 %v4495, %v4495
    %v4506 = vpack.c.b16 %v4496, %v4496
    %v4507 = vpack.c.b16 %v4497, %v4497
    %v4508 = vpack.c.b16 %v4498, %v4498
    %v4509 = vpack.c.b16 %v4499, %v4499
    %v4510 = vpack.c.b16 %v4500, %v4500
    %v4511 = vpack.c.b16 %v4501, %v4501
    %v4512 = vpack.c.b16 %v4502, %v4502
    %v4513 = vpack.c.b16 %v4503, %v4503
    %v4514 = vpack.c.b16 %v4504, %v4504
    %v4685 = vunpack.c.l.b16 %v4323
    %v4686 = vunpack.c.l.b16 %v4324
    %v4687 = vunpack.c.l.b16 %v4325
    %v4688 = vunpack.c.l.b16 %v4326
    %v4689 = vunpack.c.l.b16 %v4327
    %v4690 = vunpack.c.l.b16 %v4328
    %v4691 = vunpack.c.l.b16 %v4329
    %v4692 = vunpack.c.l.b16 %v4330
    %v4693 = vunpack.c.l.b16 %v4331
    %v4694 = vunpack.c.l.b16 %v4332
    %v4695 = vunpack.c.l.b16 %v4333
    %v4696 = vunpack.c.l.b16 %v4334
    %v4697 = vunpack.c.l.b16 %v4335
    %v4698 = vunpack.c.l.b16 %v4336
    %v4699 = vunpack.c.l.b16 %v4337
    %v4700 = vunpack.c.l.b16 %v4338
    %v4701 = vunpack.c.l.b16 %v4339
    %v4702 = vunpack.c.l.b16 %v4340
    %v4703 = vunpack.c.l.b16 %v4341
    %v4704 = vunpack.c.l.b16 %v4342
    %v4705 = vunpack.c.l.b16 %v4343
    %v4706 = vunpack.c.l.b16 %v4344
    %v4707 = vunpack.c.l.b16 %v4345
    %v4708 = vunpack.c.l.b16 %v4346
    %v4709 = vunpack.c.l.b16 %v4347
    %v4710 = vunpack.c.l.b16 %v4348
    %v4711 = vunpack.c.l.b16 %v4349
    %v4712 = vunpack.c.l.b16 %v4350
    %v4713 = vunpack.c.l.b16 %v4351
    %v4714 = vunpack.c.l.b16 %v4352
    %v4715 = vunpack.c.l.b16 %v4353
    %v4716 = vunpack.c.l.b16 %v4354
    %v4717 = vunpack.c.l.b16 %v4355
    %v4718 = vunpack.c.l.b16 %v4356
    %v4719 = vunpack.c.l.b16 %v4357
    %v4720 = vunpack.c.l.b16 %v4358
    %v4721 = vunpack.c.l.b16 %v4359
    %v4722 = vunpack.c.l.b16 %v4360
    %v4723 = vunpack.c.l.b16 %v4361
    %v4724 = vunpack.c.l.b16 %v4362
    %v4725 = vunpack.c.l.b16 %v4363
    %v4726 = vunpack.c.l.b16 %v4364
    %v4727 = vunpack.c.l.b16 %v4365
    %v4728 = vunpack.c.l.b16 %v4366
    %v4729 = vunpack.c.l.b16 %v4367
    %v4730 = vunpack.c.l.b16 %v4368
    %v4731 = vunpack.c.l.b16 %v4369
    %v4732 = vunpack.c.l.b16 %v4370
    %v4733 = vunpack.c.l.b16 %v4371
    %v4734 = vunpack.c.l.b16 %v4372
    %v4735 = vunpack.c.l.b16 %v4373
    %v4736 = vunpack.c.l.b16 %v4374
    %v4737 = vunpack.c.l.b16 %v4375
    %v4738 = vunpack.c.l.b16 %v4376
    %v4739 = vunpack.c.l.b16 %v4377
    %v4740 = vunpack.c.l.b16 %v4378
    %v4741 = vunpack.c.l.b16 %v4379
    %v4742 = vunpack.c.l.b16 %v4380
    %v4743 = vunpack.c.l.b16 %v4381
    %v4744 = vunpack.c.l.b16 %v4382
    %v4745 = vunpack.c.l.b16 %v4383
    %v4746 = vunpack.c.l.b16 %v4384
    %v4747 = vunpack.c.l.b16 %v4385
    %v4748 = vunpack.c.l.b16 %v4386
    %v4749 = vunpack.c.l.b16 %v4387
    %v4750 = vunpack.c.l.b16 %v4388
    %v4751 = vunpack.c.l.b16 %v4389
    %v4752 = vunpack.c.l.b16 %v4390
    %v4753 = vunpack.c.l.b16 %v4391
    %v4754 = vunpack.c.l.b16 %v4392
    %v4755 = vunpack.c.l.b16 %v4393
    %v4756 = vunpack.c.l.b16 %v4394
    %v4757 = vunpack.c.l.b16 %v4395
    %v4758 = vunpack.c.l.b16 %v4396
    %v4759 = vunpack.c.l.b16 %v4397
    %v4760 = vunpack.c.l.b16 %v4398
    %v4761 = vunpack.c.l.b16 %v4399
    %v4762 = vunpack.c.l.b16 %v4400
    %v4763 = vunpack.c.l.b16 %v4401
    %v4764 = vunpack.c.l.b16 %v4402
    %v4765 = vunpack.c.l.b16 %v4403
    %v4766 = vunpack.c.l.b16 %v4404
    %v4767 = vunpack.c.l.b16 %v4405
    %v4768 = vunpack.c.l.b16 %v4406
    %v4769 = vunpack.c.l.b16 %v4407
    %v4770 = vunpack.c.l.b16 %v4408
    %v4771 = vunpack.c.l.b16 %v4409
    %v4772 = vunpack.c.l.b16 %v4410
    %v4773 = vunpack.c.l.b16 %v4411
    %v4774 = vunpack.c.l.b16 %v4412
    %v4775 = vunpack.c.l.b16 %v4413
    %v4776 = vunpack.c.l.b16 %v4414
    %v4777 = vunpack.c.l.b16 %v4415
    %v4778 = vunpack.c.l.b16 %v4416
    %v4779 = vunpack.c.l.b16 %v4417
    %v4780 = vunpack.c.l.b16 %v4418
    %v4781 = vunpack.c.l.b16 %v4419
    %v4782 = vunpack.c.l.b16 %v4420
    %v4783 = vunpack.c.l.b16 %v4421
    %v4784 = vunpack.c.l.b16 %v4422
    %v4785 = vunpack.c.l.b16 %v4423
    %v4786 = vunpack.c.l.b16 %v4424
    %v4787 = vunpack.c.l.b16 %v4425
    %v4788 = vunpack.c.l.b16 %v4426
    %v4789 = vunpack.c.l.b16 %v4427
    %v4790 = vunpack.c.l.b16 %v4428
    %v4791 = vunpack.c.l.b16 %v4429
    %v4792 = vunpack.c.l.b16 %v4430
    %v4793 = vunpack.c.l.b16 %v4431
    %v4794 = vunpack.c.l.b16 %v4432
    %v4795 = vunpack.c.l.b16 %v4433
    %v4796 = vunpack.c.l.b16 %v4434
    %v4797 = vunpack.c.l.b16 %v4435
    %v4798 = vunpack.c.l.b16 %v4436
    %v4799 = vunpack.c.l.b16 %v4437
    %v4800 = vunpack.c.l.b16 %v4438
    %v4801 = vunpack.c.l.b16 %v4439
    %v4802 = vunpack.c.l.b16 %v4440
    %v4803 = vunpack.c.l.b16 %v4441
    %v4804 = vunpack.c.l.b16 %v4442
    %v4805 = vunpack.c.l.b16 %v4443
    %v4806 = vunpack.c.l.b16 %v4444
    %v4807 = vunpack.c.l.b16 %v4445
    %v4808 = vunpack.c.l.b16 %v4446
    %v4809 = vunpack.c.l.b16 %v4447
    %v4810 = vunpack.c.l.b16 %v4448
    %v4811 = vunpack.c.l.b16 %v4449
    %v4812 = vunpack.c.l.b16 %v4450
    %v4813 = vunpack.c.l.b16 %v4451
    %v4814 = vunpack.c.l.b16 %v4452
    %v4815 = vunpack.c.l.b16 %v4453
    %v4816 = vunpack.c.l.b16 %v4454
    %v4817 = vunpack.c.l.b16 %v4455
    %v4818 = vunpack.c.l.b16 %v4456
    %v4819 = vunpack.c.l.b16 %v4457
    %v4820 = vunpack.c.l.b16 %v4458
    %v4821 = vunpack.c.l.b16 %v4459
    %v4822 = vunpack.c.l.b16 %v4460
    %v4823 = vunpack.c.l.b16 %v4461
    %v4824 = vunpack.c.l.b16 %v4462
    %v4825 = vunpack.c.l.b16 %v4463
    %v4826 = vunpack.c.l.b16 %v4464
    %v4827 = vunpack.c.l.b16 %v4465
    %v4828 = vunpack.c.l.b16 %v4466
    %v4829 = vunpack.c.l.b16 %v4467
    %v4830 = vunpack.c.l.b16 %v4468
    %v4831 = vunpack.c.l.b16 %v4469
    %v4832 = vunpack.c.l.b16 %v4470
    %v4833 = vunpack.c.l.b16 %v4471
    %v4834 = vunpack.c.l.b16 %v4472
    %v4835 = vunpack.c.l.b16 %v4473
    %v4836 = vunpack.c.l.b16 %v4474
    %v4837 = vunpack.c.l.b16 %v4475
    %v4838 = vunpack.c.l.b16 %v4476
    %v4839 = vunpack.c.l.b16 %v4477
    %v4840 = vunpack.c.l.b16 %v4478
    %v4841 = vunpack.c.l.b16 %v4479
    %v4842 = vunpack.c.l.b16 %v4480
    %v4843 = vunpack.c.l.b16 %v4481
    %v4844 = vunpack.c.l.b16 %v4482
    %v4845 = vpack.c.b16 %v4686, %v4685
    %v4846 = vpack.c.b16 %v4688, %v4687
    %v4847 = vpack.c.b16 %v4690, %v4689
    %v4848 = vpack.c.b16 %v4692, %v4691
    %v4849 = vpack.c.b16 %v4694, %v4693
    %v4850 = vpack.c.b16 %v4696, %v4695
    %v4851 = vpack.c.b16 %v4698, %v4697
    %v4852 = vpack.c.b16 %v4700, %v4699
    %v4853 = vpack.c.b16 %v4702, %v4701
    %v4854 = vpack.c.b16 %v4704, %v4703
    %v4855 = vpack.c.b16 %v4706, %v4705
    %v4856 = vpack.c.b16 %v4708, %v4707
    %v4857 = vpack.c.b16 %v4710, %v4709
    %v4858 = vpack.c.b16 %v4712, %v4711
    %v4859 = vpack.c.b16 %v4714, %v4713
    %v4860 = vpack.c.b16 %v4716, %v4715
    %v4861 = vpack.c.b16 %v4718, %v4717
    %v4862 = vpack.c.b16 %v4720, %v4719
    %v4863 = vpack.c.b16 %v4722, %v4721
    %v4864 = vpack.c.b16 %v4724, %v4723
    %v4865 = vpack.c.b16 %v4726, %v4725
    %v4866 = vpack.c.b16 %v4728, %v4727
    %v4867 = vpack.c.b16 %v4730, %v4729
    %v4868 = vpack.c.b16 %v4732, %v4731
    %v4869 = vpack.c.b16 %v4734, %v4733
    %v4870 = vpack.c.b16 %v4736, %v4735
    %v4871 = vpack.c.b16 %v4738, %v4737
    %v4872 = vpack.c.b16 %v4740, %v4739
    %v4873 = vpack.c.b16 %v4742, %v4741
    %v4874 = vpack.c.b16 %v4744, %v4743
    %v4875 = vpack.c.b16 %v4746, %v4745
    %v4876 = vpack.c.b16 %v4748, %v4747
    %v4877 = vpack.c.b16 %v4750, %v4749
    %v4878 = vpack.c.b16 %v4752, %v4751
    %v4879 = vpack.c.b16 %v4754, %v4753
    %v4880 = vpack.c.b16 %v4756, %v4755
    %v4881 = vpack.c.b16 %v4758, %v4757
    %v4882 = vpack.c.b16 %v4760, %v4759
    %v4883 = vpack.c.b16 %v4762, %v4761
    %v4884 = vpack.c.b16 %v4764, %v4763
    %v4885 = vpack.c.b16 %v4766, %v4765
    %v4886 = vpack.c.b16 %v4768, %v4767
    %v4887 = vpack.c.b16 %v4770, %v4769
    %v4888 = vpack.c.b16 %v4772, %v4771
    %v4889 = vpack.c.b16 %v4774, %v4773
    %v4890 = vpack.c.b16 %v4776, %v4775
    %v4891 = vpack.c.b16 %v4778, %v4777
    %v4892 = vpack.c.b16 %v4780, %v4779
    %v4893 = vpack.c.b16 %v4782, %v4781
    %v4894 = vpack.c.b16 %v4784, %v4783
    %v4895 = vpack.c.b16 %v4786, %v4785
    %v4896 = vpack.c.b16 %v4788, %v4787
    %v4897 = vpack.c.b16 %v4790, %v4789
    %v4898 = vpack.c.b16 %v4792, %v4791
    %v4899 = vpack.c.b16 %v4794, %v4793
    %v4900 = vpack.c.b16 %v4796, %v4795
    %v4901 = vpack.c.b16 %v4798, %v4797
    %v4902 = vpack.c.b16 %v4800, %v4799
    %v4903 = vpack.c.b16 %v4802, %v4801
    %v4904 = vpack.c.b16 %v4804, %v4803
    %v4905 = vpack.c.b16 %v4806, %v4805
    %v4906 = vpack.c.b16 %v4808, %v4807
    %v4907 = vpack.c.b16 %v4810, %v4809
    %v4908 = vpack.c.b16 %v4812, %v4811
    %v4909 = vpack.c.b16 %v4814, %v4813
    %v4910 = vpack.c.b16 %v4816, %v4815
    %v4911 = vpack.c.b16 %v4818, %v4817
    %v4912 = vpack.c.b16 %v4820, %v4819
    %v4913 = vpack.c.b16 %v4822, %v4821
    %v4914 = vpack.c.b16 %v4824, %v4823
    %v4915 = vpack.c.b16 %v4826, %v4825
    %v4916 = vpack.c.b16 %v4828, %v4827
    %v4917 = vpack.c.b16 %v4830, %v4829
    %v4918 = vpack.c.b16 %v4832, %v4831
    %v4919 = vpack.c.b16 %v4834, %v4833
    %v4920 = vpack.c.b16 %v4836, %v4835
    %v4921 = vpack.c.b16 %v4838, %v4837
    %v4922 = vpack.c.b16 %v4840, %v4839
    %v4923 = vpack.c.b16 %v4842, %v4841
    %v4924 = vpack.c.b16 %v4844, %v4843
    %5005 = vmatprep.subr.bf16.mxu0 0
    %5006 = vmatpush1.bf16.msra.mxu0 %v4852
    %5007 = vmatprep.subr.bf16.mxu0 0
    %5008 = vmatpush1.bf16.msra.mxu0 %v4851
    %5009 = vmatprep.subr.bf16.mxu0 0
    %5010 = vmatpush1.bf16.msra.mxu0 %v4850
    %5011 = vmatprep.subr.bf16.mxu0 0
    %5012 = vmatpush1.bf16.msra.mxu0 %v4849
    %5013 = vmatprep.subr.bf16.mxu0 0
    %5014 = vmatpush1.bf16.msra.mxu0 %v4848
    %5015 = vmatprep.subr.bf16.mxu0 0
    %5016 = vmatpush1.bf16.msra.mxu0 %v4847
    %5017 = vmatprep.subr.bf16.mxu0 0
    %5018 = vmatpush1.bf16.msra.mxu0 %v4846
    %5019 = vmatprep.subr.bf16.mxu0 0
    %5020 = vmatpush1.bf16.msra.mxu0 %v4845
    %5021 = vmatprep.subr.bf16.mxu0 0
    %5022 = vmatpush2.bf16.msra.mxu0 %v4860
    %5023 = vmatprep.subr.bf16.mxu0 0
    %5024 = vmatpush2.bf16.msra.mxu0 %v4859
    %5025 = vmatprep.subr.bf16.mxu0 0
    %5026 = vmatpush2.bf16.msra.mxu0 %v4858
    %5027 = vmatprep.subr.bf16.mxu0 0
    %5028 = vmatpush2.bf16.msra.mxu0 %v4857
    %5029 = vmatprep.subr.bf16.mxu0 0
    %5030 = vmatpush2.bf16.msra.mxu0 %v4856
    %5031 = vmatprep.subr.bf16.mxu0 0
    %5032 = vmatpush2.bf16.msra.mxu0 %v4855
    %5033 = vmatprep.subr.bf16.mxu0 0
    %5034 = vmatpush2.bf16.msra.mxu0 %v4854
    %5035 = vmatprep.subr.bf16.mxu0 0
    %5036 = vmatpush2.bf16.msra.mxu0 %v4853
    %5037 = vmatprep.mubr.bf16.mxu0 %v4506
    %5038 = vmatmul.mubr.bf16.gmra.mxu0 %v4505
    %v5039 = vpop.f32.mrf.mxu0
    %v5040 = vadd.f32 %v4488, %v5039
    %v5041 = vpop.f32.mrf.mxu0
    %v5042 = vpop.f32.mrf.mxu0
    %v5043 = vpop.f32.mrf.mxu0
    %5044 = vdwg.mxu0
    %5045 = vmatprep.subr.bf16.mxu0 0
    %5046 = vmatpush1.bf16.msra.mxu0 %v4868
    %5047 = vmatprep.subr.bf16.mxu0 0
    %5048 = vmatpush1.bf16.msra.mxu0 %v4867
    %5049 = vmatprep.subr.bf16.mxu0 0
    %5050 = vmatpush1.bf16.msra.mxu0 %v4866
    %5051 = vmatprep.subr.bf16.mxu0 0
    %5052 = vmatpush1.bf16.msra.mxu0 %v4865
    %5053 = vmatprep.subr.bf16.mxu0 0
    %5054 = vmatpush1.bf16.msra.mxu0 %v4864
    %5055 = vmatprep.subr.bf16.mxu0 0
    %5056 = vmatpush1.bf16.msra.mxu0 %v4863
    %5057 = vmatprep.subr.bf16.mxu0 0
    %5058 = vmatpush1.bf16.msra.mxu0 %v4862
    %5059 = vmatprep.subr.bf16.mxu0 0
    %5060 = vmatpush1.bf16.msra.mxu0 %v4861
    %5061 = vmatprep.subr.bf16.mxu0 0
    %5062 = vmatpush2.bf16.msra.mxu0 %v4876
    %5063 = vmatprep.subr.bf16.mxu0 0
    %5064 = vmatpush2.bf16.msra.mxu0 %v4875
    %5065 = vmatprep.subr.bf16.mxu0 0
    %5066 = vmatpush2.bf16.msra.mxu0 %v4874
    %5067 = vmatprep.subr.bf16.mxu0 0
    %5068 = vmatpush2.bf16.msra.mxu0 %v4873
    %5069 = vmatprep.subr.bf16.mxu0 0
    %5070 = vmatpush2.bf16.msra.mxu0 %v4872
    %5071 = vmatprep.subr.bf16.mxu0 0
    %5072 = vmatpush2.bf16.msra.mxu0 %v4871
    %5073 = vmatprep.subr.bf16.mxu0 0
    %5074 = vmatpush2.bf16.msra.mxu0 %v4870
    %5075 = vmatprep.subr.bf16.mxu0 0
    %5076 = vmatpush2.bf16.msra.mxu0 %v4869
    %5077 = vmatprep.mubr.bf16.mxu0 %v4508
    %5078 = vmatmul.mubr.bf16.gmra.mxu0 %v4507
    %v5079 = vpop.f32.mrf.mxu0
    %v5080 = vadd.f32 %v5040, %v5079
    %v5081 = vpop.f32.mrf.mxu0
    %v5082 = vpop.f32.mrf.mxu0
    %v5083 = vpop.f32.mrf.mxu0
    %5084 = vdwg.mxu0
    %5085 = vmatprep.subr.bf16.mxu0 0
    %5086 = vmatpush1.bf16.msra.mxu0 %v4884
    %5087 = vmatprep.subr.bf16.mxu0 0
    %5088 = vmatpush1.bf16.msra.mxu0 %v4883
    %5089 = vmatprep.subr.bf16.mxu0 0
    %5090 = vmatpush1.bf16.msra.mxu0 %v4882
    %5091 = vmatprep.subr.bf16.mxu0 0
    %5092 = vmatpush1.bf16.msra.mxu0 %v4881
    %5093 = vmatprep.subr.bf16.mxu0 0
    %5094 = vmatpush1.bf16.msra.mxu0 %v4880
    %5095 = vmatprep.subr.bf16.mxu0 0
    %5096 = vmatpush1.bf16.msra.mxu0 %v4879
    %5097 = vmatprep.subr.bf16.mxu0 0
    %5098 = vmatpush1.bf16.msra.mxu0 %v4878
    %5099 = vmatprep.subr.bf16.mxu0 0
    %5100 = vmatpush1.bf16.msra.mxu0 %v4877
    %5101 = vmatprep.subr.bf16.mxu0 0
    %5102 = vmatpush2.bf16.msra.mxu0 %v4892
    %5103 = vmatprep.subr.bf16.mxu0 0
    %5104 = vmatpush2.bf16.msra.mxu0 %v4891
    %5105 = vmatprep.subr.bf16.mxu0 0
    %5106 = vmatpush2.bf16.msra.mxu0 %v4890
    %5107 = vmatprep.subr.bf16.mxu0 0
    %5108 = vmatpush2.bf16.msra.mxu0 %v4889
    %5109 = vmatprep.subr.bf16.mxu0 0
    %5110 = vmatpush2.bf16.msra.mxu0 %v4888
    %5111 = vmatprep.subr.bf16.mxu0 0
    %5112 = vmatpush2.bf16.msra.mxu0 %v4887
    %5113 = vmatprep.subr.bf16.mxu0 0
    %5114 = vmatpush2.bf16.msra.mxu0 %v4886
    %5115 = vmatprep.subr.bf16.mxu0 0
    %5116 = vmatpush2.bf16.msra.mxu0 %v4885
    %5117 = vmatprep.mubr.bf16.mxu0 %v4510
    %5118 = vmatmul.mubr.bf16.gmra.mxu0 %v4509
    %v5119 = vpop.f32.mrf.mxu0
    %v5120 = vadd.f32 %v5080, %v5119
    %v5121 = vpop.f32.mrf.mxu0
    %v5122 = vpop.f32.mrf.mxu0
    %v5123 = vpop.f32.mrf.mxu0
    %5124 = vdwg.mxu0
    %5125 = vmatprep.subr.bf16.mxu0 0
    %5126 = vmatpush1.bf16.msra.mxu0 %v4900
    %5127 = vmatprep.subr.bf16.mxu0 0
    %5128 = vmatpush1.bf16.msra.mxu0 %v4899
    %5129 = vmatprep.subr.bf16.mxu0 0
    %5130 = vmatpush1.bf16.msra.mxu0 %v4898
    %5131 = vmatprep.subr.bf16.mxu0 0
    %5132 = vmatpush1.bf16.msra.mxu0 %v4897
    %5133 = vmatprep.subr.bf16.mxu0 0
    %5134 = vmatpush1.bf16.msra.mxu0 %v4896
    %5135 = vmatprep.subr.bf16.mxu0 0
    %5136 = vmatpush1.bf16.msra.mxu0 %v4895
    %5137 = vmatprep.subr.bf16.mxu0 0
    %5138 = vmatpush1.bf16.msra.mxu0 %v4894
    %5139 = vmatprep.subr.bf16.mxu0 0
    %5140 = vmatpush1.bf16.msra.mxu0 %v4893
    %5141 = vmatprep.subr.bf16.mxu0 0
    %5142 = vmatpush2.bf16.msra.mxu0 %v4908
    %5143 = vmatprep.subr.bf16.mxu0 0
    %5144 = vmatpush2.bf16.msra.mxu0 %v4907
    %5145 = vmatprep.subr.bf16.mxu0 0
    %5146 = vmatpush2.bf16.msra.mxu0 %v4906
    %5147 = vmatprep.subr.bf16.mxu0 0
    %5148 = vmatpush2.bf16.msra.mxu0 %v4905
    %5149 = vmatprep.subr.bf16.mxu0 0
    %5150 = vmatpush2.bf16.msra.mxu0 %v4904
    %5151 = vmatprep.subr.bf16.mxu0 0
    %5152 = vmatpush2.bf16.msra.mxu0 %v4903
    %5153 = vmatprep.subr.bf16.mxu0 0
    %5154 = vmatpush2.bf16.msra.mxu0 %v4902
    %5155 = vmatprep.subr.bf16.mxu0 0
    %5156 = vmatpush2.bf16.msra.mxu0 %v4901
    %5157 = vmatprep.mubr.bf16.mxu0 %v4512
    %5158 = vmatmul.mubr.bf16.gmra.mxu0 %v4511
    %v5159 = vpop.f32.mrf.mxu0
    %v5160 = vadd.f32 %v5120, %v5159
    %v5161 = vpop.f32.mrf.mxu0
    %v5162 = vpop.f32.mrf.mxu0
    %v5163 = vpop.f32.mrf.mxu0
    %5164 = vdwg.mxu0
    %5165 = vmatprep.subr.bf16.mxu0 0
    %5166 = vmatpush1.bf16.msra.mxu0 %v4916
    %5167 = vmatprep.subr.bf16.mxu0 0
    %5168 = vmatpush1.bf16.msra.mxu0 %v4915
    %5169 = vmatprep.subr.bf16.mxu0 0
    %5170 = vmatpush1.bf16.msra.mxu0 %v4914
    %5171 = vmatprep.subr.bf16.mxu0 0
    %5172 = vmatpush1.bf16.msra.mxu0 %v4913
    %5173 = vmatprep.subr.bf16.mxu0 0
    %5174 = vmatpush1.bf16.msra.mxu0 %v4912
    %5175 = vmatprep.subr.bf16.mxu0 0
    %5176 = vmatpush1.bf16.msra.mxu0 %v4911
    %5177 = vmatprep.subr.bf16.mxu0 0
    %5178 = vmatpush1.bf16.msra.mxu0 %v4910
    %5179 = vmatprep.subr.bf16.mxu0 0
    %5180 = vmatpush1.bf16.msra.mxu0 %v4909
    %5181 = vmatprep.subr.bf16.mxu0 0
    %5182 = vmatpush2.bf16.msra.mxu0 %v4924
    %5183 = vmatprep.subr.bf16.mxu0 0
    %5184 = vmatpush2.bf16.msra.mxu0 %v4923
    %5185 = vmatprep.subr.bf16.mxu0 0
    %5186 = vmatpush2.bf16.msra.mxu0 %v4922
    %5187 = vmatprep.subr.bf16.mxu0 0
    %5188 = vmatpush2.bf16.msra.mxu0 %v4921
    %5189 = vmatprep.subr.bf16.mxu0 0
    %5190 = vmatpush2.bf16.msra.mxu0 %v4920
    %5191 = vmatprep.subr.bf16.mxu0 0
    %5192 = vmatpush2.bf16.msra.mxu0 %v4919
    %5193 = vmatprep.subr.bf16.mxu0 0
    %5194 = vmatpush2.bf16.msra.mxu0 %v4918
    %5195 = vmatprep.subr.bf16.mxu0 0
    %5196 = vmatpush2.bf16.msra.mxu0 %v4917
    %5197 = vmatprep.mubr.bf16.mxu0 %v4514
    %5198 = vmatmul.mubr.bf16.gmra.mxu0 %v4513
    %v5199 = vpop.f32.mrf.mxu0
    %v5200 = vadd.f32 %v5160, %v5199
    %v5201 = vpop.f32.mrf.mxu0
    %v5202 = vpop.f32.mrf.mxu0
    %v5203 = vpop.f32.mrf.mxu0
    %5204 = vdwg.mxu0
    %v5205 = vmax.f32 %v5200, 0.0
    %v5206 = vld [vmem:[%s12] sm:$0xff]
    %v5207 = vld [vmem:[%s12 + $0x8] sm:$0xff]
    %v5208 = vld [vmem:[%s12 + $0x10] sm:$0xff]
    %v5209 = vld [vmem:[%s12 + $0x18] sm:$0xff]
    %v5210 = vld [vmem:[%s12 + $0x20] sm:$0xff]
    %v5211 = vld [vmem:[%s12 + $0x28] sm:$0xff]
    %v5212 = vld [vmem:[%s12 + $0x30] sm:$0xff]
    %v5213 = vld [vmem:[%s12 + $0x38] sm:$0xff]
    %v5214 = vld [vmem:[%s12 + $0x40] sm:$0xff]
    %v5215 = vld [vmem:[%s12 + $0x48] sm:$0xff]
    %v5216 = vld [vmem:[%s12 + $0x50] sm:$0xff]
    %v5217 = vld [vmem:[%s12 + $0x58] sm:$0xff]
    %v5218 = vld [vmem:[%s12 + $0x60] sm:$0xff]
    %v5219 = vld [vmem:[%s12 + $0x68] sm:$0xff]
    %v5220 = vld [vmem:[%s12 + $0x70] sm:$0xff]
    %v5221 = vld [vmem:[%s12 + $0x78] sm:$0xff]
    %v5222 = vld [vmem:[%s13] sm:$0x1]
    %v5224 = vlaneseq
    %v5225 = vshrl.u32 %v5224, 7
    %v5226 = vsub.s32 0, %v5225
    %v5227 = vrot.slane %v5222, %v5226
    %5229 = vmatprep.subr.mxu0 0.0
    %5230 = vmatpush1.msra.mxu0 %v5221
    %5231 = vmatprep.subr.mxu0 0.0
    %5232 = vmatpush1.msra.mxu0 %v5220
    %5233 = vmatprep.subr.mxu0 0.0
    %5234 = vmatpush1.msra.mxu0 %v5219
    %5235 = vmatprep.subr.mxu0 0.0
    %5236 = vmatpush1.msra.mxu0 %v5218
    %5237 = vmatprep.subr.mxu0 0.0
    %5238 = vmatpush1.msra.mxu0 %v5217
    %5239 = vmatprep.subr.mxu0 0.0
    %5240 = vmatpush1.msra.mxu0 %v5216
    %5241 = vmatprep.subr.mxu0 0.0
    %5242 = vmatpush1.msra.mxu0 %v5215
    %5243 = vmatprep.subr.mxu0 0.0
    %5244 = vmatpush1.msra.mxu0 %v5214
    %5245 = vmatprep.subr.mxu0 0.0
    %5246 = vmatpush1.msra.mxu0 %v5213
    %5247 = vmatprep.subr.mxu0 0.0
    %5248 = vmatpush1.msra.mxu0 %v5212
    %5249 = vmatprep.subr.mxu0 0.0
    %5250 = vmatpush1.msra.mxu0 %v5211
    %5251 = vmatprep.subr.mxu0 0.0
    %5252 = vmatpush1.msra.mxu0 %v5210
    %5253 = vmatprep.subr.mxu0 0.0
    %5254 = vmatpush1.msra.mxu0 %v5209
    %5255 = vmatprep.subr.mxu0 0.0
    %5256 = vmatpush1.msra.mxu0 %v5208
    %5257 = vmatprep.subr.mxu0 0.0
    %5258 = vmatpush1.msra.mxu0 %v5207
    %5259 = vmatprep.subr.mxu0 0.0
    %5260 = vmatpush1.msra.mxu0 %v5206
    %5261 = vmatprep.subr.mxu0 0.0
    %5262 = vmatpush2.msra.mxu0 0.0
    %5263 = vmatprep.subr.mxu0 0.0
    %5264 = vmatpush2.msra.mxu0 0.0
    %5265 = vmatprep.subr.mxu0 0.0
    %5266 = vmatpush2.msra.mxu0 0.0
    %5267 = vmatprep.subr.mxu0 0.0
    %5268 = vmatpush2.msra.mxu0 0.0
    %5269 = vmatprep.subr.mxu0 0.0
    %5270 = vmatpush2.msra.mxu0 0.0
    %5271 = vmatprep.subr.mxu0 0.0
    %5272 = vmatpush2.msra.mxu0 0.0
    %5273 = vmatprep.subr.mxu0 0.0
    %5274 = vmatpush2.msra.mxu0 0.0
    %5275 = vmatprep.subr.mxu0 0.0
    %5276 = vmatpush2.msra.mxu0 0.0
    %5277 = vmatprep.subr.mxu0 0.0
    %5278 = vmatpush2.msra.mxu0 0.0
    %5279 = vmatprep.subr.mxu0 0.0
    %5280 = vmatpush2.msra.mxu0 0.0
    %5281 = vmatprep.subr.mxu0 0.0
    %5282 = vmatpush2.msra.mxu0 0.0
    %5283 = vmatprep.subr.mxu0 0.0
    %5284 = vmatpush2.msra.mxu0 0.0
    %5285 = vmatprep.subr.mxu0 0.0
    %5286 = vmatpush2.msra.mxu0 0.0
    %5287 = vmatprep.subr.mxu0 0.0
    %5288 = vmatpush2.msra.mxu0 0.0
    %5289 = vmatprep.subr.mxu0 0.0
    %5290 = vmatpush2.msra.mxu0 0.0
    %5291 = vmatprep.subr.mxu0 0.0
    %5292 = vmatpush2.msra.mxu0 0.0
    %5293 = vmatprep.mubr.f32.mxu0 0.0
    %5294 = vmatmul.mubr.f32.gmra.mxu0 %v5205
    %v5295 = vpop.f32.mrf.mxu0
    %v5296 = vadd.f32 %v5227, %v5295
    %v5297 = vpop.f32.mrf.mxu0
    %5298 = vdwg.mxu0
    %v5299 = vld [vmem:[%s14] sm:$0xff]
    %v5300 = vld [vmem:[%s14 + $0x8] sm:$0xff]
    %v5301 = vld [vmem:[%s14 + $0x10] sm:$0xff]
    %v5302 = vld [vmem:[%s14 + $0x18] sm:$0xff]
    %v5303 = vld [vmem:[%s14 + $0x20] sm:$0xff]
    %v5304 = vld [vmem:[%s14 + $0x28] sm:$0xff]
    %v5305 = vld [vmem:[%s14 + $0x30] sm:$0xff]
    %v5306 = vld [vmem:[%s14 + $0x38] sm:$0xff]
    %v5307 = vld [vmem:[%s14 + $0x40] sm:$0xff]
    %v5308 = vld [vmem:[%s14 + $0x48] sm:$0xff]
    %v5309 = vld [vmem:[%s14 + $0x50] sm:$0xff]
    %v5310 = vld [vmem:[%s14 + $0x58] sm:$0xff]
    %v5311 = vld [vmem:[%s14 + $0x60] sm:$0xff]
    %v5312 = vld [vmem:[%s14 + $0x68] sm:$0xff]
    %v5313 = vld [vmem:[%s14 + $0x70] sm:$0xff]
    %v5314 = vld [vmem:[%s14 + $0x78] sm:$0xff]
    %v5315 = vld [vmem:[%s15] sm:$0x1]
    %v5317 = vlaneseq
    %v5318 = vshrl.u32 %v5317, 7
    %v5319 = vsub.s32 0, %v5318
    %v5320 = vrot.slane %v5315, %v5319
    %5322 = vmatprep.subr.mxu0 0.0
    %5323 = vmatpush1.msra.mxu0 %v5314
    %5324 = vmatprep.subr.mxu0 0.0
    %5325 = vmatpush1.msra.mxu0 %v5313
    %5326 = vmatprep.subr.mxu0 0.0
    %5327 = vmatpush1.msra.mxu0 %v5312
    %5328 = vmatprep.subr.mxu0 0.0
    %5329 = vmatpush1.msra.mxu0 %v5311
    %5330 = vmatprep.subr.mxu0 0.0
    %5331 = vmatpush1.msra.mxu0 %v5310
    %5332 = vmatprep.subr.mxu0 0.0
    %5333 = vmatpush1.msra.mxu0 %v5309
    %5334 = vmatprep.subr.mxu0 0.0
    %5335 = vmatpush1.msra.mxu0 %v5308
    %5336 = vmatprep.subr.mxu0 0.0
    %5337 = vmatpush1.msra.mxu0 %v5307
    %5338 = vmatprep.subr.mxu0 0.0
    %5339 = vmatpush1.msra.mxu0 %v5306
    %5340 = vmatprep.subr.mxu0 0.0
    %5341 = vmatpush1.msra.mxu0 %v5305
    %5342 = vmatprep.subr.mxu0 0.0
    %5343 = vmatpush1.msra.mxu0 %v5304
    %5344 = vmatprep.subr.mxu0 0.0
    %5345 = vmatpush1.msra.mxu0 %v5303
    %5346 = vmatprep.subr.mxu0 0.0
    %5347 = vmatpush1.msra.mxu0 %v5302
    %5348 = vmatprep.subr.mxu0 0.0
    %5349 = vmatpush1.msra.mxu0 %v5301
    %5350 = vmatprep.subr.mxu0 0.0
    %5351 = vmatpush1.msra.mxu0 %v5300
    %5352 = vmatprep.subr.mxu0 0.0
    %5353 = vmatpush1.msra.mxu0 %v5299
    %5354 = vmatprep.subr.mxu0 0.0
    %5355 = vmatpush2.msra.mxu0 0.0
    %5356 = vmatprep.subr.mxu0 0.0
    %5357 = vmatpush2.msra.mxu0 0.0
    %5358 = vmatprep.subr.mxu0 0.0
    %5359 = vmatpush2.msra.mxu0 0.0
    %5360 = vmatprep.subr.mxu0 0.0
    %5361 = vmatpush2.msra.mxu0 0.0
    %5362 = vmatprep.subr.mxu0 0.0
    %5363 = vmatpush2.msra.mxu0 0.0
    %5364 = vmatprep.subr.mxu0 0.0
    %5365 = vmatpush2.msra.mxu0 0.0
    %5366 = vmatprep.subr.mxu0 0.0
    %5367 = vmatpush2.msra.mxu0 0.0
    %5368 = vmatprep.subr.mxu0 0.0
    %5369 = vmatpush2.msra.mxu0 0.0
    %5370 = vmatprep.subr.mxu0 0.0
    %5371 = vmatpush2.msra.mxu0 0.0
    %5372 = vmatprep.subr.mxu0 0.0
    %5373 = vmatpush2.msra.mxu0 0.0
    %5374 = vmatprep.subr.mxu0 0.0
    %5375 = vmatpush2.msra.mxu0 0.0
    %5376 = vmatprep.subr.mxu0 0.0
    %5377 = vmatpush2.msra.mxu0 0.0
    %5378 = vmatprep.subr.mxu0 0.0
    %5379 = vmatpush2.msra.mxu0 0.0
    %5380 = vmatprep.subr.mxu0 0.0
    %5381 = vmatpush2.msra.mxu0 0.0
    %5382 = vmatprep.subr.mxu0 0.0
    %5383 = vmatpush2.msra.mxu0 0.0
    %5384 = vmatprep.subr.mxu0 0.0
    %5385 = vmatpush2.msra.mxu0 0.0
    %5386 = vmatprep.mubr.f32.mxu0 0.0
    %5387 = vmatmul.mubr.f32.gmra.mxu0 %v5205
    %v5388 = vpop.f32.mrf.mxu0
    %v5389 = vadd.f32 %v5320, %v5388
    %v5390 = vpop.f32.mrf.mxu0
    %5391 = vdwg.mxu0
    %v5392 = vmax.f32 %v5389, 0.0
    %v5393 = vand.u32 2147483647, %v5389
    %v5394 = vsub.f32 0.0, %v5393
    %v5395 = vmul.f32 %v5394, 1.442695
    %v5396 = vpow.pop %v5395
    %v5397 = vadd.f32 %v5396, 1.0
    %v5398 = vlog2.pop %v5397
    %v5399 = vmul.f32 %v5398, 0.6931472
    %v5400 = vadd.f32 %v5392, %v5399
    %v5401 = vmax.f32 %v5400, 1e-07
    %v5402 = vlaneseq
    %v5403 = vshrl.u32 %v5402, 7
    %vm5404 = vcmp.ge.s32.totalorder %v5403, 2
    %vm5405 = vcmp.lt.s32.totalorder %v5403, 6
    %vm5406 = vmand %vm5404, %vm5405
    %v5407 = vsel %vm5406, 1, 0
    %v5408 = vcvt.s32.f32 %v5407
    %v5409 = vrcp.pop %v5401
    %v5410 = vmul.f32 %v5408, %v5409
    %vm5411 = vcmask 64512
    %v5412 = vsel %vm5411, %v5410, 0.0
    %v5413 = vrot.slane %v5412, 4
    %v5414 = vadd.f32 %v5412, %v5413
    %v5415 = vrot.slane %v5414, 2
    %v5416 = vadd.f32 %v5414, %v5415
    %v5417 = vrot.slane %v5416, 1
    %v5418 = vadd.f32 %v5416, %v5417
    %v5419 = vrcp.pop %v5418
    %v5420 = vmul.f32 1.0, %v5419
    %v5421 = vmul.f32 %v5296, %v5410
    %v5422 = vsel %vm5411, %v5421, 0.0
    %v5423 = vrot.slane %v5422, 4
    %v5424 = vadd.f32 %v5422, %v5423
    %v5425 = vrot.slane %v5424, 2
    %v5426 = vadd.f32 %v5424, %v5425
    %v5427 = vrot.slane %v5426, 1
    %v5428 = vadd.f32 %v5426, %v5427
    %v5429 = vmul.f32 %v5420, %v5428
    %v5430 = vrsqrt.pop %v5420
    %v5431 = vmul.f32 %v5420, %v5430
    %vm5432 = vcmp.eq.f32.partialorder %v5420, inf
    %v5433 = vsel %vm5432, %v5420, %v5431
    %vm5434 = vcmp.eq.f32.partialorder %v5420, 0.0
    %v5435 = vand.u32 %v5420, 2147483648
    %v5436 = vsel %vm5434, %v5435, %v5433
    %v5437 = vld [vmem:[%s2] sm:$0x1]
    %v5438 = vmul.f32 %v5436, %v5437
    %v5439 = vadd.f32 %v5429, %v5438
    %v5440 = vmul.f32 %v5429, %v5429
    %v5441 = vadd.f32 %v5420, %v5440
    %v5442 = vsub.f32 %v5441, 1.0
    %v5443 = vmul.f32 %v5442, 0.5
    %v5444 = vlog2.pop %v5420
    %v5445 = vmul.f32 %v5444, 0.6931472
    %v5446 = vmul.f32 %v5445, 0.5
    %v5447 = vsub.f32 %v5443, %v5446
    %v5448 = vsel %vm5411, %v5447, 0.0
    %5449 = vadd.xlane.f32.xlu0 %v5448
    %v5450 = vpop.xlane.xlu0 %5449
    %vm5451 = vcmask 0
    %5452 = vst.msk [vmem:[#allocation7] sm:$0x1] %vm5451, %v5450
    %v5453 = vld [vmem:[%s9] sm:$0xff]
    %v5455 = vsel %vm5411, %v5439, 0
    %5457 = vmatprep.subr.mxu0 0.0
    %5458 = vmatpush1.msra.mxu0 0.0
    %5459 = vmatprep.subr.mxu0 0.0
    %5460 = vmatpush1.msra.mxu0 0.0
    %5461 = vmatprep.subr.mxu0 0.0
    %5462 = vmatpush1.msra.mxu0 0.0
    %5463 = vmatprep.subr.mxu0 0.0
    %5464 = vmatpush1.msra.mxu0 0.0
    %5465 = vmatprep.subr.mxu0 0.0
    %5466 = vmatpush1.msra.mxu0 0.0
    %5467 = vmatprep.subr.mxu0 0.0
    %5468 = vmatpush1.msra.mxu0 0.0
    %5469 = vmatprep.subr.mxu0 0.0
    %5470 = vmatpush1.msra.mxu0 0.0
    %5471 = vmatprep.subr.mxu0 0.0
    %5472 = vmatpush1.msra.mxu0 0.0
    %5473 = vmatprep.subr.mxu0 0.0
    %5474 = vmatpush1.msra.mxu0 0.0
    %5475 = vmatprep.subr.mxu0 0.0
    %5476 = vmatpush1.msra.mxu0 0.0
    %5477 = vmatprep.subr.mxu0 0.0
    %5478 = vmatpush1.msra.mxu0 0.0
    %5479 = vmatprep.subr.mxu0 0.0
    %5480 = vmatpush1.msra.mxu0 0.0
    %5481 = vmatprep.subr.mxu0 0.0
    %5482 = vmatpush1.msra.mxu0 0.0
    %5483 = vmatprep.subr.mxu0 0.0
    %5484 = vmatpush1.msra.mxu0 0.0
    %5485 = vmatprep.subr.mxu0 0.0
    %5486 = vmatpush1.msra.mxu0 0.0
    %5487 = vmatprep.subr.mxu0 0.0
    %5488 = vmatpush1.msra.mxu0 %v5453
    %5489 = vmatprep.subr.mxu0 0.0
    %5490 = vmatpush2.msra.mxu0 0.0
    %5491 = vmatprep.subr.mxu0 0.0
    %5492 = vmatpush2.msra.mxu0 0.0
    %5493 = vmatprep.subr.mxu0 0.0
    %5494 = vmatpush2.msra.mxu0 0.0
    %5495 = vmatprep.subr.mxu0 0.0
    %5496 = vmatpush2.msra.mxu0 0.0
    %5497 = vmatprep.subr.mxu0 0.0
    %5498 = vmatpush2.msra.mxu0 0.0
    %5499 = vmatprep.subr.mxu0 0.0
    %5500 = vmatpush2.msra.mxu0 0.0
    %5501 = vmatprep.subr.mxu0 0.0
    %5502 = vmatpush2.msra.mxu0 0.0
    %5503 = vmatprep.subr.mxu0 0.0
    %5504 = vmatpush2.msra.mxu0 0.0
    %5505 = vmatprep.subr.mxu0 0.0
    %5506 = vmatpush2.msra.mxu0 0.0
    %5507 = vmatprep.subr.mxu0 0.0
    %5508 = vmatpush2.msra.mxu0 0.0
    %5509 = vmatprep.subr.mxu0 0.0
    %5510 = vmatpush2.msra.mxu0 0.0
    %5511 = vmatprep.subr.mxu0 0.0
    %5512 = vmatpush2.msra.mxu0 0.0
    %5513 = vmatprep.subr.mxu0 0.0
    %5514 = vmatpush2.msra.mxu0 0.0
    %5515 = vmatprep.subr.mxu0 0.0
    %5516 = vmatpush2.msra.mxu0 0.0
    %5517 = vmatprep.subr.mxu0 0.0
    %5518 = vmatpush2.msra.mxu0 0.0
    %5519 = vmatprep.subr.mxu0 0.0
    %5520 = vmatpush2.msra.mxu0 0.0
    %5521 = vmatprep.mubr.f32.mxu0 0.0
    %5522 = vmatmul.mubr.f32.gmra.mxu0 %v5455
    %v5523 = vpop.f32.mrf.mxu0
    %v5524 = vadd.f32 0.0, %v5523
    %v5525 = vpop.f32.mrf.mxu0
    %5526 = vdwg.mxu0
    %v5527 = vlaneseq
    %v5528 = vshrl.u32 %v5527, 7
    %v5529 = vsub.s32 0, %v5528
    %v5530 = vrot.slane %v5524, %v5529
    %v5531 = vadd.f32 %v5200, %v5530
    %v5532 = vmax.f32 %v5531, 0.0
    %v5533 = vld [vmem:[%s10] sm:$0xff]
    %v5534 = vld [vmem:[%s10 + $0x8] sm:$0xff]
    %v5535 = vld [vmem:[%s10 + $0x10] sm:$0xff]
    %v5536 = vld [vmem:[%s10 + $0x18] sm:$0xff]
    %v5537 = vld [vmem:[%s10 + $0x20] sm:$0xff]
    %v5538 = vld [vmem:[%s10 + $0x28] sm:$0xff]
    %v5539 = vld [vmem:[%s10 + $0x30] sm:$0xff]
    %v5540 = vld [vmem:[%s10 + $0x38] sm:$0xff]
    %v5541 = vld [vmem:[%s10 + $0x40] sm:$0xff]
    %v5542 = vld [vmem:[%s10 + $0x48] sm:$0xff]
    %v5543 = vld [vmem:[%s10 + $0x50] sm:$0xff]
    %v5544 = vld [vmem:[%s10 + $0x58] sm:$0xff]
    %v5545 = vld [vmem:[%s10 + $0x60] sm:$0xff]
    %v5546 = vld [vmem:[%s10 + $0x68] sm:$0xff]
    %v5547 = vld [vmem:[%s10 + $0x70] sm:$0xff]
    %v5548 = vld [vmem:[%s10 + $0x78] sm:$0xff]
    %v5549 = vld [vmem:[%s11] sm:$0x1]
    %v5551 = vlaneseq
    %v5552 = vshrl.u32 %v5551, 7
    %v5553 = vsub.s32 0, %v5552
    %v5554 = vrot.slane %v5549, %v5553
    %5556 = vmatprep.subr.mxu0 0.0
    %5557 = vmatpush1.msra.mxu0 %v5548
    %5558 = vmatprep.subr.mxu0 0.0
    %5559 = vmatpush1.msra.mxu0 %v5547
    %5560 = vmatprep.subr.mxu0 0.0
    %5561 = vmatpush1.msra.mxu0 %v5546
    %5562 = vmatprep.subr.mxu0 0.0
    %5563 = vmatpush1.msra.mxu0 %v5545
    %5564 = vmatprep.subr.mxu0 0.0
    %5565 = vmatpush1.msra.mxu0 %v5544
    %5566 = vmatprep.subr.mxu0 0.0
    %5567 = vmatpush1.msra.mxu0 %v5543
    %5568 = vmatprep.subr.mxu0 0.0
    %5569 = vmatpush1.msra.mxu0 %v5542
    %5570 = vmatprep.subr.mxu0 0.0
    %5571 = vmatpush1.msra.mxu0 %v5541
    %5572 = vmatprep.subr.mxu0 0.0
    %5573 = vmatpush1.msra.mxu0 %v5540
    %5574 = vmatprep.subr.mxu0 0.0
    %5575 = vmatpush1.msra.mxu0 %v5539
    %5576 = vmatprep.subr.mxu0 0.0
    %5577 = vmatpush1.msra.mxu0 %v5538
    %5578 = vmatprep.subr.mxu0 0.0
    %5579 = vmatpush1.msra.mxu0 %v5537
    %5580 = vmatprep.subr.mxu0 0.0
    %5581 = vmatpush1.msra.mxu0 %v5536
    %5582 = vmatprep.subr.mxu0 0.0
    %5583 = vmatpush1.msra.mxu0 %v5535
    %5584 = vmatprep.subr.mxu0 0.0
    %5585 = vmatpush1.msra.mxu0 %v5534
    %5586 = vmatprep.subr.mxu0 0.0
    %5587 = vmatpush1.msra.mxu0 %v5533
    %5588 = vmatprep.subr.mxu0 0.0
    %5589 = vmatpush2.msra.mxu0 0.0
    %5590 = vmatprep.subr.mxu0 0.0
    %5591 = vmatpush2.msra.mxu0 0.0
    %5592 = vmatprep.subr.mxu0 0.0
    %5593 = vmatpush2.msra.mxu0 0.0
    %5594 = vmatprep.subr.mxu0 0.0
    %5595 = vmatpush2.msra.mxu0 0.0
    %5596 = vmatprep.subr.mxu0 0.0
    %5597 = vmatpush2.msra.mxu0 0.0
    %5598 = vmatprep.subr.mxu0 0.0
    %5599 = vmatpush2.msra.mxu0 0.0
    %5600 = vmatprep.subr.mxu0 0.0
    %5601 = vmatpush2.msra.mxu0 0.0
    %5602 = vmatprep.subr.mxu0 0.0
    %5603 = vmatpush2.msra.mxu0 0.0
    %5604 = vmatprep.subr.mxu0 0.0
    %5605 = vmatpush2.msra.mxu0 0.0
    %5606 = vmatprep.subr.mxu0 0.0
    %5607 = vmatpush2.msra.mxu0 0.0
    %5608 = vmatprep.subr.mxu0 0.0
    %5609 = vmatpush2.msra.mxu0 0.0
    %5610 = vmatprep.subr.mxu0 0.0
    %5611 = vmatpush2.msra.mxu0 0.0
    %5612 = vmatprep.subr.mxu0 0.0
    %5613 = vmatpush2.msra.mxu0 0.0
    %5614 = vmatprep.subr.mxu0 0.0
    %5615 = vmatpush2.msra.mxu0 0.0
    %5616 = vmatprep.subr.mxu0 0.0
    %5617 = vmatpush2.msra.mxu0 0.0
    %5618 = vmatprep.subr.mxu0 0.0
    %5619 = vmatpush2.msra.mxu0 0.0
    %5620 = vmatprep.mubr.f32.mxu0 0.0
    %5621 = vmatmul.mubr.f32.gmra.mxu0 %v5532
    %v5622 = vpop.f32.mrf.mxu0
    %v5623 = vadd.f32 %v5554, %v5622
    %v5624 = vpop.f32.mrf.mxu0
    %5625 = vdwg.mxu0
    %5626 = vmax.xlane.f32.xlu0 %v5623
    %v5627 = vpop.xlane.xlu0 %5626
    %v5628 = vsub.f32 %v5623, %v5627
    %v5629 = vmul.f32 %v5628, 1.442695
    %v5630 = vpow.pop %v5629
    %v5631 = vld [vmem:[%s16] sm:$0xff]
    %v5632 = vld [vmem:[%s16 + $0x8] sm:$0xff]
    %v5633 = vld [vmem:[%s16 + $0x10] sm:$0xff]
    %v5634 = vld [vmem:[%s16 + $0x18] sm:$0xff]
    %v5635 = vld [vmem:[%s16 + $0x20] sm:$0xff]
    %v5636 = vld [vmem:[%s16 + $0x28] sm:$0xff]
    %v5637 = vld [vmem:[%s16 + $0x30] sm:$0xff]
    %v5638 = vld [vmem:[%s16 + $0x38] sm:$0xff]
    %v5639 = vld [vmem:[%s16 + $0x40] sm:$0xff]
    %v5640 = vld [vmem:[%s16 + $0x48] sm:$0xff]
    %v5641 = vld [vmem:[%s16 + $0x50] sm:$0xff]
    %v5642 = vld [vmem:[%s16 + $0x58] sm:$0xff]
    %v5643 = vld [vmem:[%s16 + $0x60] sm:$0xff]
    %v5644 = vld [vmem:[%s16 + $0x68] sm:$0xff]
    %v5645 = vld [vmem:[%s16 + $0x70] sm:$0xff]
    %v5646 = vld [vmem:[%s16 + $0x78] sm:$0xff]
    %5647 = vmatprep.subr.mxu0 0.0
    %5648 = vmatpush1.msra.mxu0 %v5646
    %5649 = vmatprep.subr.mxu0 0.0
    %5650 = vmatpush1.msra.mxu0 %v5645
    %5651 = vmatprep.subr.mxu0 0.0
    %5652 = vmatpush1.msra.mxu0 %v5644
    %5653 = vmatprep.subr.mxu0 0.0
    %5654 = vmatpush1.msra.mxu0 %v5643
    %5655 = vmatprep.subr.mxu0 0.0
    %5656 = vmatpush1.msra.mxu0 %v5642
    %5657 = vmatprep.subr.mxu0 0.0
    %5658 = vmatpush1.msra.mxu0 %v5641
    %5659 = vmatprep.subr.mxu0 0.0
    %5660 = vmatpush1.msra.mxu0 %v5640
    %5661 = vmatprep.subr.mxu0 0.0
    %5662 = vmatpush1.msra.mxu0 %v5639
    %5663 = vmatprep.subr.mxu0 0.0
    %5664 = vmatpush1.msra.mxu0 %v5638
    %5665 = vmatprep.subr.mxu0 0.0
    %5666 = vmatpush1.msra.mxu0 %v5637
    %5667 = vmatprep.subr.mxu0 0.0
    %5668 = vmatpush1.msra.mxu0 %v5636
    %5669 = vmatprep.subr.mxu0 0.0
    %5670 = vmatpush1.msra.mxu0 %v5635
    %5671 = vmatprep.subr.mxu0 0.0
    %5672 = vmatpush1.msra.mxu0 %v5634
    %5673 = vmatprep.subr.mxu0 0.0
    %5674 = vmatpush1.msra.mxu0 %v5633
    %5675 = vmatprep.subr.mxu0 0.0
    %5676 = vmatpush1.msra.mxu0 %v5632
    %5677 = vmatprep.subr.mxu0 0.0
    %5678 = vmatpush1.msra.mxu0 %v5631
    %5679 = vmatprep.subr.mxu0 0.0
    %5680 = vmatpush2.msra.mxu0 0.0
    %5681 = vmatprep.subr.mxu0 0.0
    %5682 = vmatpush2.msra.mxu0 0.0
    %5683 = vmatprep.subr.mxu0 0.0
    %5684 = vmatpush2.msra.mxu0 0.0
    %5685 = vmatprep.subr.mxu0 0.0
    %5686 = vmatpush2.msra.mxu0 0.0
    %5687 = vmatprep.subr.mxu0 0.0
    %5688 = vmatpush2.msra.mxu0 0.0
    %5689 = vmatprep.subr.mxu0 0.0
    %5690 = vmatpush2.msra.mxu0 0.0
    %5691 = vmatprep.subr.mxu0 0.0
    %5692 = vmatpush2.msra.mxu0 0.0
    %5693 = vmatprep.subr.mxu0 0.0
    %5694 = vmatpush2.msra.mxu0 0.0
    %5695 = vmatprep.subr.mxu0 0.0
    %5696 = vmatpush2.msra.mxu0 0.0
    %5697 = vmatprep.subr.mxu0 0.0
    %5698 = vmatpush2.msra.mxu0 0.0
    %5699 = vmatprep.subr.mxu0 0.0
    %5700 = vmatpush2.msra.mxu0 0.0
    %5701 = vmatprep.subr.mxu0 0.0
    %5702 = vmatpush2.msra.mxu0 0.0
    %5703 = vmatprep.subr.mxu0 0.0
    %5704 = vmatpush2.msra.mxu0 0.0
    %5705 = vmatprep.subr.mxu0 0.0
    %5706 = vmatpush2.msra.mxu0 0.0
    %5707 = vmatprep.subr.mxu0 0.0
    %5708 = vmatpush2.msra.mxu0 0.0
    %5709 = vmatprep.subr.mxu0 0.0
    %5710 = vmatpush2.msra.mxu0 0.0
    %5711 = vmatprep.mubr.f32.mxu0 0.0
    %5712 = vmatmul.mubr.f32.gmra.mxu0 %v5630
    %v5713 = vpop.f32.mrf.mxu0
    %v5714 = vadd.f32 0.0, %v5713
    %v5715 = vpop.f32.mrf.mxu0
    %5716 = vdwg.mxu0
    %v5717 = vrcp.pop %v5714
    %v5718 = vmul.f32 %v5714, %v5717
    %v5719 = vsub.f32 2.0, %v5718
    %v5720 = vmul.f32 %v5717, %v5719
    %v5721 = vmul.f32 %v5630, %v5720
    %5722 = vst [vmem:[%s17] sm:$0xff] %v5721
    // Predicated region
    $region130: #{pearl_dqn_forward.1} parent=1 // pred_check
      _
    $region131: #{pearl_dqn_forward.1} parent=1 // pred_check_branch
      %5724 = sbr.rel (0) target = $region133
    $region132: #{pearl_dqn_forward.1} parent=1 // pred_region
      _
    $region133: #{pearl_dqn_forward.1} parent=1 // pred_fallthru
      _
    // Predicated region
    $region134: #{pearl_dqn_forward.1} parent=1 // pred_check
      _
    $region135: #{pearl_dqn_forward.1} parent=1 // pred_check_branch
      %5726 = sbr.rel (0) target = $region137
    $region136: #{pearl_dqn_forward.1} parent=1 // pred_region
      %s5728 = ssub.s32 16, 16
      %5729 = vsyncadd [#allocation8], %s5728
      %s5731 = sshll.u32 [#allocation7], 4
      %s5732 = int_to_ptr.vmem [resolvable:$true] %s5731
      %5734 = dma.vmem_to_hbm [thread:$0]  %s5732, 16, %s18, [#allocation8]
    $region137: #{pearl_dqn_forward.1} parent=1 // pred_fallthru
      _
    // Predicated region
    $region138: #{pearl_dqn_forward.1} parent=1 // pred_check
      _
    $region139: #{pearl_dqn_forward.1} parent=1 // pred_check_branch
      %5736 = sbr.rel (0) target = $region141
    $region140: #{pearl_dqn_forward.1} parent=1 // pred_region
      _
    $region141: #{pearl_dqn_forward.1} parent=1 // pred_fallthru
      _
    // Predicated region
    $region142: #{pearl_dqn_forward.1} parent=1 // pred_check
      _
    $region143: #{pearl_dqn_forward.1} parent=1 // pred_check_branch
      %5738 = sbr.rel (0) target = $region145
    $region144: #{pearl_dqn_forward.1} parent=1 // pred_region
      %5739 = dma.done [#allocation8], 16
    $region145: #{pearl_dqn_forward.1} parent=1 // pred_fallthru
      _
    %5740 = vsyncpa [#allocation8], 1
  %5741 = vsyncmov [#allocation6]
  %s5742 = vpop.sfrf %5741
  %p5743 = scmp.eq.s32.totalorder %s5742, 0
  %p5744 = pneg %p5743
  %5746 = shalt.err (%p5744)
  %s5747 = scalar_lea.sflag [#allocation6], 1
  %5748 = vsyncmov %s5747
  %s5749 = vpop.sfrf %5748
  %p5750 = scmp.eq.s32.totalorder %s5749, 0
  %p5751 = pneg %p5750
  %5753 = shalt.err (%p5751)

</llo_original>
